<compile_context>
chip_gen: v7x
topology: tpu7x:2x2x1
jax: 0.10.0
libtpu: 0.0.40
codegen_flags: <defaults>
</compile_context>

<pallas_src>
import jax
import jax.numpy as jnp
from jax import lax
from jax.experimental import pallas as pl
from jax.experimental.pallas import tpu as pltpu


# ----------------------------- Pallas kernel --------------------------------
def _matmul_bias_relu_kernel(a_ref, b_ref, bias_ref, o_ref):
    # Single K step: whole (padded) K is resident in VMEM -> accumulate straight into the
    # f32 output with a fused bias + ReLU epilogue (no scratch, no repeated bias DMA).
    acc = jnp.dot(a_ref[...], b_ref[...], preferred_element_type=jnp.float32)
    o_ref[...] = jnp.maximum(acc + bias_ref[...], 0.0).astype(o_ref.dtype)


def _round_up(x, m):
    return ((x + m - 1) // m) * m


def matmul_bias_relu(a, b, bias):
    """relu(a @ b + bias) on the MXU; a:(M,K) b:(K,N) bias:(N,) -> (M,N) float32.

    Operands are fed to the MXU as bf16 (f32 accumulation). K and N are zero-padded to
    lane multiples (128); M is split into at most two "parallel" blocks so both
    TensorCores of a megacore / v7x chip get work.
    """
    M, K = a.shape
    K2, N = b.shape
    assert K == K2 and bias.shape == (N,)

    Kp = _round_up(K, 128)
    Np = _round_up(N, 128)
    if M >= 256:
        Mp = _round_up(M, 16)
        tm = Mp // 2
        nb = 2
    else:
        Mp = _round_up(M, 8)
        tm = Mp
        nb = 1

    a_p = jnp.pad(a.astype(jnp.bfloat16), ((0, Mp - M), (0, Kp - K)))
    b_p = jnp.pad(b.astype(jnp.bfloat16), ((0, Kp - K), (0, Np - N)))
    bias_p = jnp.pad(bias.astype(jnp.float32).reshape(1, N), ((0, 0), (0, Np - N)))

    out = pl.pallas_call(
        _matmul_bias_relu_kernel,
        out_shape=jax.ShapeDtypeStruct((Mp, Np), jnp.float32),
        grid_spec=pltpu.PrefetchScalarGridSpec(
            num_scalar_prefetch=0,
            grid=(nb,),
            in_specs=[
                pl.BlockSpec((tm, Kp), lambda i: (i, 0)),   # A: one M block per step
                pl.BlockSpec((Kp, Np), lambda i: (0, 0)),   # B: whole weight matrix
                pl.BlockSpec((1, Np), lambda i: (0, 0)),    # bias row
            ],
            out_specs=pl.BlockSpec((tm, Np), lambda i: (i, 0)),
        ),
        compiler_params=pltpu.CompilerParams(
            dimension_semantics=("parallel",)),
    )(a_p, b_p, bias_p)
    return out[:M, :N]


# --------------------------- conv via im2col glue ----------------------------
def _im2col(x_nhwc, kh, kw, stride):
    n, h, w, c = x_nhwc.shape
    oh = (h - kh) // stride + 1
    ow = (w - kw) // stride + 1
    cols = []
    for i in range(kh):
        for j in range(kw):
            cols.append(x_nhwc[:, i:i + stride * (oh - 1) + 1:stride,
                               j:j + stride * (ow - 1) + 1:stride, :])
    patches = jnp.concatenate(cols, axis=-1)              # (n, oh, ow, kh*kw*c)
    return patches.reshape(n * oh * ow, kh * kw * c), (n, oh, ow)


def conv2d_relu(x_nhwc, w_oihw, b, stride):
    co, ci, kh, kw = w_oihw.shape
    patches, (n, oh, ow) = _im2col(x_nhwc, kh, kw, stride)
    w_mat = jnp.transpose(w_oihw, (2, 3, 1, 0)).reshape(kh * kw * ci, co)
    y = matmul_bias_relu(patches, w_mat, b)
    return y.reshape(n, oh, ow, co)


def conv_transpose2d_relu(x_nhwc, w_iohw, b, stride):
    """ConvTranspose2d via stride^2 sub-pixel phase decomposition (no zero-dilation).

    Each output phase (ry, rx) is a stride-1 VALID correlation of the (sub_k-1)-padded
    input with the spatially flipped sub-kernel w[:, :, ry::2, rx::2].  All 4 phases share
    the same im2col patches, so they are packed into the matmul N dimension and the result
    is interleaved back into the full-resolution output.
    """
    ci, co, kh, kw = w_iohw.shape
    assert stride == 2 and kh % 2 == 0 and kw % 2 == 0
    skh, skw = kh // 2, kw // 2
    n, h, w, _ = x_nhwc.shape

    xp = jnp.pad(x_nhwc, ((0, 0), (skh - 1, skh - 1), (skw - 1, skw - 1), (0, 0)))
    patches, (n2, oh, ow) = _im2col(xp, skh, skw, 1)      # oh = h + skh - 1

    w_cols = []
    for ry in range(stride):
        for rx in range(stride):
            w_sub = w_iohw[:, :, ry::stride, rx::stride][:, :, ::-1, ::-1]  # (ci,co,skh,skw)
            w_cols.append(jnp.transpose(w_sub, (2, 3, 0, 1)).reshape(skh * skw * ci, co))
    w_mat = jnp.concatenate(w_cols, axis=1)               # (skh*skw*ci, 4*co)
    bias4 = jnp.tile(b, stride * stride)                  # (4*co,)

    y = matmul_bias_relu(patches, w_mat, bias4)           # (n*oh*ow, 4*co)
    y = y.reshape(n2, oh, ow, stride, stride, co)         # (..., ry, rx, co)
    y = jnp.transpose(y, (0, 1, 3, 2, 4, 5)).reshape(n2, stride * oh, stride * ow, co)
    return y


# ------------------------------ full forward ---------------------------------
@jax.jit
def conv_ae_lstm_forward(params, x_nchw):
    x = jnp.transpose(x_nchw, (0, 2, 3, 1))                # NCHW -> NHWC
    h = conv2d_relu(x, params["enc1_w"], params["enc1_b"], 2)
    h = conv2d_relu(h, params["enc2_w"], params["enc2_b"], 2)
    h = conv_transpose2d_relu(h, params["dec1_w"], params["dec1_b"], 2)
    h = conv_transpose2d_relu(h, params["dec2_w"], params["dec2_b"], 2)
    return jnp.transpose(h, (0, 3, 1, 2))                  # NHWC -> NCHW


def init_params(key):
    keys = jax.random.split(key, 8)

    def w(k, shape, fan_in):
        return jax.random.normal(k, shape, jnp.float32) / jnp.sqrt(jnp.float32(fan_in))

    def b(k, shape, fan_in):
        return jax.random.uniform(k, shape, jnp.float32, -1.0, 1.0) / jnp.sqrt(
            jnp.float32(fan_in))

    return {
        # Conv2d weights are OIHW; ConvTranspose2d weights are (C_in, C_out, KH, KW).
        "enc1_w": w(keys[0], (64, 1, 10, 10), 1 * 10 * 10),
        "enc1_b": b(keys[1], (64,), 1 * 10 * 10),
        "enc2_w": w(keys[2], (128, 64, 6, 6), 64 * 6 * 6),
        "enc2_b": b(keys[3], (128,), 64 * 6 * 6),
        "dec1_w": w(keys[4], (128, 64, 6, 6), 128 * 6 * 6),
        "dec1_b": b(keys[5], (64,), 128 * 6 * 6),
        "dec2_w": w(keys[6], (64, 1, 10, 10), 64 * 10 * 10),
        "dec2_b": b(keys[7], (1,), 64 * 10 * 10),
    }


# --------------------------- pure-XLA reference -------------------------------
@jax.jit
def reference_forward(params, x_nchw):
    """Reference with the same numerics class as the kernel (bf16 operands, f32 accum)."""
    bf = jnp.bfloat16

    def conv(x, w, b, stride):
        y = lax.conv_general_dilated(
            x.astype(bf), w.astype(bf), (stride, stride), "VALID",
            dimension_numbers=("NCHW", "OIHW", "NCHW"),
            preferred_element_type=jnp.float32)
        return jax.nn.relu(y + b[None, :, None, None])

    def deconv(x, w, b, stride):
        ci, co, kh, kw = w.shape
        w_f = jnp.transpose(w, (1, 0, 2, 3))[:, :, ::-1, ::-1]
        y = lax.conv_general_dilated(
            x.astype(bf), w_f.astype(bf), (1, 1),
            padding=((kh - 1, kh - 1), (kw - 1, kw - 1)),
            lhs_dilation=(stride, stride),
            dimension_numbers=("NCHW", "OIHW", "NCHW"),
            preferred_element_type=jnp.float32)
        return jax.nn.relu(y + b[None, :, None, None])

    h = conv(x_nchw, params["enc1_w"], params["enc1_b"], 2)
    h = conv(h, params["enc2_w"], params["enc2_b"], 2)
    h = deconv(h, params["dec1_w"], params["dec1_b"], 2)
    h = deconv(h, params["dec2_w"], params["dec2_b"], 2)
    return h


if __name__ == "__main__":
    key = jax.random.PRNGKey(0)
    pkey, xkey = jax.random.split(key)
    params = init_params(pkey)

    # input: NCHW, single channel (as required by Conv2d(1, 64, ...)); 32x32 -> 32x32
    x = jax.random.normal(xkey, (2, 1, 32, 32), jnp.float32)

    out = jax.block_until_ready(conv_ae_lstm_forward(params, x))
    assert out.shape == (2, 1, 32, 32), out.shape

    ref = jax.block_until_ready(reference_forward(params, x))
    max_err = float(jnp.max(jnp.abs(out - ref)))
    # Tolerance accounts for bf16 MXU operands (f32 accumulation) on both paths.
    assert max_err < 5e-2, max_err

    print("KERNEL_OK")
</pallas_src>

<mosaic_0001>
module attributes {stable_mosaic.version = 11 : i64} {
  func.func @_matmul_bias_relu_kernel(%arg0: i32, %arg1: memref<144x128xbf16, #tpu.memory_space<vmem>>, %arg2: memref<128x128xbf16, #tpu.memory_space<vmem>>, %arg3: memref<1x128xf32, #tpu.memory_space<vmem>>, %arg4: memref<144x128xf32, #tpu.memory_space<vmem>>) attributes {dimension_semantics = [#tpu.dimension_semantics<parallel>], iteration_bounds = array<i64: 2>, scalar_prefetch = 0 : i64, scratch_operands = 0 : i64, tpu.core_type = #tpu.core_type<tc>, window_params = [{transform_indices = @transform_0, window_bounds = array<i64: 144, 128>}, {pipeline_mode = #tpu.pipeline_mode<synchronous>, transform_indices = @transform_1, window_bounds = array<i64: 128, 128>}, {pipeline_mode = #tpu.pipeline_mode<synchronous>, transform_indices = @transform_2, window_bounds = array<i64: 1, 128>}, {transform_indices = @transform_3, window_bounds = array<i64: 144, 128>}]} {
    %c0 = arith.constant 0 : index
    %c0_0 = arith.constant 0 : index
    %0 = vector.load %arg1[%c0, %c0_0] : memref<144x128xbf16, #tpu.memory_space<vmem>>, vector<144x128xbf16>
    %c0_1 = arith.constant 0 : index
    %c0_2 = arith.constant 0 : index
    %1 = vector.load %arg2[%c0_1, %c0_2] : memref<128x128xbf16, #tpu.memory_space<vmem>>, vector<128x128xbf16>
    %cst = arith.constant dense<0.000000e+00> : vector<144x128xf32>
    %2 = tpu.matmul %0, %1, %cst {dimension_numbers = #tpu.dot_dimension_numbers<[1], [0], [0], [1], [0, 0, 1, 1], [], []>} : vector<144x128xbf16>, vector<128x128xbf16>, vector<144x128xf32> -> vector<144x128xf32>
    %c0_3 = arith.constant 0 : index
    %c0_4 = arith.constant 0 : index
    %3 = vector.load %arg3[%c0_3, %c0_4] : memref<1x128xf32, #tpu.memory_space<vmem>>, vector<1x128xf32>
    %4 = vector.broadcast %3 : vector<1x128xf32> to vector<144x128xf32>
    %5 = arith.addf %2, %4 : vector<144x128xf32>
    %cst_5 = arith.constant 0.000000e+00 : f32
    %6 = vector.broadcast %cst_5 : f32 to vector<144x128xf32>
    %7 = arith.maximumf %5, %6 : vector<144x128xf32>
    %c0_6 = arith.constant 0 : index
    %c0_7 = arith.constant 0 : index
    %8 = vector.load %arg4[%c0_6, %c0_7] : memref<144x128xf32, #tpu.memory_space<vmem>>, vector<144x128xf32>
    tpu.vector_store %arg4[%c0_6, %c0_7], %7 {strides = array<i32>} : memref<144x128xf32, #tpu.memory_space<vmem>>, vector<144x128xf32>,
    return
  }
  func.func @transform_0(%arg0: i32) -> (i32, i32) {
    %c0_i32 = arith.constant 0 : i32
    %c0_i32_0 = arith.constant 0 : i32
    return %arg0, %c0_i32 : i32, i32
  }
  func.func @transform_1(%arg0: i32) -> (i32, i32) {
    %c0_i32 = arith.constant 0 : i32
    %c0_i32_0 = arith.constant 0 : i32
    %c0_i32_1 = arith.constant 0 : i32
    return %c0_i32, %c0_i32_0 : i32, i32
  }
  func.func @transform_2(%arg0: i32) -> (i32, i32) {
    %c0_i32 = arith.constant 0 : i32
    %c0_i32_0 = arith.constant 0 : i32
    %c0_i32_1 = arith.constant 0 : i32
    return %c0_i32, %c0_i32_0 : i32, i32
  }
  func.func @transform_3(%arg0: i32) -> (i32, i32) {
    %c0_i32 = arith.constant 0 : i32
    %c0_i32_0 = arith.constant 0 : i32
    return %arg0, %c0_i32 : i32, i32
  }
}

module attributes {stable_mosaic.version = 11 : i64} {
  func.func @_matmul_bias_relu_kernel(%arg0: i32, %arg1: memref<32x2304xbf16, #tpu.memory_space<vmem>>, %arg2: memref<2304x128xbf16, #tpu.memory_space<vmem>>, %arg3: memref<1x128xf32, #tpu.memory_space<vmem>>, %arg4: memref<32x128xf32, #tpu.memory_space<vmem>>) attributes {dimension_semantics = [#tpu.dimension_semantics<parallel>], iteration_bounds = array<i64: 1>, scalar_prefetch = 0 : i64, scratch_operands = 0 : i64, tpu.core_type = #tpu.core_type<tc>, window_params = [{transform_indices = @transform_0, window_bounds = array<i64: 32, 2304>}, {pipeline_mode = #tpu.pipeline_mode<synchronous>, transform_indices = @transform_1, window_bounds = array<i64: 2304, 128>}, {pipeline_mode = #tpu.pipeline_mode<synchronous>, transform_indices = @transform_2, window_bounds = array<i64: 1, 128>}, {transform_indices = @transform_3, window_bounds = array<i64: 32, 128>}]} {
    %c0 = arith.constant 0 : index
    %c0_0 = arith.constant 0 : index
    %0 = vector.load %arg1[%c0, %c0_0] : memref<32x2304xbf16, #tpu.memory_space<vmem>>, vector<32x2304xbf16>
    %c0_1 = arith.constant 0 : index
    %c0_2 = arith.constant 0 : index
    %1 = vector.load %arg2[%c0_1, %c0_2] : memref<2304x128xbf16, #tpu.memory_space<vmem>>, vector<2304x128xbf16>
    %cst = arith.constant dense<0.000000e+00> : vector<32x128xf32>
    %2 = tpu.matmul %0, %1, %cst {dimension_numbers = #tpu.dot_dimension_numbers<[1], [0], [0], [1], [0, 0, 1, 1], [], []>} : vector<32x2304xbf16>, vector<2304x128xbf16>, vector<32x128xf32> -> vector<32x128xf32>
    %c0_3 = arith.constant 0 : index
    %c0_4 = arith.constant 0 : index
    %3 = vector.load %arg3[%c0_3, %c0_4] : memref<1x128xf32, #tpu.memory_space<vmem>>, vector<1x128xf32>
    %4 = vector.broadcast %3 : vector<1x128xf32> to vector<32x128xf32>
    %5 = arith.addf %2, %4 : vector<32x128xf32>
    %cst_5 = arith.constant 0.000000e+00 : f32
    %6 = vector.broadcast %cst_5 : f32 to vector<32x128xf32>
    %7 = arith.maximumf %5, %6 : vector<32x128xf32>
    %c0_6 = arith.constant 0 : index
    %c0_7 = arith.constant 0 : index
    %8 = vector.load %arg4[%c0_6, %c0_7] : memref<32x128xf32, #tpu.memory_space<vmem>>, vector<32x128xf32>
    tpu.vector_store %arg4[%c0_6, %c0_7], %7 {strides = array<i32>} : memref<32x128xf32, #tpu.memory_space<vmem>>, vector<32x128xf32>,
    return
  }
  func.func @transform_0(%arg0: i32) -> (i32, i32) {
    %c0_i32 = arith.constant 0 : i32
    %c0_i32_0 = arith.constant 0 : i32
    return %arg0, %c0_i32 : i32, i32
  }
  func.func @transform_1(%arg0: i32) -> (i32, i32) {
    %c0_i32 = arith.constant 0 : i32
    %c0_i32_0 = arith.constant 0 : i32
    %c0_i32_1 = arith.constant 0 : i32
    return %c0_i32, %c0_i32_0 : i32, i32
  }
  func.func @transform_2(%arg0: i32) -> (i32, i32) {
    %c0_i32 = arith.constant 0 : i32
    %c0_i32_0 = arith.constant 0 : i32
    %c0_i32_1 = arith.constant 0 : i32
    return %c0_i32, %c0_i32_0 : i32, i32
  }
  func.func @transform_3(%arg0: i32) -> (i32, i32) {
    %c0_i32 = arith.constant 0 : i32
    %c0_i32_0 = arith.constant 0 : i32
    return %arg0, %c0_i32 : i32, i32
  }
}

module attributes {stable_mosaic.version = 11 : i64} {
  func.func @_matmul_bias_relu_kernel(%arg0: i32, %arg1: memref<72x1152xbf16, #tpu.memory_space<vmem>>, %arg2: memref<1152x256xbf16, #tpu.memory_space<vmem>>, %arg3: memref<1x256xf32, #tpu.memory_space<vmem>>, %arg4: memref<72x256xf32, #tpu.memory_space<vmem>>) attributes {dimension_semantics = [#tpu.dimension_semantics<parallel>], iteration_bounds = array<i64: 1>, scalar_prefetch = 0 : i64, scratch_operands = 0 : i64, tpu.core_type = #tpu.core_type<tc>, window_params = [{transform_indices = @transform_0, window_bounds = array<i64: 72, 1152>}, {pipeline_mode = #tpu.pipeline_mode<synchronous>, transform_indices = @transform_1, window_bounds = array<i64: 1152, 256>}, {pipeline_mode = #tpu.pipeline_mode<synchronous>, transform_indices = @transform_2, window_bounds = array<i64: 1, 256>}, {transform_indices = @transform_3, window_bounds = array<i64: 72, 256>}]} {
    %c0 = arith.constant 0 : index
    %c0_0 = arith.constant 0 : index
    %0 = vector.load %arg1[%c0, %c0_0] : memref<72x1152xbf16, #tpu.memory_space<vmem>>, vector<72x1152xbf16>
    %c0_1 = arith.constant 0 : index
    %c0_2 = arith.constant 0 : index
    %1 = vector.load %arg2[%c0_1, %c0_2] : memref<1152x256xbf16, #tpu.memory_space<vmem>>, vector<1152x256xbf16>
    %cst = arith.constant dense<0.000000e+00> : vector<72x256xf32>
    %2 = tpu.matmul %0, %1, %cst {dimension_numbers = #tpu.dot_dimension_numbers<[1], [0], [0], [1], [0, 0, 1, 1], [], []>} : vector<72x1152xbf16>, vector<1152x256xbf16>, vector<72x256xf32> -> vector<72x256xf32>
    %c0_3 = arith.constant 0 : index
    %c0_4 = arith.constant 0 : index
    %3 = vector.load %arg3[%c0_3, %c0_4] : memref<1x256xf32, #tpu.memory_space<vmem>>, vector<1x256xf32>
    %4 = vector.broadcast %3 : vector<1x256xf32> to vector<72x256xf32>
    %5 = arith.addf %2, %4 : vector<72x256xf32>
    %cst_5 = arith.constant 0.000000e+00 : f32
    %6 = vector.broadcast %cst_5 : f32 to vector<72x256xf32>
    %7 = arith.maximumf %5, %6 : vector<72x256xf32>
    %c0_6 = arith.constant 0 : index
    %c0_7 = arith.constant 0 : index
    %8 = vector.load %arg4[%c0_6, %c0_7] : memref<72x256xf32, #tpu.memory_space<vmem>>, vector<72x256xf32>
    tpu.vector_store %arg4[%c0_6, %c0_7], %7 {strides = array<i32>} : memref<72x256xf32, #tpu.memory_space<vmem>>, vector<72x256xf32>,
    return
  }
  func.func @transform_0(%arg0: i32) -> (i32, i32) {
    %c0_i32 = arith.constant 0 : i32
    %c0_i32_0 = arith.constant 0 : i32
    return %arg0, %c0_i32 : i32, i32
  }
  func.func @transform_1(%arg0: i32) -> (i32, i32) {
    %c0_i32 = arith.constant 0 : i32
    %c0_i32_0 = arith.constant 0 : i32
    %c0_i32_1 = arith.constant 0 : i32
    return %c0_i32, %c0_i32_0 : i32, i32
  }
  func.func @transform_2(%arg0: i32) -> (i32, i32) {
    %c0_i32 = arith.constant 0 : i32
    %c0_i32_0 = arith.constant 0 : i32
    %c0_i32_1 = arith.constant 0 : i32
    return %c0_i32, %c0_i32_0 : i32, i32
  }
  func.func @transform_3(%arg0: i32) -> (i32, i32) {
    %c0_i32 = arith.constant 0 : i32
    %c0_i32_0 = arith.constant 0 : i32
    return %arg0, %c0_i32 : i32, i32
  }
}

module attributes {stable_mosaic.version = 11 : i64} {
  func.func @_matmul_bias_relu_kernel(%arg0: i32, %arg1: memref<256x1664xbf16, #tpu.memory_space<vmem>>, %arg2: memref<1664x128xbf16, #tpu.memory_space<vmem>>, %arg3: memref<1x128xf32, #tpu.memory_space<vmem>>, %arg4: memref<256x128xf32, #tpu.memory_space<vmem>>) attributes {dimension_semantics = [#tpu.dimension_semantics<parallel>], iteration_bounds = array<i64: 2>, scalar_prefetch = 0 : i64, scratch_operands = 0 : i64, tpu.core_type = #tpu.core_type<tc>, window_params = [{transform_indices = @transform_0, window_bounds = array<i64: 256, 1664>}, {pipeline_mode = #tpu.pipeline_mode<synchronous>, transform_indices = @transform_1, window_bounds = array<i64: 1664, 128>}, {pipeline_mode = #tpu.pipeline_mode<synchronous>, transform_indices = @transform_2, window_bounds = array<i64: 1, 128>}, {transform_indices = @transform_3, window_bounds = array<i64: 256, 128>}]} {
    %c0 = arith.constant 0 : index
    %c0_0 = arith.constant 0 : index
    %0 = vector.load %arg1[%c0, %c0_0] : memref<256x1664xbf16, #tpu.memory_space<vmem>>, vector<256x1664xbf16>
    %c0_1 = arith.constant 0 : index
    %c0_2 = arith.constant 0 : index
    %1 = vector.load %arg2[%c0_1, %c0_2] : memref<1664x128xbf16, #tpu.memory_space<vmem>>, vector<1664x128xbf16>
    %cst = arith.constant dense<0.000000e+00> : vector<256x128xf32>
    %2 = tpu.matmul %0, %1, %cst {dimension_numbers = #tpu.dot_dimension_numbers<[1], [0], [0], [1], [0, 0, 1, 1], [], []>} : vector<256x1664xbf16>, vector<1664x128xbf16>, vector<256x128xf32> -> vector<256x128xf32>
    %c0_3 = arith.constant 0 : index
    %c0_4 = arith.constant 0 : index
    %3 = vector.load %arg3[%c0_3, %c0_4] : memref<1x128xf32, #tpu.memory_space<vmem>>, vector<1x128xf32>
    %4 = vector.broadcast %3 : vector<1x128xf32> to vector<256x128xf32>
    %5 = arith.addf %2, %4 : vector<256x128xf32>
    %cst_5 = arith.constant 0.000000e+00 : f32
    %6 = vector.broadcast %cst_5 : f32 to vector<256x128xf32>
    %7 = arith.maximumf %5, %6 : vector<256x128xf32>
    %c0_6 = arith.constant 0 : index
    %c0_7 = arith.constant 0 : index
    %8 = vector.load %arg4[%c0_6, %c0_7] : memref<256x128xf32, #tpu.memory_space<vmem>>, vector<256x128xf32>
    tpu.vector_store %arg4[%c0_6, %c0_7], %7 {strides = array<i32>} : memref<256x128xf32, #tpu.memory_space<vmem>>, vector<256x128xf32>,
    return
  }
  func.func @transform_0(%arg0: i32) -> (i32, i32) {
    %c0_i32 = arith.constant 0 : i32
    %c0_i32_0 = arith.constant 0 : i32
    return %arg0, %c0_i32 : i32, i32
  }
  func.func @transform_1(%arg0: i32) -> (i32, i32) {
    %c0_i32 = arith.constant 0 : i32
    %c0_i32_0 = arith.constant 0 : i32
    %c0_i32_1 = arith.constant 0 : i32
    return %c0_i32, %c0_i32_0 : i32, i32
  }
  func.func @transform_2(%arg0: i32) -> (i32, i32) {
    %c0_i32 = arith.constant 0 : i32
    %c0_i32_0 = arith.constant 0 : i32
    %c0_i32_1 = arith.constant 0 : i32
    return %c0_i32, %c0_i32_0 : i32, i32
  }
  func.func @transform_3(%arg0: i32) -> (i32, i32) {
    %c0_i32 = arith.constant 0 : i32
    %c0_i32_0 = arith.constant 0 : i32
    return %arg0, %c0_i32 : i32, i32
  }
}

</mosaic_0001>

<llo_original>
// kernel: conv_ae_lstm_forward.4
$region0: #{conv_ae_lstm_forward.4}
  #allocation0 [shape = 'u32[]', space=smem, size = 0x4, offset = 0x4, fixed_abs, tag = 'smem constant byte address 0x4 - core index']
  #allocation1 [shape = 'u32[144,128]{1,0:T(1,128)}', space=vmem, size = 0x12000, scoped, tag = 'internal scratch']
  %s0 = inlined_call_operand.vmem [shape: bf16[288,128], index: 0, kind: input, shape index: {}]
  %s1 = inlined_call_operand.vmem [shape: bf16[128,128], index: 1, kind: input, shape index: {}]
  %s2 = inlined_call_operand.vmem [shape: f32[1,128], index: 2, kind: input, shape index: {}]
  %s3 = inlined_call_operand.vmem [shape: f32[288,128], index: 3, kind: output, shape index: {}]
  %s4 = sld [smem:[#allocation0]]
  $region45: #{conv_ae_lstm_forward.4} parent=0
    _
  %s6 = ssub.s32 1, %s4
  %s7 = scalar_select 0, %s6, %s4
  loop: start=0, step=1, limit=4
  $region2: #{conv_ae_lstm_forward.4} parent=0 // loop_pre_header
    _
  $region3: #{conv_ae_lstm_forward.4} parent=0 // loop_header
    %s9 = sphi 0, %s13
    %p10 = scmp.ge.s32.totalorder %s9, 4
    %s19 = sphi 0, %s21
    %s22 = sphi 0, %s19
    %s23 = sphi 0, %s22
    %s39 = sphi 0, %s23
    %s43 = sphi 0, %s43
    %s45 = sphi 0, %s43
    %s46 = sphi 0, %s45
    %s60 = sphi 0, %s46
    %s64 = sphi 0, %s64
    %s66 = sphi 0, %s64
    %s67 = sphi 0, %s66
    %s81 = sphi 0, %s67
    %s87 = sphi 0, %s89
    %s90 = sphi 0, %s87
    %s91 = sphi 0, %s90
    %s107 = sphi 0, %s91
  $region4: #{conv_ae_lstm_forward.4} parent=0 // loop_header_branch
    %12 = sbr.rel (%p10) target = $region8
  $region5: #{conv_ae_lstm_forward.4} parent=0 // loop_body
    %s14 = ssub.s32 %s9, 1
    %s15 = ssub.s32 %s9, 2
    %s16 = sadd.s32 %s9, 1
    %s17 = ssub.s32 %s9, %s16
    %p18 = scmp.eq.s32.totalorder %s17, 0
    %s20 = sadd.s32 %s19, 1
    %s21 = scalar_select %p18, %s19, %s20
    %p24 = pneg %p18
    %p25 = scmp.eq.s32.totalorder %s9, 1
    %p26 = por %p24, %p25
    %p27 = scmp.ne.s32.totalorder %s19, %s22
    %p28 = scmp.eq.s32.totalorder %s9, 0
    %p29 = por %p27, %p28
    %p30 = scmp.ne.s32.totalorder %s19, %s22
    %p31 = scmp.eq.s32.totalorder %s14, 1
    %p32 = por %p30, %p31
    %p33 = scmp.ne.s32.totalorder %s22, %s23
    %p34 = scmp.eq.s32.totalorder %s14, 0
    %p35 = por %p33, %p34
    %p36 = scmp.ne.s32.totalorder %s22, %s23
    %p37 = scmp.eq.s32.totalorder %s15, 1
    %p38 = por %p36, %p37
    %p40 = scmp.ne.s32.totalorder %s23, %s39
    %p41 = scmp.eq.s32.totalorder %s15, 0
    %p42 = por %p40, %p41
    %s44 = sadd.s32 %s43, 1
    %p47 = scmp.eq.s32.totalorder %s9, 1
    %p48 = scmp.ne.s32.totalorder %s43, %s45
    %p49 = scmp.eq.s32.totalorder %s9, 0
    %p50 = por %p48, %p49
    %p51 = scmp.ne.s32.totalorder %s43, %s45
    %p52 = scmp.eq.s32.totalorder %s14, 1
    %p53 = por %p51, %p52
    %p54 = scmp.ne.s32.totalorder %s45, %s46
    %p55 = scmp.eq.s32.totalorder %s14, 0
    %p56 = por %p54, %p55
    %p57 = scmp.ne.s32.totalorder %s45, %s46
    %p58 = scmp.eq.s32.totalorder %s15, 1
    %p59 = por %p57, %p58
    %p61 = scmp.ne.s32.totalorder %s46, %s60
    %p62 = scmp.eq.s32.totalorder %s15, 0
    %p63 = por %p61, %p62
    %s65 = sadd.s32 %s64, 1
    %p68 = scmp.eq.s32.totalorder %s9, 1
    %p69 = scmp.ne.s32.totalorder %s64, %s66
    %p70 = scmp.eq.s32.totalorder %s9, 0
    %p71 = por %p69, %p70
    %p72 = scmp.ne.s32.totalorder %s64, %s66
    %p73 = scmp.eq.s32.totalorder %s14, 1
    %p74 = por %p72, %p73
    %p75 = scmp.ne.s32.totalorder %s66, %s67
    %p76 = scmp.eq.s32.totalorder %s14, 0
    %p77 = por %p75, %p76
    %p78 = scmp.ne.s32.totalorder %s66, %s67
    %p79 = scmp.eq.s32.totalorder %s15, 1
    %p80 = por %p78, %p79
    %p82 = scmp.ne.s32.totalorder %s67, %s81
    %p83 = scmp.eq.s32.totalorder %s15, 0
    %p84 = por %p82, %p83
    %s85 = ssub.s32 %s9, %s16
    %p86 = scmp.eq.s32.totalorder %s85, 0
    %s88 = sadd.s32 %s87, 1
    %s89 = scalar_select %p86, %s87, %s88
    %p92 = pneg %p86
    %p93 = scmp.eq.s32.totalorder %s9, 1
    %p94 = por %p92, %p93
    %p95 = scmp.ne.s32.totalorder %s87, %s90
    %p96 = scmp.eq.s32.totalorder %s9, 0
    %p97 = por %p95, %p96
    %p98 = scmp.ne.s32.totalorder %s87, %s90
    %p99 = scmp.eq.s32.totalorder %s14, 1
    %p100 = por %p98, %p99
    %p101 = scmp.ne.s32.totalorder %s90, %s91
    %p102 = scmp.eq.s32.totalorder %s14, 0
    %p103 = por %p101, %p102
    %p104 = scmp.ne.s32.totalorder %s90, %s91
    %p105 = scmp.eq.s32.totalorder %s15, 1
    %p106 = por %p104, %p105
    %p108 = scmp.ne.s32.totalorder %s91, %s107
    %p109 = scmp.eq.s32.totalorder %s15, 0
    %p110 = por %p108, %p109
    %p111 = scmp.le.s32.totalorder 1, %s9
    %p112 = scmp.lt.s32.totalorder %s9, 3
    %p113 = pnand %p111, %p112
    %p114 = pneg %p113
    // Predicated region
    $region9: #{conv_ae_lstm_forward.4} parent=5 // pred_check
      _
    $region10: #{conv_ae_lstm_forward.4} parent=5 // pred_check_branch
      %116 = sbr.rel (%p113) target = $region12
    $region11: #{conv_ae_lstm_forward.4} parent=5 // pred_region
      %s117 = ssub.s32 %s9, 1
      // Predicated region
      $region13: #{conv_ae_lstm_forward.4} parent=11 // pred_check
        %p118 = pneg %p56
      $region14: #{conv_ae_lstm_forward.4} parent=11 // pred_check_branch
        %120 = sbr.rel (%p118) target = $region16
      $region15: #{conv_ae_lstm_forward.4} parent=11 // pred_region
        _
      $region16: #{conv_ae_lstm_forward.4} parent=11 // pred_fallthru
        _
      // Predicated region
      $region17: #{conv_ae_lstm_forward.4} parent=11 // pred_check
        %p121 = pneg %p77
      $region18: #{conv_ae_lstm_forward.4} parent=11 // pred_check_branch
        %123 = sbr.rel (%p121) target = $region20
      $region19: #{conv_ae_lstm_forward.4} parent=11 // pred_region
        _
      $region20: #{conv_ae_lstm_forward.4} parent=11 // pred_fallthru
        _
    $region12: #{conv_ae_lstm_forward.4} parent=5 // pred_fallthru
      _
    %p124 = scmp.lt.s32.totalorder %s9, 2
    // Predicated region
    $region21: #{conv_ae_lstm_forward.4} parent=5 // pred_check
      %p125 = pneg %p124
    $region22: #{conv_ae_lstm_forward.4} parent=5 // pred_check_branch
      %127 = sbr.rel (%p125) target = $region24
    $region23: #{conv_ae_lstm_forward.4} parent=5 // pred_region
      // Predicated region
      $region25: #{conv_ae_lstm_forward.4} parent=23 // pred_check
        %p128 = pneg %p29
      $region26: #{conv_ae_lstm_forward.4} parent=23 // pred_check_branch
        %130 = sbr.rel (%p128) target = $region28
      $region27: #{conv_ae_lstm_forward.4} parent=23 // pred_region
        %s131 = smul.u32 18, %s9
        %p132 = scmp.lt.s32.totalorder %s131, 35
        %s133 = scalar_select %p132, %s131, 35
        %s134 = smul.addr %s133, 4
        %s135 = scalar_lea.vmem %s0, %s134
        %s136 = smul.u32 18, %s9
      $region28: #{conv_ae_lstm_forward.4} parent=23 // pred_fallthru
        _
    $region24: #{conv_ae_lstm_forward.4} parent=5 // pred_fallthru
      _
    %p137 = scmp.le.s32.totalorder 1, %s9
    %p138 = scmp.lt.s32.totalorder %s9, 3
    %p139 = pnand %p137, %p138
    %p140 = pneg %p139
    // Predicated region
    $region29: #{conv_ae_lstm_forward.4} parent=5 // pred_check
      _
    $region30: #{conv_ae_lstm_forward.4} parent=5 // pred_check_branch
      %142 = sbr.rel (%p139) target = $region32
    $region31: #{conv_ae_lstm_forward.4} parent=5 // pred_region
      %s143 = ssub.s32 %s9, 1
      %s144 = smul.u32 18, %s14
      %p145 = scmp.lt.s32.totalorder %s144, 35
      %s146 = scalar_select %p145, %s144, 35
      %s147 = smul.addr %s146, 4
      %s148 = scalar_lea.vmem %s0, %s147
      %p149 = pneg %p35
      %p150 = pneg %p32
      %p151 = pneg %p56
      %p152 = pneg %p53
      %p153 = pneg %p77
      %p154 = pneg %p74
      %p155 = pneg %p103
      %p156 = pneg %p100
      %s157 = smul.u32 18, %s14
      %p158 = scmp.lt.s32.totalorder %s157, 35
      %s159 = scalar_select %p158, %s157, 35
      %s160 = smul.addr %s159, 8
      %s161 = scalar_lea.vmem %s3, %s160
      %s162 = smul.u32 18, %s14
      %p163 = scmp.lt.s32.totalorder %s162, 35
      %s164 = scalar_select %p163, %s162, 35
      %s165 = smul.addr %s164, 4
      %s166 = scalar_lea.vmem %s0, %s165
      %s167 = smul.u32 18, %s14
      %s168 = smul.u32 18, %s14
      %p169 = scmp.lt.s32.totalorder %s168, 35
      %s170 = scalar_select %p169, %s168, 35
      %s171 = smul.addr %s170, 8
      %s172 = scalar_lea.vmem %s3, %s171
      %s173 = smul.u32 18, %s14
      %v175 = vld [vmem:[%s166] sm:$0xf]
      %v176 = vld [vmem:[%s166 + $0x4] sm:$0xf]
      %v177 = vld [vmem:[%s166 + $0x8] sm:$0xf]
      %v178 = vld [vmem:[%s166 + $0xc] sm:$0xf]
      %v179 = vld [vmem:[%s166 + $0x10] sm:$0xf]
      %v180 = vld [vmem:[%s166 + $0x14] sm:$0xf]
      %v181 = vld [vmem:[%s166 + $0x18] sm:$0xf]
      %v182 = vld [vmem:[%s166 + $0x1c] sm:$0xf]
      %v183 = vld [vmem:[%s166 + $0x20] sm:$0xf]
      %v184 = vld [vmem:[%s166 + $0x24] sm:$0xf]
      %v185 = vld [vmem:[%s166 + $0x28] sm:$0xf]
      %v186 = vld [vmem:[%s166 + $0x2c] sm:$0xf]
      %v187 = vld [vmem:[%s166 + $0x30] sm:$0xf]
      %v188 = vld [vmem:[%s166 + $0x34] sm:$0xf]
      %v189 = vld [vmem:[%s166 + $0x38] sm:$0xf]
      %v190 = vld [vmem:[%s166 + $0x3c] sm:$0xf]
      %v191 = vld [vmem:[%s166 + $0x40] sm:$0xf]
      %v192 = vld [vmem:[%s166 + $0x44] sm:$0xf]
      %v193 = vld [vmem:[%s1] sm:$0xf]
      %v194 = vld [vmem:[%s1 + $0x4] sm:$0xf]
      %v195 = vld [vmem:[%s1 + $0x8] sm:$0xf]
      %v196 = vld [vmem:[%s1 + $0xc] sm:$0xf]
      %v197 = vld [vmem:[%s1 + $0x10] sm:$0xf]
      %v198 = vld [vmem:[%s1 + $0x14] sm:$0xf]
      %v199 = vld [vmem:[%s1 + $0x18] sm:$0xf]
      %v200 = vld [vmem:[%s1 + $0x1c] sm:$0xf]
      %v201 = vld [vmem:[%s1 + $0x20] sm:$0xf]
      %v202 = vld [vmem:[%s1 + $0x24] sm:$0xf]
      %v203 = vld [vmem:[%s1 + $0x28] sm:$0xf]
      %v204 = vld [vmem:[%s1 + $0x2c] sm:$0xf]
      %v205 = vld [vmem:[%s1 + $0x30] sm:$0xf]
      %v206 = vld [vmem:[%s1 + $0x34] sm:$0xf]
      %v207 = vld [vmem:[%s1 + $0x38] sm:$0xf]
      %v208 = vld [vmem:[%s1 + $0x3c] sm:$0xf]
      %v209 = vld [vmem:[%s2] sm:$0x1]
      %v211 = vlaneseq
      %v212 = vshrl.u32 %v211, 7
      %v213 = vsub.s32 0, %v212
      %v214 = vrot.slane %v209, %v213
      %v234 = vunpack.c.l.b16 %v175
      %v235 = vunpack.c.l.b16 %v176
      %v236 = vunpack.c.l.b16 %v177
      %v237 = vunpack.c.l.b16 %v178
      %v238 = vunpack.c.l.b16 %v179
      %v239 = vunpack.c.l.b16 %v180
      %v240 = vunpack.c.l.b16 %v181
      %v241 = vunpack.c.l.b16 %v182
      %v242 = vunpack.c.l.b16 %v183
      %v243 = vunpack.c.l.b16 %v184
      %v244 = vunpack.c.l.b16 %v185
      %v245 = vunpack.c.l.b16 %v186
      %v246 = vunpack.c.l.b16 %v187
      %v247 = vunpack.c.l.b16 %v188
      %v248 = vunpack.c.l.b16 %v189
      %v249 = vunpack.c.l.b16 %v190
      %v250 = vunpack.c.l.b16 %v191
      %v251 = vunpack.c.l.b16 %v192
      %v252 = vpack.c.b16 %v235, %v234
      %v253 = vpack.c.b16 %v237, %v236
      %v254 = vpack.c.b16 %v239, %v238
      %v255 = vpack.c.b16 %v241, %v240
      %v256 = vpack.c.b16 %v243, %v242
      %v257 = vpack.c.b16 %v245, %v244
      %v258 = vpack.c.b16 %v247, %v246
      %v259 = vpack.c.b16 %v249, %v248
      %v260 = vpack.c.b16 %v251, %v250
      %v286 = vunpack.c.l.b16 %v193
      %v287 = vunpack.c.l.b16 %v194
      %v288 = vunpack.c.l.b16 %v195
      %v289 = vunpack.c.l.b16 %v196
      %v290 = vunpack.c.l.b16 %v197
      %v291 = vunpack.c.l.b16 %v198
      %v292 = vunpack.c.l.b16 %v199
      %v293 = vunpack.c.l.b16 %v200
      %v294 = vunpack.c.l.b16 %v201
      %v295 = vunpack.c.l.b16 %v202
      %v296 = vunpack.c.l.b16 %v203
      %v297 = vunpack.c.l.b16 %v204
      %v298 = vunpack.c.l.b16 %v205
      %v299 = vunpack.c.l.b16 %v206
      %v300 = vunpack.c.l.b16 %v207
      %v301 = vunpack.c.l.b16 %v208
      %v302 = vpack.c.b16 %v287, %v286
      %v303 = vpack.c.b16 %v289, %v288
      %v304 = vpack.c.b16 %v291, %v290
      %v305 = vpack.c.b16 %v293, %v292
      %v306 = vpack.c.b16 %v295, %v294
      %v307 = vpack.c.b16 %v297, %v296
      %v308 = vpack.c.b16 %v299, %v298
      %v309 = vpack.c.b16 %v301, %v300
      %318 = vmatprep.subr.bf16.mxu0 0
      %319 = vmatpush1.bf16.msra.mxu0 %v302
      %320 = vmatprep.subr.bf16.mxu0 0
      %321 = vmatpush1.bf16.msra.mxu0 %v303
      %322 = vmatprep.subr.bf16.mxu0 0
      %323 = vmatpush1.bf16.msra.mxu0 %v304
      %324 = vmatprep.subr.bf16.mxu0 0
      %325 = vmatpush1.bf16.msra.mxu0 %v305
      %326 = vmatprep.subr.bf16.mxu0 0
      %327 = vmatpush1.bf16.msra.mxu0 %v306
      %328 = vmatprep.subr.bf16.mxu0 0
      %329 = vmatpush1.bf16.msra.mxu0 %v307
      %330 = vmatprep.subr.bf16.mxu0 0
      %331 = vmatpush1.bf16.msra.mxu0 %v308
      %332 = vmatprep.subr.bf16.mxu0 0
      %333 = vmatpush1.bf16.msra.mxu0 %v309
      %334 = vmatprep.subr.bf16.mxu0 0
      %335 = vmatpush1.bf16.msra.mxu0 0
      %336 = vmatprep.subr.bf16.mxu0 0
      %337 = vmatpush1.bf16.msra.mxu0 0
      %338 = vmatprep.subr.bf16.mxu0 0
      %339 = vmatpush1.bf16.msra.mxu0 0
      %340 = vmatprep.subr.bf16.mxu0 0
      %341 = vmatpush1.bf16.msra.mxu0 0
      %342 = vmatprep.subr.bf16.mxu0 0
      %343 = vmatpush1.bf16.msra.mxu0 0
      %344 = vmatprep.subr.bf16.mxu0 0
      %345 = vmatpush1.bf16.msra.mxu0 0
      %346 = vmatprep.subr.bf16.mxu0 0
      %347 = vmatpush1.bf16.msra.mxu0 0
      %348 = vmatprep.subr.bf16.mxu0 0
      %349 = vmatpush1.bf16.msra.mxu0 0
      %350 = vmatprep.mubr.bf16.mxu0 0
      %351 = vmatmul.mubr.bf16.gmra.mrb[0].mxu0 %v252
      %v352 = vpop.f32.mrb[0].mxu0
      %v353 = vadd.f32 %v214, %v352
      %v354 = vpop.f32.mrb[0].mxu0
      %v355 = vpop.f32.mrb[0].mxu0
      %v356 = vadd.f32 %v214, %v355
      %v357 = vpop.f32.mrb[0].mxu0
      %358 = vmatprep.mubr.bf16.mxu0 0
      %359 = vmatmul.mubr.bf16.gmra.mrb[0].mxu0 %v253
      %v360 = vpop.f32.mrb[0].mxu0
      %v361 = vadd.f32 %v214, %v360
      %v362 = vpop.f32.mrb[0].mxu0
      %v363 = vpop.f32.mrb[0].mxu0
      %v364 = vadd.f32 %v214, %v363
      %v365 = vpop.f32.mrb[0].mxu0
      %366 = vmatprep.mubr.bf16.mxu0 0
      %367 = vmatmul.mubr.bf16.gmra.mrb[0].mxu0 %v254
      %v368 = vpop.f32.mrb[0].mxu0
      %v369 = vadd.f32 %v214, %v368
      %v370 = vpop.f32.mrb[0].mxu0
      %v371 = vpop.f32.mrb[0].mxu0
      %v372 = vadd.f32 %v214, %v371
      %v373 = vpop.f32.mrb[0].mxu0
      %374 = vmatprep.mubr.bf16.mxu0 0
      %375 = vmatmul.mubr.bf16.gmra.mrb[0].mxu0 %v255
      %v376 = vpop.f32.mrb[0].mxu0
      %v377 = vadd.f32 %v214, %v376
      %v378 = vpop.f32.mrb[0].mxu0
      %v379 = vpop.f32.mrb[0].mxu0
      %v380 = vadd.f32 %v214, %v379
      %v381 = vpop.f32.mrb[0].mxu0
      %382 = vmatprep.mubr.bf16.mxu0 0
      %383 = vmatmul.mubr.bf16.gmra.mrb[0].mxu0 %v256
      %v384 = vpop.f32.mrb[0].mxu0
      %v385 = vadd.f32 %v214, %v384
      %v386 = vpop.f32.mrb[0].mxu0
      %v387 = vpop.f32.mrb[0].mxu0
      %v388 = vadd.f32 %v214, %v387
      %v389 = vpop.f32.mrb[0].mxu0
      %390 = vmatprep.mubr.bf16.mxu0 0
      %391 = vmatmul.mubr.bf16.gmra.mrb[0].mxu0 %v257
      %v392 = vpop.f32.mrb[0].mxu0
      %v393 = vadd.f32 %v214, %v392
      %v394 = vpop.f32.mrb[0].mxu0
      %v395 = vpop.f32.mrb[0].mxu0
      %v396 = vadd.f32 %v214, %v395
      %v397 = vpop.f32.mrb[0].mxu0
      %398 = vmatprep.mubr.bf16.mxu0 0
      %399 = vmatmul.mubr.bf16.gmra.mrb[0].mxu0 %v258
      %v400 = vpop.f32.mrb[0].mxu0
      %v401 = vadd.f32 %v214, %v400
      %v402 = vpop.f32.mrb[0].mxu0
      %v403 = vpop.f32.mrb[0].mxu0
      %v404 = vadd.f32 %v214, %v403
      %v405 = vpop.f32.mrb[0].mxu0
      %406 = vmatprep.mubr.bf16.mxu0 0
      %407 = vmatmul.mubr.bf16.gmra.mrb[0].mxu0 %v259
      %v408 = vpop.f32.mrb[0].mxu0
      %v409 = vadd.f32 %v214, %v408
      %v410 = vpop.f32.mrb[0].mxu0
      %v411 = vpop.f32.mrb[0].mxu0
      %v412 = vadd.f32 %v214, %v411
      %v413 = vpop.f32.mrb[0].mxu0
      %414 = vmatprep.mubr.bf16.mxu0 0
      %415 = vmatmul.mubr.bf16.gmra.mrb[0].mxu0 %v260
      %v416 = vpop.f32.mrb[0].mxu0
      %v417 = vadd.f32 %v214, %v416
      %v418 = vpop.f32.mrb[0].mxu0
      %v419 = vpop.f32.mrb[0].mxu0
      %v420 = vadd.f32 %v214, %v419
      %v421 = vpop.f32.mrb[0].mxu0
      %422 = vdwg.mxu0
      %v423 = vmax.f32 %v353, 0.0
      %v424 = vmax.f32 %v356, 0.0
      %v425 = vmax.f32 %v361, 0.0
      %v426 = vmax.f32 %v364, 0.0
      %v427 = vmax.f32 %v369, 0.0
      %v428 = vmax.f32 %v372, 0.0
      %v429 = vmax.f32 %v377, 0.0
      %v430 = vmax.f32 %v380, 0.0
      %v431 = vmax.f32 %v385, 0.0
      %v432 = vmax.f32 %v388, 0.0
      %v433 = vmax.f32 %v393, 0.0
      %v434 = vmax.f32 %v396, 0.0
      %v435 = vmax.f32 %v401, 0.0
      %v436 = vmax.f32 %v404, 0.0
      %v437 = vmax.f32 %v409, 0.0
      %v438 = vmax.f32 %v412, 0.0
      %v439 = vmax.f32 %v417, 0.0
      %v440 = vmax.f32 %v420, 0.0
      %441 = vst [vmem:[%s172] sm:$0xff] %v423
      %442 = vst [vmem:[%s172 + $0x8] sm:$0xff] %v424
      %443 = vst [vmem:[%s172 + $0x10] sm:$0xff] %v425
      %444 = vst [vmem:[%s172 + $0x18] sm:$0xff] %v426
      %445 = vst [vmem:[%s172 + $0x20] sm:$0xff] %v427
      %446 = vst [vmem:[%s172 + $0x28] sm:$0xff] %v428
      %447 = vst [vmem:[%s172 + $0x30] sm:$0xff] %v429
      %448 = vst [vmem:[%s172 + $0x38] sm:$0xff] %v430
      %449 = vst [vmem:[%s172 + $0x40] sm:$0xff] %v431
      %450 = vst [vmem:[%s172 + $0x48] sm:$0xff] %v432
      %451 = vst [vmem:[%s172 + $0x50] sm:$0xff] %v433
      %452 = vst [vmem:[%s172 + $0x58] sm:$0xff] %v434
      %453 = vst [vmem:[%s172 + $0x60] sm:$0xff] %v435
      %454 = vst [vmem:[%s172 + $0x68] sm:$0xff] %v436
      %455 = vst [vmem:[%s172 + $0x70] sm:$0xff] %v437
      %456 = vst [vmem:[%s172 + $0x78] sm:$0xff] %v438
      %457 = vst [vmem:[%s172 + $0x80] sm:$0xff] %v439
      %458 = vst [vmem:[%s172 + $0x88] sm:$0xff] %v440
      %s459 = smul.u32 18, %s14
      %p460 = scmp.lt.s32.totalorder %s459, 35
      %s461 = scalar_select %p460, %s459, 35
      %s462 = smul.addr %s461, 8
      %s463 = scalar_lea.vmem %s3, %s462
      // Predicated region
      $region33: #{conv_ae_lstm_forward.4} parent=31 // pred_check
        %p464 = pneg %p100
      $region34: #{conv_ae_lstm_forward.4} parent=31 // pred_check_branch
        %466 = sbr.rel (%p464) target = $region36
      $region35: #{conv_ae_lstm_forward.4} parent=31 // pred_region
        %s467 = smul.u32 18, %s14
      $region36: #{conv_ae_lstm_forward.4} parent=31 // pred_fallthru
        _
    $region32: #{conv_ae_lstm_forward.4} parent=5 // pred_fallthru
      _
    %p468 = scmp.le.s32.totalorder 2, %s9
    // Predicated region
    $region37: #{conv_ae_lstm_forward.4} parent=5 // pred_check
      %p469 = pneg %p468
    $region38: #{conv_ae_lstm_forward.4} parent=5 // pred_check_branch
      %471 = sbr.rel (%p469) target = $region40
    $region39: #{conv_ae_lstm_forward.4} parent=5 // pred_region
      %s472 = ssub.s32 %s9, 2
      // Predicated region
      $region41: #{conv_ae_lstm_forward.4} parent=39 // pred_check
        %p473 = pneg %p106
      $region42: #{conv_ae_lstm_forward.4} parent=39 // pred_check_branch
        %475 = sbr.rel (%p473) target = $region44
      $region43: #{conv_ae_lstm_forward.4} parent=39 // pred_region
        %s476 = smul.u32 18, %s15
        %p477 = scmp.lt.s32.totalorder %s476, 35
        %s478 = scalar_select %p477, %s476, 35
        %s479 = smul.addr %s478, 8
        %s480 = scalar_lea.vmem %s3, %s479
      $region44: #{conv_ae_lstm_forward.4} parent=39 // pred_fallthru
        _
    $region40: #{conv_ae_lstm_forward.4} parent=5 // pred_fallthru
      _
  $region6: #{conv_ae_lstm_forward.4} parent=0 // loop_footer
    %s13 = sadd.s32 1, %s9
  $region7: #{conv_ae_lstm_forward.4} parent=0 // loop_footer_branch
    %8 = sbr.rel target = $region3
  $region8: #{conv_ae_lstm_forward.4} parent=0 // loop_exit
    _

// kernel: conv_ae_lstm_forward.5
$region0: #{conv_ae_lstm_forward.5}
  #allocation0 [shape = 'u32[]', space=smem, size = 0x4, offset = 0x4, fixed_abs, tag = 'smem constant byte address 0x4 - core index']
  #allocation1 [shape = 'u32[144,128]{1,0:T(1,128)}', space=vmem, size = 0x12000, scoped, tag = 'internal scratch']
  %s0 = inlined_call_operand.vmem [shape: bf16[32,2304], index: 0, kind: input, shape index: {}]
  %s1 = inlined_call_operand.vmem [shape: bf16[2304,128], index: 1, kind: input, shape index: {}]
  %s2 = inlined_call_operand.vmem [shape: f32[1,128], index: 2, kind: input, shape index: {}]
  %s3 = inlined_call_operand.vmem [shape: f32[32,128], index: 3, kind: output, shape index: {}]
  %s4 = sld [smem:[#allocation0]]
  $region22: #{conv_ae_lstm_forward.5} parent=0
    _
  %s6 = ssub.s32 1, %s4
  %s7 = scalar_select 0, %s6, %s4
  // Predicated region
  $region2: #{conv_ae_lstm_forward.5} parent=0 // pred_check
    _
  $region3: #{conv_ae_lstm_forward.5} parent=0 // pred_check_branch
    %9 = sbr.rel (0) target = $region5
  $region4: #{conv_ae_lstm_forward.5} parent=0 // pred_region
    _
  $region5: #{conv_ae_lstm_forward.5} parent=0 // pred_fallthru
    _
  // Predicated region
  $region6: #{conv_ae_lstm_forward.5} parent=0 // pred_check
    _
  $region7: #{conv_ae_lstm_forward.5} parent=0 // pred_check_branch
    %11 = sbr.rel (0) target = $region9
  $region8: #{conv_ae_lstm_forward.5} parent=0 // pred_region
    _
  $region9: #{conv_ae_lstm_forward.5} parent=0 // pred_fallthru
    _
  // Predicated region
  $region10: #{conv_ae_lstm_forward.5} parent=0 // pred_check
    _
  $region11: #{conv_ae_lstm_forward.5} parent=0 // pred_check_branch
    %13 = sbr.rel (0) target = $region13
  $region12: #{conv_ae_lstm_forward.5} parent=0 // pred_region
    _
  $region13: #{conv_ae_lstm_forward.5} parent=0 // pred_fallthru
    _
  %v15 = vld [vmem:[%s0] sm:$0xff]
  %v16 = vld [vmem:[%s0 + $0x8] sm:$0xff]
  %v17 = vld [vmem:[%s0 + $0x10] sm:$0xff]
  %v18 = vld [vmem:[%s0 + $0x18] sm:$0xff]
  %v19 = vld [vmem:[%s0 + $0x20] sm:$0xff]
  %v20 = vld [vmem:[%s0 + $0x28] sm:$0xff]
  %v21 = vld [vmem:[%s0 + $0x30] sm:$0xff]
  %v22 = vld [vmem:[%s0 + $0x38] sm:$0xff]
  %v23 = vld [vmem:[%s0 + $0x40] sm:$0xff]
  %v24 = vld [vmem:[%s0 + $0x48] sm:$0xff]
  %v25 = vld [vmem:[%s0 + $0x50] sm:$0xff]
  %v26 = vld [vmem:[%s0 + $0x58] sm:$0xff]
  %v27 = vld [vmem:[%s0 + $0x60] sm:$0xff]
  %v28 = vld [vmem:[%s0 + $0x68] sm:$0xff]
  %v29 = vld [vmem:[%s0 + $0x70] sm:$0xff]
  %v30 = vld [vmem:[%s0 + $0x78] sm:$0xff]
  %v31 = vld [vmem:[%s0 + $0x80] sm:$0xff]
  %v32 = vld [vmem:[%s0 + $0x88] sm:$0xff]
  %v33 = vld [vmem:[%s0 + $0x90] sm:$0xff]
  %v34 = vld [vmem:[%s0 + $0x98] sm:$0xff]
  %v35 = vld [vmem:[%s0 + $0xa0] sm:$0xff]
  %v36 = vld [vmem:[%s0 + $0xa8] sm:$0xff]
  %v37 = vld [vmem:[%s0 + $0xb0] sm:$0xff]
  %v38 = vld [vmem:[%s0 + $0xb8] sm:$0xff]
  %v39 = vld [vmem:[%s0 + $0xc0] sm:$0xff]
  %v40 = vld [vmem:[%s0 + $0xc8] sm:$0xff]
  %v41 = vld [vmem:[%s0 + $0xd0] sm:$0xff]
  %v42 = vld [vmem:[%s0 + $0xd8] sm:$0xff]
  %v43 = vld [vmem:[%s0 + $0xe0] sm:$0xff]
  %v44 = vld [vmem:[%s0 + $0xe8] sm:$0xff]
  %v45 = vld [vmem:[%s0 + $0xf0] sm:$0xff]
  %v46 = vld [vmem:[%s0 + $0xf8] sm:$0xff]
  %v47 = vld [vmem:[%s0 + $0x100] sm:$0xff]
  %v48 = vld [vmem:[%s0 + $0x108] sm:$0xff]
  %v49 = vld [vmem:[%s0 + $0x110] sm:$0xff]
  %v50 = vld [vmem:[%s0 + $0x118] sm:$0xff]
  %v51 = vld [vmem:[%s1] sm:$0xf]
  %v52 = vld [vmem:[%s1 + $0x4] sm:$0xf]
  %v53 = vld [vmem:[%s1 + $0x8] sm:$0xf]
  %v54 = vld [vmem:[%s1 + $0xc] sm:$0xf]
  %v55 = vld [vmem:[%s1 + $0x10] sm:$0xf]
  %v56 = vld [vmem:[%s1 + $0x14] sm:$0xf]
  %v57 = vld [vmem:[%s1 + $0x18] sm:$0xf]
  %v58 = vld [vmem:[%s1 + $0x1c] sm:$0xf]
  %v59 = vld [vmem:[%s1 + $0x20] sm:$0xf]
  %v60 = vld [vmem:[%s1 + $0x24] sm:$0xf]
  %v61 = vld [vmem:[%s1 + $0x28] sm:$0xf]
  %v62 = vld [vmem:[%s1 + $0x2c] sm:$0xf]
  %v63 = vld [vmem:[%s1 + $0x30] sm:$0xf]
  %v64 = vld [vmem:[%s1 + $0x34] sm:$0xf]
  %v65 = vld [vmem:[%s1 + $0x38] sm:$0xf]
  %v66 = vld [vmem:[%s1 + $0x3c] sm:$0xf]
  %v67 = vld [vmem:[%s1 + $0x40] sm:$0xf]
  %v68 = vld [vmem:[%s1 + $0x44] sm:$0xf]
  %v69 = vld [vmem:[%s1 + $0x48] sm:$0xf]
  %v70 = vld [vmem:[%s1 + $0x4c] sm:$0xf]
  %v71 = vld [vmem:[%s1 + $0x50] sm:$0xf]
  %v72 = vld [vmem:[%s1 + $0x54] sm:$0xf]
  %v73 = vld [vmem:[%s1 + $0x58] sm:$0xf]
  %v74 = vld [vmem:[%s1 + $0x5c] sm:$0xf]
  %v75 = vld [vmem:[%s1 + $0x60] sm:$0xf]
  %v76 = vld [vmem:[%s1 + $0x64] sm:$0xf]
  %v77 = vld [vmem:[%s1 + $0x68] sm:$0xf]
  %v78 = vld [vmem:[%s1 + $0x6c] sm:$0xf]
  %v79 = vld [vmem:[%s1 + $0x70] sm:$0xf]
  %v80 = vld [vmem:[%s1 + $0x74] sm:$0xf]
  %v81 = vld [vmem:[%s1 + $0x78] sm:$0xf]
  %v82 = vld [vmem:[%s1 + $0x7c] sm:$0xf]
  %v83 = vld [vmem:[%s1 + $0x80] sm:$0xf]
  %v84 = vld [vmem:[%s1 + $0x84] sm:$0xf]
  %v85 = vld [vmem:[%s1 + $0x88] sm:$0xf]
  %v86 = vld [vmem:[%s1 + $0x8c] sm:$0xf]
  %v87 = vld [vmem:[%s1 + $0x90] sm:$0xf]
  %v88 = vld [vmem:[%s1 + $0x94] sm:$0xf]
  %v89 = vld [vmem:[%s1 + $0x98] sm:$0xf]
  %v90 = vld [vmem:[%s1 + $0x9c] sm:$0xf]
  %v91 = vld [vmem:[%s1 + $0xa0] sm:$0xf]
  %v92 = vld [vmem:[%s1 + $0xa4] sm:$0xf]
  %v93 = vld [vmem:[%s1 + $0xa8] sm:$0xf]
  %v94 = vld [vmem:[%s1 + $0xac] sm:$0xf]
  %v95 = vld [vmem:[%s1 + $0xb0] sm:$0xf]
  %v96 = vld [vmem:[%s1 + $0xb4] sm:$0xf]
  %v97 = vld [vmem:[%s1 + $0xb8] sm:$0xf]
  %v98 = vld [vmem:[%s1 + $0xbc] sm:$0xf]
  %v99 = vld [vmem:[%s1 + $0xc0] sm:$0xf]
  %v100 = vld [vmem:[%s1 + $0xc4] sm:$0xf]
  %v101 = vld [vmem:[%s1 + $0xc8] sm:$0xf]
  %v102 = vld [vmem:[%s1 + $0xcc] sm:$0xf]
  %v103 = vld [vmem:[%s1 + $0xd0] sm:$0xf]
  %v104 = vld [vmem:[%s1 + $0xd4] sm:$0xf]
  %v105 = vld [vmem:[%s1 + $0xd8] sm:$0xf]
  %v106 = vld [vmem:[%s1 + $0xdc] sm:$0xf]
  %v107 = vld [vmem:[%s1 + $0xe0] sm:$0xf]
  %v108 = vld [vmem:[%s1 + $0xe4] sm:$0xf]
  %v109 = vld [vmem:[%s1 + $0xe8] sm:$0xf]
  %v110 = vld [vmem:[%s1 + $0xec] sm:$0xf]
  %v111 = vld [vmem:[%s1 + $0xf0] sm:$0xf]
  %v112 = vld [vmem:[%s1 + $0xf4] sm:$0xf]
  %v113 = vld [vmem:[%s1 + $0xf8] sm:$0xf]
  %v114 = vld [vmem:[%s1 + $0xfc] sm:$0xf]
  %v115 = vld [vmem:[%s1 + $0x100] sm:$0xf]
  %v116 = vld [vmem:[%s1 + $0x104] sm:$0xf]
  %v117 = vld [vmem:[%s1 + $0x108] sm:$0xf]
  %v118 = vld [vmem:[%s1 + $0x10c] sm:$0xf]
  %v119 = vld [vmem:[%s1 + $0x110] sm:$0xf]
  %v120 = vld [vmem:[%s1 + $0x114] sm:$0xf]
  %v121 = vld [vmem:[%s1 + $0x118] sm:$0xf]
  %v122 = vld [vmem:[%s1 + $0x11c] sm:$0xf]
  %v123 = vld [vmem:[%s1 + $0x120] sm:$0xf]
  %v124 = vld [vmem:[%s1 + $0x124] sm:$0xf]
  %v125 = vld [vmem:[%s1 + $0x128] sm:$0xf]
  %v126 = vld [vmem:[%s1 + $0x12c] sm:$0xf]
  %v127 = vld [vmem:[%s1 + $0x130] sm:$0xf]
  %v128 = vld [vmem:[%s1 + $0x134] sm:$0xf]
  %v129 = vld [vmem:[%s1 + $0x138] sm:$0xf]
  %v130 = vld [vmem:[%s1 + $0x13c] sm:$0xf]
  %v131 = vld [vmem:[%s1 + $0x140] sm:$0xf]
  %v132 = vld [vmem:[%s1 + $0x144] sm:$0xf]
  %v133 = vld [vmem:[%s1 + $0x148] sm:$0xf]
  %v134 = vld [vmem:[%s1 + $0x14c] sm:$0xf]
  %v135 = vld [vmem:[%s1 + $0x150] sm:$0xf]
  %v136 = vld [vmem:[%s1 + $0x154] sm:$0xf]
  %v137 = vld [vmem:[%s1 + $0x158] sm:$0xf]
  %v138 = vld [vmem:[%s1 + $0x15c] sm:$0xf]
  %v139 = vld [vmem:[%s1 + $0x160] sm:$0xf]
  %v140 = vld [vmem:[%s1 + $0x164] sm:$0xf]
  %v141 = vld [vmem:[%s1 + $0x168] sm:$0xf]
  %v142 = vld [vmem:[%s1 + $0x16c] sm:$0xf]
  %v143 = vld [vmem:[%s1 + $0x170] sm:$0xf]
  %v144 = vld [vmem:[%s1 + $0x174] sm:$0xf]
  %v145 = vld [vmem:[%s1 + $0x178] sm:$0xf]
  %v146 = vld [vmem:[%s1 + $0x17c] sm:$0xf]
  %v147 = vld [vmem:[%s1 + $0x180] sm:$0xf]
  %v148 = vld [vmem:[%s1 + $0x184] sm:$0xf]
  %v149 = vld [vmem:[%s1 + $0x188] sm:$0xf]
  %v150 = vld [vmem:[%s1 + $0x18c] sm:$0xf]
  %v151 = vld [vmem:[%s1 + $0x190] sm:$0xf]
  %v152 = vld [vmem:[%s1 + $0x194] sm:$0xf]
  %v153 = vld [vmem:[%s1 + $0x198] sm:$0xf]
  %v154 = vld [vmem:[%s1 + $0x19c] sm:$0xf]
  %v155 = vld [vmem:[%s1 + $0x1a0] sm:$0xf]
  %v156 = vld [vmem:[%s1 + $0x1a4] sm:$0xf]
  %v157 = vld [vmem:[%s1 + $0x1a8] sm:$0xf]
  %v158 = vld [vmem:[%s1 + $0x1ac] sm:$0xf]
  %v159 = vld [vmem:[%s1 + $0x1b0] sm:$0xf]
  %v160 = vld [vmem:[%s1 + $0x1b4] sm:$0xf]
  %v161 = vld [vmem:[%s1 + $0x1b8] sm:$0xf]
  %v162 = vld [vmem:[%s1 + $0x1bc] sm:$0xf]
  %v163 = vld [vmem:[%s1 + $0x1c0] sm:$0xf]
  %v164 = vld [vmem:[%s1 + $0x1c4] sm:$0xf]
  %v165 = vld [vmem:[%s1 + $0x1c8] sm:$0xf]
  %v166 = vld [vmem:[%s1 + $0x1cc] sm:$0xf]
  %v167 = vld [vmem:[%s1 + $0x1d0] sm:$0xf]
  %v168 = vld [vmem:[%s1 + $0x1d4] sm:$0xf]
  %v169 = vld [vmem:[%s1 + $0x1d8] sm:$0xf]
  %v170 = vld [vmem:[%s1 + $0x1dc] sm:$0xf]
  %v171 = vld [vmem:[%s1 + $0x1e0] sm:$0xf]
  %v172 = vld [vmem:[%s1 + $0x1e4] sm:$0xf]
  %v173 = vld [vmem:[%s1 + $0x1e8] sm:$0xf]
  %v174 = vld [vmem:[%s1 + $0x1ec] sm:$0xf]
  %v175 = vld [vmem:[%s1 + $0x1f0] sm:$0xf]
  %v176 = vld [vmem:[%s1 + $0x1f4] sm:$0xf]
  %v177 = vld [vmem:[%s1 + $0x1f8] sm:$0xf]
  %v178 = vld [vmem:[%s1 + $0x1fc] sm:$0xf]
  %v179 = vld [vmem:[%s1 + $0x200] sm:$0xf]
  %v180 = vld [vmem:[%s1 + $0x204] sm:$0xf]
  %v181 = vld [vmem:[%s1 + $0x208] sm:$0xf]
  %v182 = vld [vmem:[%s1 + $0x20c] sm:$0xf]
  %v183 = vld [vmem:[%s1 + $0x210] sm:$0xf]
  %v184 = vld [vmem:[%s1 + $0x214] sm:$0xf]
  %v185 = vld [vmem:[%s1 + $0x218] sm:$0xf]
  %v186 = vld [vmem:[%s1 + $0x21c] sm:$0xf]
  %v187 = vld [vmem:[%s1 + $0x220] sm:$0xf]
  %v188 = vld [vmem:[%s1 + $0x224] sm:$0xf]
  %v189 = vld [vmem:[%s1 + $0x228] sm:$0xf]
  %v190 = vld [vmem:[%s1 + $0x22c] sm:$0xf]
  %v191 = vld [vmem:[%s1 + $0x230] sm:$0xf]
  %v192 = vld [vmem:[%s1 + $0x234] sm:$0xf]
  %v193 = vld [vmem:[%s1 + $0x238] sm:$0xf]
  %v194 = vld [vmem:[%s1 + $0x23c] sm:$0xf]
  %v195 = vld [vmem:[%s1 + $0x240] sm:$0xf]
  %v196 = vld [vmem:[%s1 + $0x244] sm:$0xf]
  %v197 = vld [vmem:[%s1 + $0x248] sm:$0xf]
  %v198 = vld [vmem:[%s1 + $0x24c] sm:$0xf]
  %v199 = vld [vmem:[%s1 + $0x250] sm:$0xf]
  %v200 = vld [vmem:[%s1 + $0x254] sm:$0xf]
  %v201 = vld [vmem:[%s1 + $0x258] sm:$0xf]
  %v202 = vld [vmem:[%s1 + $0x25c] sm:$0xf]
  %v203 = vld [vmem:[%s1 + $0x260] sm:$0xf]
  %v204 = vld [vmem:[%s1 + $0x264] sm:$0xf]
  %v205 = vld [vmem:[%s1 + $0x268] sm:$0xf]
  %v206 = vld [vmem:[%s1 + $0x26c] sm:$0xf]
  %v207 = vld [vmem:[%s1 + $0x270] sm:$0xf]
  %v208 = vld [vmem:[%s1 + $0x274] sm:$0xf]
  %v209 = vld [vmem:[%s1 + $0x278] sm:$0xf]
  %v210 = vld [vmem:[%s1 + $0x27c] sm:$0xf]
  %v211 = vld [vmem:[%s1 + $0x280] sm:$0xf]
  %v212 = vld [vmem:[%s1 + $0x284] sm:$0xf]
  %v213 = vld [vmem:[%s1 + $0x288] sm:$0xf]
  %v214 = vld [vmem:[%s1 + $0x28c] sm:$0xf]
  %v215 = vld [vmem:[%s1 + $0x290] sm:$0xf]
  %v216 = vld [vmem:[%s1 + $0x294] sm:$0xf]
  %v217 = vld [vmem:[%s1 + $0x298] sm:$0xf]
  %v218 = vld [vmem:[%s1 + $0x29c] sm:$0xf]
  %v219 = vld [vmem:[%s1 + $0x2a0] sm:$0xf]
  %v220 = vld [vmem:[%s1 + $0x2a4] sm:$0xf]
  %v221 = vld [vmem:[%s1 + $0x2a8] sm:$0xf]
  %v222 = vld [vmem:[%s1 + $0x2ac] sm:$0xf]
  %v223 = vld [vmem:[%s1 + $0x2b0] sm:$0xf]
  %v224 = vld [vmem:[%s1 + $0x2b4] sm:$0xf]
  %v225 = vld [vmem:[%s1 + $0x2b8] sm:$0xf]
  %v226 = vld [vmem:[%s1 + $0x2bc] sm:$0xf]
  %v227 = vld [vmem:[%s1 + $0x2c0] sm:$0xf]
  %v228 = vld [vmem:[%s1 + $0x2c4] sm:$0xf]
  %v229 = vld [vmem:[%s1 + $0x2c8] sm:$0xf]
  %v230 = vld [vmem:[%s1 + $0x2cc] sm:$0xf]
  %v231 = vld [vmem:[%s1 + $0x2d0] sm:$0xf]
  %v232 = vld [vmem:[%s1 + $0x2d4] sm:$0xf]
  %v233 = vld [vmem:[%s1 + $0x2d8] sm:$0xf]
  %v234 = vld [vmem:[%s1 + $0x2dc] sm:$0xf]
  %v235 = vld [vmem:[%s1 + $0x2e0] sm:$0xf]
  %v236 = vld [vmem:[%s1 + $0x2e4] sm:$0xf]
  %v237 = vld [vmem:[%s1 + $0x2e8] sm:$0xf]
  %v238 = vld [vmem:[%s1 + $0x2ec] sm:$0xf]
  %v239 = vld [vmem:[%s1 + $0x2f0] sm:$0xf]
  %v240 = vld [vmem:[%s1 + $0x2f4] sm:$0xf]
  %v241 = vld [vmem:[%s1 + $0x2f8] sm:$0xf]
  %v242 = vld [vmem:[%s1 + $0x2fc] sm:$0xf]
  %v243 = vld [vmem:[%s1 + $0x300] sm:$0xf]
  %v244 = vld [vmem:[%s1 + $0x304] sm:$0xf]
  %v245 = vld [vmem:[%s1 + $0x308] sm:$0xf]
  %v246 = vld [vmem:[%s1 + $0x30c] sm:$0xf]
  %v247 = vld [vmem:[%s1 + $0x310] sm:$0xf]
  %v248 = vld [vmem:[%s1 + $0x314] sm:$0xf]
  %v249 = vld [vmem:[%s1 + $0x318] sm:$0xf]
  %v250 = vld [vmem:[%s1 + $0x31c] sm:$0xf]
  %v251 = vld [vmem:[%s1 + $0x320] sm:$0xf]
  %v252 = vld [vmem:[%s1 + $0x324] sm:$0xf]
  %v253 = vld [vmem:[%s1 + $0x328] sm:$0xf]
  %v254 = vld [vmem:[%s1 + $0x32c] sm:$0xf]
  %v255 = vld [vmem:[%s1 + $0x330] sm:$0xf]
  %v256 = vld [vmem:[%s1 + $0x334] sm:$0xf]
  %v257 = vld [vmem:[%s1 + $0x338] sm:$0xf]
  %v258 = vld [vmem:[%s1 + $0x33c] sm:$0xf]
  %v259 = vld [vmem:[%s1 + $0x340] sm:$0xf]
  %v260 = vld [vmem:[%s1 + $0x344] sm:$0xf]
  %v261 = vld [vmem:[%s1 + $0x348] sm:$0xf]
  %v262 = vld [vmem:[%s1 + $0x34c] sm:$0xf]
  %v263 = vld [vmem:[%s1 + $0x350] sm:$0xf]
  %v264 = vld [vmem:[%s1 + $0x354] sm:$0xf]
  %v265 = vld [vmem:[%s1 + $0x358] sm:$0xf]
  %v266 = vld [vmem:[%s1 + $0x35c] sm:$0xf]
  %v267 = vld [vmem:[%s1 + $0x360] sm:$0xf]
  %v268 = vld [vmem:[%s1 + $0x364] sm:$0xf]
  %v269 = vld [vmem:[%s1 + $0x368] sm:$0xf]
  %v270 = vld [vmem:[%s1 + $0x36c] sm:$0xf]
  %v271 = vld [vmem:[%s1 + $0x370] sm:$0xf]
  %v272 = vld [vmem:[%s1 + $0x374] sm:$0xf]
  %v273 = vld [vmem:[%s1 + $0x378] sm:$0xf]
  %v274 = vld [vmem:[%s1 + $0x37c] sm:$0xf]
  %v275 = vld [vmem:[%s1 + $0x380] sm:$0xf]
  %v276 = vld [vmem:[%s1 + $0x384] sm:$0xf]
  %v277 = vld [vmem:[%s1 + $0x388] sm:$0xf]
  %v278 = vld [vmem:[%s1 + $0x38c] sm:$0xf]
  %v279 = vld [vmem:[%s1 + $0x390] sm:$0xf]
  %v280 = vld [vmem:[%s1 + $0x394] sm:$0xf]
  %v281 = vld [vmem:[%s1 + $0x398] sm:$0xf]
  %v282 = vld [vmem:[%s1 + $0x39c] sm:$0xf]
  %v283 = vld [vmem:[%s1 + $0x3a0] sm:$0xf]
  %v284 = vld [vmem:[%s1 + $0x3a4] sm:$0xf]
  %v285 = vld [vmem:[%s1 + $0x3a8] sm:$0xf]
  %v286 = vld [vmem:[%s1 + $0x3ac] sm:$0xf]
  %v287 = vld [vmem:[%s1 + $0x3b0] sm:$0xf]
  %v288 = vld [vmem:[%s1 + $0x3b4] sm:$0xf]
  %v289 = vld [vmem:[%s1 + $0x3b8] sm:$0xf]
  %v290 = vld [vmem:[%s1 + $0x3bc] sm:$0xf]
  %v291 = vld [vmem:[%s1 + $0x3c0] sm:$0xf]
  %v292 = vld [vmem:[%s1 + $0x3c4] sm:$0xf]
  %v293 = vld [vmem:[%s1 + $0x3c8] sm:$0xf]
  %v294 = vld [vmem:[%s1 + $0x3cc] sm:$0xf]
  %v295 = vld [vmem:[%s1 + $0x3d0] sm:$0xf]
  %v296 = vld [vmem:[%s1 + $0x3d4] sm:$0xf]
  %v297 = vld [vmem:[%s1 + $0x3d8] sm:$0xf]
  %v298 = vld [vmem:[%s1 + $0x3dc] sm:$0xf]
  %v299 = vld [vmem:[%s1 + $0x3e0] sm:$0xf]
  %v300 = vld [vmem:[%s1 + $0x3e4] sm:$0xf]
  %v301 = vld [vmem:[%s1 + $0x3e8] sm:$0xf]
  %v302 = vld [vmem:[%s1 + $0x3ec] sm:$0xf]
  %v303 = vld [vmem:[%s1 + $0x3f0] sm:$0xf]
  %v304 = vld [vmem:[%s1 + $0x3f4] sm:$0xf]
  %v305 = vld [vmem:[%s1 + $0x3f8] sm:$0xf]
  %v306 = vld [vmem:[%s1 + $0x3fc] sm:$0xf]
  %v307 = vld [vmem:[%s1 + $0x400] sm:$0xf]
  %v308 = vld [vmem:[%s1 + $0x404] sm:$0xf]
  %v309 = vld [vmem:[%s1 + $0x408] sm:$0xf]
  %v310 = vld [vmem:[%s1 + $0x40c] sm:$0xf]
  %v311 = vld [vmem:[%s1 + $0x410] sm:$0xf]
  %v312 = vld [vmem:[%s1 + $0x414] sm:$0xf]
  %v313 = vld [vmem:[%s1 + $0x418] sm:$0xf]
  %v314 = vld [vmem:[%s1 + $0x41c] sm:$0xf]
  %v315 = vld [vmem:[%s1 + $0x420] sm:$0xf]
  %v316 = vld [vmem:[%s1 + $0x424] sm:$0xf]
  %v317 = vld [vmem:[%s1 + $0x428] sm:$0xf]
  %v318 = vld [vmem:[%s1 + $0x42c] sm:$0xf]
  %v319 = vld [vmem:[%s1 + $0x430] sm:$0xf]
  %v320 = vld [vmem:[%s1 + $0x434] sm:$0xf]
  %v321 = vld [vmem:[%s1 + $0x438] sm:$0xf]
  %v322 = vld [vmem:[%s1 + $0x43c] sm:$0xf]
  %v323 = vld [vmem:[%s1 + $0x440] sm:$0xf]
  %v324 = vld [vmem:[%s1 + $0x444] sm:$0xf]
  %v325 = vld [vmem:[%s1 + $0x448] sm:$0xf]
  %v326 = vld [vmem:[%s1 + $0x44c] sm:$0xf]
  %v327 = vld [vmem:[%s1 + $0x450] sm:$0xf]
  %v328 = vld [vmem:[%s1 + $0x454] sm:$0xf]
  %v329 = vld [vmem:[%s1 + $0x458] sm:$0xf]
  %v330 = vld [vmem:[%s1 + $0x45c] sm:$0xf]
  %v331 = vld [vmem:[%s1 + $0x460] sm:$0xf]
  %v332 = vld [vmem:[%s1 + $0x464] sm:$0xf]
  %v333 = vld [vmem:[%s1 + $0x468] sm:$0xf]
  %v334 = vld [vmem:[%s1 + $0x46c] sm:$0xf]
  %v335 = vld [vmem:[%s1 + $0x470] sm:$0xf]
  %v336 = vld [vmem:[%s1 + $0x474] sm:$0xf]
  %v337 = vld [vmem:[%s1 + $0x478] sm:$0xf]
  %v338 = vld [vmem:[%s1 + $0x47c] sm:$0xf]
  %v339 = vld [vmem:[%s2] sm:$0x1]
  %v341 = vlaneseq
  %v342 = vshrl.u32 %v341, 7
  %v343 = vsub.s32 0, %v342
  %v344 = vrot.slane %v339, %v343
  %v382 = vunpack.c.l.b16 %v15
  %v383 = vunpack.c.h.b16 %v15
  %v384 = vunpack.c.l.b16 %v16
  %v385 = vunpack.c.h.b16 %v16
  %v386 = vunpack.c.l.b16 %v17
  %v387 = vunpack.c.h.b16 %v17
  %v388 = vunpack.c.l.b16 %v18
  %v389 = vunpack.c.h.b16 %v18
  %v390 = vunpack.c.l.b16 %v19
  %v391 = vunpack.c.h.b16 %v19
  %v392 = vunpack.c.l.b16 %v20
  %v393 = vunpack.c.h.b16 %v20
  %v394 = vunpack.c.l.b16 %v21
  %v395 = vunpack.c.h.b16 %v21
  %v396 = vunpack.c.l.b16 %v22
  %v397 = vunpack.c.h.b16 %v22
  %v398 = vunpack.c.l.b16 %v23
  %v399 = vunpack.c.h.b16 %v23
  %v400 = vunpack.c.l.b16 %v24
  %v401 = vunpack.c.h.b16 %v24
  %v402 = vunpack.c.l.b16 %v25
  %v403 = vunpack.c.h.b16 %v25
  %v404 = vunpack.c.l.b16 %v26
  %v405 = vunpack.c.h.b16 %v26
  %v406 = vunpack.c.l.b16 %v27
  %v407 = vunpack.c.h.b16 %v27
  %v408 = vunpack.c.l.b16 %v28
  %v409 = vunpack.c.h.b16 %v28
  %v410 = vunpack.c.l.b16 %v29
  %v411 = vunpack.c.h.b16 %v29
  %v412 = vunpack.c.l.b16 %v30
  %v413 = vunpack.c.h.b16 %v30
  %v414 = vunpack.c.l.b16 %v31
  %v415 = vunpack.c.h.b16 %v31
  %v416 = vunpack.c.l.b16 %v32
  %v417 = vunpack.c.h.b16 %v32
  %v418 = vunpack.c.l.b16 %v33
  %v419 = vunpack.c.h.b16 %v33
  %v420 = vunpack.c.l.b16 %v34
  %v421 = vunpack.c.h.b16 %v34
  %v422 = vunpack.c.l.b16 %v35
  %v423 = vunpack.c.h.b16 %v35
  %v424 = vunpack.c.l.b16 %v36
  %v425 = vunpack.c.h.b16 %v36
  %v426 = vunpack.c.l.b16 %v37
  %v427 = vunpack.c.h.b16 %v37
  %v428 = vunpack.c.l.b16 %v38
  %v429 = vunpack.c.h.b16 %v38
  %v430 = vunpack.c.l.b16 %v39
  %v431 = vunpack.c.h.b16 %v39
  %v432 = vunpack.c.l.b16 %v40
  %v433 = vunpack.c.h.b16 %v40
  %v434 = vunpack.c.l.b16 %v41
  %v435 = vunpack.c.h.b16 %v41
  %v436 = vunpack.c.l.b16 %v42
  %v437 = vunpack.c.h.b16 %v42
  %v438 = vunpack.c.l.b16 %v43
  %v439 = vunpack.c.h.b16 %v43
  %v440 = vunpack.c.l.b16 %v44
  %v441 = vunpack.c.h.b16 %v44
  %v442 = vunpack.c.l.b16 %v45
  %v443 = vunpack.c.h.b16 %v45
  %v444 = vunpack.c.l.b16 %v46
  %v445 = vunpack.c.h.b16 %v46
  %v446 = vunpack.c.l.b16 %v47
  %v447 = vunpack.c.h.b16 %v47
  %v448 = vunpack.c.l.b16 %v48
  %v449 = vunpack.c.h.b16 %v48
  %v450 = vunpack.c.l.b16 %v49
  %v451 = vunpack.c.h.b16 %v49
  %v452 = vunpack.c.l.b16 %v50
  %v453 = vunpack.c.h.b16 %v50
  %v454 = vpack.c.b16 %v400, %v382
  %v455 = vpack.c.b16 %v401, %v383
  %v456 = vpack.c.b16 %v402, %v384
  %v457 = vpack.c.b16 %v403, %v385
  %v458 = vpack.c.b16 %v404, %v386
  %v459 = vpack.c.b16 %v405, %v387
  %v460 = vpack.c.b16 %v406, %v388
  %v461 = vpack.c.b16 %v407, %v389
  %v462 = vpack.c.b16 %v408, %v390
  %v463 = vpack.c.b16 %v409, %v391
  %v464 = vpack.c.b16 %v410, %v392
  %v465 = vpack.c.b16 %v411, %v393
  %v466 = vpack.c.b16 %v412, %v394
  %v467 = vpack.c.b16 %v413, %v395
  %v468 = vpack.c.b16 %v414, %v396
  %v469 = vpack.c.b16 %v415, %v397
  %v470 = vpack.c.b16 %v416, %v398
  %v471 = vpack.c.b16 %v417, %v399
  %v472 = vpack.c.b16 %v436, %v418
  %v473 = vpack.c.b16 %v437, %v419
  %v474 = vpack.c.b16 %v438, %v420
  %v475 = vpack.c.b16 %v439, %v421
  %v476 = vpack.c.b16 %v440, %v422
  %v477 = vpack.c.b16 %v441, %v423
  %v478 = vpack.c.b16 %v442, %v424
  %v479 = vpack.c.b16 %v443, %v425
  %v480 = vpack.c.b16 %v444, %v426
  %v481 = vpack.c.b16 %v445, %v427
  %v482 = vpack.c.b16 %v446, %v428
  %v483 = vpack.c.b16 %v447, %v429
  %v484 = vpack.c.b16 %v448, %v430
  %v485 = vpack.c.b16 %v449, %v431
  %v486 = vpack.c.b16 %v450, %v432
  %v487 = vpack.c.b16 %v451, %v433
  %v488 = vpack.c.b16 %v452, %v434
  %v489 = vpack.c.b16 %v453, %v435
  %v814 = vunpack.c.l.b16 %v51
  %v815 = vunpack.c.l.b16 %v52
  %v816 = vunpack.c.l.b16 %v53
  %v817 = vunpack.c.l.b16 %v54
  %v818 = vunpack.c.l.b16 %v55
  %v819 = vunpack.c.l.b16 %v56
  %v820 = vunpack.c.l.b16 %v57
  %v821 = vunpack.c.l.b16 %v58
  %v822 = vunpack.c.l.b16 %v59
  %v823 = vunpack.c.l.b16 %v60
  %v824 = vunpack.c.l.b16 %v61
  %v825 = vunpack.c.l.b16 %v62
  %v826 = vunpack.c.l.b16 %v63
  %v827 = vunpack.c.l.b16 %v64
  %v828 = vunpack.c.l.b16 %v65
  %v829 = vunpack.c.l.b16 %v66
  %v830 = vunpack.c.l.b16 %v67
  %v831 = vunpack.c.l.b16 %v68
  %v832 = vunpack.c.l.b16 %v69
  %v833 = vunpack.c.l.b16 %v70
  %v834 = vunpack.c.l.b16 %v71
  %v835 = vunpack.c.l.b16 %v72
  %v836 = vunpack.c.l.b16 %v73
  %v837 = vunpack.c.l.b16 %v74
  %v838 = vunpack.c.l.b16 %v75
  %v839 = vunpack.c.l.b16 %v76
  %v840 = vunpack.c.l.b16 %v77
  %v841 = vunpack.c.l.b16 %v78
  %v842 = vunpack.c.l.b16 %v79
  %v843 = vunpack.c.l.b16 %v80
  %v844 = vunpack.c.l.b16 %v81
  %v845 = vunpack.c.l.b16 %v82
  %v846 = vunpack.c.l.b16 %v83
  %v847 = vunpack.c.l.b16 %v84
  %v848 = vunpack.c.l.b16 %v85
  %v849 = vunpack.c.l.b16 %v86
  %v850 = vunpack.c.l.b16 %v87
  %v851 = vunpack.c.l.b16 %v88
  %v852 = vunpack.c.l.b16 %v89
  %v853 = vunpack.c.l.b16 %v90
  %v854 = vunpack.c.l.b16 %v91
  %v855 = vunpack.c.l.b16 %v92
  %v856 = vunpack.c.l.b16 %v93
  %v857 = vunpack.c.l.b16 %v94
  %v858 = vunpack.c.l.b16 %v95
  %v859 = vunpack.c.l.b16 %v96
  %v860 = vunpack.c.l.b16 %v97
  %v861 = vunpack.c.l.b16 %v98
  %v862 = vunpack.c.l.b16 %v99
  %v863 = vunpack.c.l.b16 %v100
  %v864 = vunpack.c.l.b16 %v101
  %v865 = vunpack.c.l.b16 %v102
  %v866 = vunpack.c.l.b16 %v103
  %v867 = vunpack.c.l.b16 %v104
  %v868 = vunpack.c.l.b16 %v105
  %v869 = vunpack.c.l.b16 %v106
  %v870 = vunpack.c.l.b16 %v107
  %v871 = vunpack.c.l.b16 %v108
  %v872 = vunpack.c.l.b16 %v109
  %v873 = vunpack.c.l.b16 %v110
  %v874 = vunpack.c.l.b16 %v111
  %v875 = vunpack.c.l.b16 %v112
  %v876 = vunpack.c.l.b16 %v113
  %v877 = vunpack.c.l.b16 %v114
  %v878 = vunpack.c.l.b16 %v115
  %v879 = vunpack.c.l.b16 %v116
  %v880 = vunpack.c.l.b16 %v117
  %v881 = vunpack.c.l.b16 %v118
  %v882 = vunpack.c.l.b16 %v119
  %v883 = vunpack.c.l.b16 %v120
  %v884 = vunpack.c.l.b16 %v121
  %v885 = vunpack.c.l.b16 %v122
  %v886 = vunpack.c.l.b16 %v123
  %v887 = vunpack.c.l.b16 %v124
  %v888 = vunpack.c.l.b16 %v125
  %v889 = vunpack.c.l.b16 %v126
  %v890 = vunpack.c.l.b16 %v127
  %v891 = vunpack.c.l.b16 %v128
  %v892 = vunpack.c.l.b16 %v129
  %v893 = vunpack.c.l.b16 %v130
  %v894 = vunpack.c.l.b16 %v131
  %v895 = vunpack.c.l.b16 %v132
  %v896 = vunpack.c.l.b16 %v133
  %v897 = vunpack.c.l.b16 %v134
  %v898 = vunpack.c.l.b16 %v135
  %v899 = vunpack.c.l.b16 %v136
  %v900 = vunpack.c.l.b16 %v137
  %v901 = vunpack.c.l.b16 %v138
  %v902 = vunpack.c.l.b16 %v139
  %v903 = vunpack.c.l.b16 %v140
  %v904 = vunpack.c.l.b16 %v141
  %v905 = vunpack.c.l.b16 %v142
  %v906 = vunpack.c.l.b16 %v143
  %v907 = vunpack.c.l.b16 %v144
  %v908 = vunpack.c.l.b16 %v145
  %v909 = vunpack.c.l.b16 %v146
  %v910 = vunpack.c.l.b16 %v147
  %v911 = vunpack.c.l.b16 %v148
  %v912 = vunpack.c.l.b16 %v149
  %v913 = vunpack.c.l.b16 %v150
  %v914 = vunpack.c.l.b16 %v151
  %v915 = vunpack.c.l.b16 %v152
  %v916 = vunpack.c.l.b16 %v153
  %v917 = vunpack.c.l.b16 %v154
  %v918 = vunpack.c.l.b16 %v155
  %v919 = vunpack.c.l.b16 %v156
  %v920 = vunpack.c.l.b16 %v157
  %v921 = vunpack.c.l.b16 %v158
  %v922 = vunpack.c.l.b16 %v159
  %v923 = vunpack.c.l.b16 %v160
  %v924 = vunpack.c.l.b16 %v161
  %v925 = vunpack.c.l.b16 %v162
  %v926 = vunpack.c.l.b16 %v163
  %v927 = vunpack.c.l.b16 %v164
  %v928 = vunpack.c.l.b16 %v165
  %v929 = vunpack.c.l.b16 %v166
  %v930 = vunpack.c.l.b16 %v167
  %v931 = vunpack.c.l.b16 %v168
  %v932 = vunpack.c.l.b16 %v169
  %v933 = vunpack.c.l.b16 %v170
  %v934 = vunpack.c.l.b16 %v171
  %v935 = vunpack.c.l.b16 %v172
  %v936 = vunpack.c.l.b16 %v173
  %v937 = vunpack.c.l.b16 %v174
  %v938 = vunpack.c.l.b16 %v175
  %v939 = vunpack.c.l.b16 %v176
  %v940 = vunpack.c.l.b16 %v177
  %v941 = vunpack.c.l.b16 %v178
  %v942 = vunpack.c.l.b16 %v179
  %v943 = vunpack.c.l.b16 %v180
  %v944 = vunpack.c.l.b16 %v181
  %v945 = vunpack.c.l.b16 %v182
  %v946 = vunpack.c.l.b16 %v183
  %v947 = vunpack.c.l.b16 %v184
  %v948 = vunpack.c.l.b16 %v185
  %v949 = vunpack.c.l.b16 %v186
  %v950 = vunpack.c.l.b16 %v187
  %v951 = vunpack.c.l.b16 %v188
  %v952 = vunpack.c.l.b16 %v189
  %v953 = vunpack.c.l.b16 %v190
  %v954 = vunpack.c.l.b16 %v191
  %v955 = vunpack.c.l.b16 %v192
  %v956 = vunpack.c.l.b16 %v193
  %v957 = vunpack.c.l.b16 %v194
  %v958 = vunpack.c.l.b16 %v195
  %v959 = vunpack.c.l.b16 %v196
  %v960 = vunpack.c.l.b16 %v197
  %v961 = vunpack.c.l.b16 %v198
  %v962 = vunpack.c.l.b16 %v199
  %v963 = vunpack.c.l.b16 %v200
  %v964 = vunpack.c.l.b16 %v201
  %v965 = vunpack.c.l.b16 %v202
  %v966 = vunpack.c.l.b16 %v203
  %v967 = vunpack.c.l.b16 %v204
  %v968 = vunpack.c.l.b16 %v205
  %v969 = vunpack.c.l.b16 %v206
  %v970 = vunpack.c.l.b16 %v207
  %v971 = vunpack.c.l.b16 %v208
  %v972 = vunpack.c.l.b16 %v209
  %v973 = vunpack.c.l.b16 %v210
  %v974 = vunpack.c.l.b16 %v211
  %v975 = vunpack.c.l.b16 %v212
  %v976 = vunpack.c.l.b16 %v213
  %v977 = vunpack.c.l.b16 %v214
  %v978 = vunpack.c.l.b16 %v215
  %v979 = vunpack.c.l.b16 %v216
  %v980 = vunpack.c.l.b16 %v217
  %v981 = vunpack.c.l.b16 %v218
  %v982 = vunpack.c.l.b16 %v219
  %v983 = vunpack.c.l.b16 %v220
  %v984 = vunpack.c.l.b16 %v221
  %v985 = vunpack.c.l.b16 %v222
  %v986 = vunpack.c.l.b16 %v223
  %v987 = vunpack.c.l.b16 %v224
  %v988 = vunpack.c.l.b16 %v225
  %v989 = vunpack.c.l.b16 %v226
  %v990 = vunpack.c.l.b16 %v227
  %v991 = vunpack.c.l.b16 %v228
  %v992 = vunpack.c.l.b16 %v229
  %v993 = vunpack.c.l.b16 %v230
  %v994 = vunpack.c.l.b16 %v231
  %v995 = vunpack.c.l.b16 %v232
  %v996 = vunpack.c.l.b16 %v233
  %v997 = vunpack.c.l.b16 %v234
  %v998 = vunpack.c.l.b16 %v235
  %v999 = vunpack.c.l.b16 %v236
  %v1000 = vunpack.c.l.b16 %v237
  %v1001 = vunpack.c.l.b16 %v238
  %v1002 = vunpack.c.l.b16 %v239
  %v1003 = vunpack.c.l.b16 %v240
  %v1004 = vunpack.c.l.b16 %v241
  %v1005 = vunpack.c.l.b16 %v242
  %v1006 = vunpack.c.l.b16 %v243
  %v1007 = vunpack.c.l.b16 %v244
  %v1008 = vunpack.c.l.b16 %v245
  %v1009 = vunpack.c.l.b16 %v246
  %v1010 = vunpack.c.l.b16 %v247
  %v1011 = vunpack.c.l.b16 %v248
  %v1012 = vunpack.c.l.b16 %v249
  %v1013 = vunpack.c.l.b16 %v250
  %v1014 = vunpack.c.l.b16 %v251
  %v1015 = vunpack.c.l.b16 %v252
  %v1016 = vunpack.c.l.b16 %v253
  %v1017 = vunpack.c.l.b16 %v254
  %v1018 = vunpack.c.l.b16 %v255
  %v1019 = vunpack.c.l.b16 %v256
  %v1020 = vunpack.c.l.b16 %v257
  %v1021 = vunpack.c.l.b16 %v258
  %v1022 = vunpack.c.l.b16 %v259
  %v1023 = vunpack.c.l.b16 %v260
  %v1024 = vunpack.c.l.b16 %v261
  %v1025 = vunpack.c.l.b16 %v262
  %v1026 = vunpack.c.l.b16 %v263
  %v1027 = vunpack.c.l.b16 %v264
  %v1028 = vunpack.c.l.b16 %v265
  %v1029 = vunpack.c.l.b16 %v266
  %v1030 = vunpack.c.l.b16 %v267
  %v1031 = vunpack.c.l.b16 %v268
  %v1032 = vunpack.c.l.b16 %v269
  %v1033 = vunpack.c.l.b16 %v270
  %v1034 = vunpack.c.l.b16 %v271
  %v1035 = vunpack.c.l.b16 %v272
  %v1036 = vunpack.c.l.b16 %v273
  %v1037 = vunpack.c.l.b16 %v274
  %v1038 = vunpack.c.l.b16 %v275
  %v1039 = vunpack.c.l.b16 %v276
  %v1040 = vunpack.c.l.b16 %v277
  %v1041 = vunpack.c.l.b16 %v278
  %v1042 = vunpack.c.l.b16 %v279
  %v1043 = vunpack.c.l.b16 %v280
  %v1044 = vunpack.c.l.b16 %v281
  %v1045 = vunpack.c.l.b16 %v282
  %v1046 = vunpack.c.l.b16 %v283
  %v1047 = vunpack.c.l.b16 %v284
  %v1048 = vunpack.c.l.b16 %v285
  %v1049 = vunpack.c.l.b16 %v286
  %v1050 = vunpack.c.l.b16 %v287
  %v1051 = vunpack.c.l.b16 %v288
  %v1052 = vunpack.c.l.b16 %v289
  %v1053 = vunpack.c.l.b16 %v290
  %v1054 = vunpack.c.l.b16 %v291
  %v1055 = vunpack.c.l.b16 %v292
  %v1056 = vunpack.c.l.b16 %v293
  %v1057 = vunpack.c.l.b16 %v294
  %v1058 = vunpack.c.l.b16 %v295
  %v1059 = vunpack.c.l.b16 %v296
  %v1060 = vunpack.c.l.b16 %v297
  %v1061 = vunpack.c.l.b16 %v298
  %v1062 = vunpack.c.l.b16 %v299
  %v1063 = vunpack.c.l.b16 %v300
  %v1064 = vunpack.c.l.b16 %v301
  %v1065 = vunpack.c.l.b16 %v302
  %v1066 = vunpack.c.l.b16 %v303
  %v1067 = vunpack.c.l.b16 %v304
  %v1068 = vunpack.c.l.b16 %v305
  %v1069 = vunpack.c.l.b16 %v306
  %v1070 = vunpack.c.l.b16 %v307
  %v1071 = vunpack.c.l.b16 %v308
  %v1072 = vunpack.c.l.b16 %v309
  %v1073 = vunpack.c.l.b16 %v310
  %v1074 = vunpack.c.l.b16 %v311
  %v1075 = vunpack.c.l.b16 %v312
  %v1076 = vunpack.c.l.b16 %v313
  %v1077 = vunpack.c.l.b16 %v314
  %v1078 = vunpack.c.l.b16 %v315
  %v1079 = vunpack.c.l.b16 %v316
  %v1080 = vunpack.c.l.b16 %v317
  %v1081 = vunpack.c.l.b16 %v318
  %v1082 = vunpack.c.l.b16 %v319
  %v1083 = vunpack.c.l.b16 %v320
  %v1084 = vunpack.c.l.b16 %v321
  %v1085 = vunpack.c.l.b16 %v322
  %v1086 = vunpack.c.l.b16 %v323
  %v1087 = vunpack.c.l.b16 %v324
  %v1088 = vunpack.c.l.b16 %v325
  %v1089 = vunpack.c.l.b16 %v326
  %v1090 = vunpack.c.l.b16 %v327
  %v1091 = vunpack.c.l.b16 %v328
  %v1092 = vunpack.c.l.b16 %v329
  %v1093 = vunpack.c.l.b16 %v330
  %v1094 = vunpack.c.l.b16 %v331
  %v1095 = vunpack.c.l.b16 %v332
  %v1096 = vunpack.c.l.b16 %v333
  %v1097 = vunpack.c.l.b16 %v334
  %v1098 = vunpack.c.l.b16 %v335
  %v1099 = vunpack.c.l.b16 %v336
  %v1100 = vunpack.c.l.b16 %v337
  %v1101 = vunpack.c.l.b16 %v338
  %v1102 = vpack.c.b16 %v815, %v814
  %v1103 = vpack.c.b16 %v817, %v816
  %v1104 = vpack.c.b16 %v819, %v818
  %v1105 = vpack.c.b16 %v821, %v820
  %v1106 = vpack.c.b16 %v823, %v822
  %v1107 = vpack.c.b16 %v825, %v824
  %v1108 = vpack.c.b16 %v827, %v826
  %v1109 = vpack.c.b16 %v829, %v828
  %v1110 = vpack.c.b16 %v831, %v830
  %v1111 = vpack.c.b16 %v833, %v832
  %v1112 = vpack.c.b16 %v835, %v834
  %v1113 = vpack.c.b16 %v837, %v836
  %v1114 = vpack.c.b16 %v839, %v838
  %v1115 = vpack.c.b16 %v841, %v840
  %v1116 = vpack.c.b16 %v843, %v842
  %v1117 = vpack.c.b16 %v845, %v844
  %v1118 = vpack.c.b16 %v847, %v846
  %v1119 = vpack.c.b16 %v849, %v848
  %v1120 = vpack.c.b16 %v851, %v850
  %v1121 = vpack.c.b16 %v853, %v852
  %v1122 = vpack.c.b16 %v855, %v854
  %v1123 = vpack.c.b16 %v857, %v856
  %v1124 = vpack.c.b16 %v859, %v858
  %v1125 = vpack.c.b16 %v861, %v860
  %v1126 = vpack.c.b16 %v863, %v862
  %v1127 = vpack.c.b16 %v865, %v864
  %v1128 = vpack.c.b16 %v867, %v866
  %v1129 = vpack.c.b16 %v869, %v868
  %v1130 = vpack.c.b16 %v871, %v870
  %v1131 = vpack.c.b16 %v873, %v872
  %v1132 = vpack.c.b16 %v875, %v874
  %v1133 = vpack.c.b16 %v877, %v876
  %v1134 = vpack.c.b16 %v879, %v878
  %v1135 = vpack.c.b16 %v881, %v880
  %v1136 = vpack.c.b16 %v883, %v882
  %v1137 = vpack.c.b16 %v885, %v884
  %v1138 = vpack.c.b16 %v887, %v886
  %v1139 = vpack.c.b16 %v889, %v888
  %v1140 = vpack.c.b16 %v891, %v890
  %v1141 = vpack.c.b16 %v893, %v892
  %v1142 = vpack.c.b16 %v895, %v894
  %v1143 = vpack.c.b16 %v897, %v896
  %v1144 = vpack.c.b16 %v899, %v898
  %v1145 = vpack.c.b16 %v901, %v900
  %v1146 = vpack.c.b16 %v903, %v902
  %v1147 = vpack.c.b16 %v905, %v904
  %v1148 = vpack.c.b16 %v907, %v906
  %v1149 = vpack.c.b16 %v909, %v908
  %v1150 = vpack.c.b16 %v911, %v910
  %v1151 = vpack.c.b16 %v913, %v912
  %v1152 = vpack.c.b16 %v915, %v914
  %v1153 = vpack.c.b16 %v917, %v916
  %v1154 = vpack.c.b16 %v919, %v918
  %v1155 = vpack.c.b16 %v921, %v920
  %v1156 = vpack.c.b16 %v923, %v922
  %v1157 = vpack.c.b16 %v925, %v924
  %v1158 = vpack.c.b16 %v927, %v926
  %v1159 = vpack.c.b16 %v929, %v928
  %v1160 = vpack.c.b16 %v931, %v930
  %v1161 = vpack.c.b16 %v933, %v932
  %v1162 = vpack.c.b16 %v935, %v934
  %v1163 = vpack.c.b16 %v937, %v936
  %v1164 = vpack.c.b16 %v939, %v938
  %v1165 = vpack.c.b16 %v941, %v940
  %v1166 = vpack.c.b16 %v943, %v942
  %v1167 = vpack.c.b16 %v945, %v944
  %v1168 = vpack.c.b16 %v947, %v946
  %v1169 = vpack.c.b16 %v949, %v948
  %v1170 = vpack.c.b16 %v951, %v950
  %v1171 = vpack.c.b16 %v953, %v952
  %v1172 = vpack.c.b16 %v955, %v954
  %v1173 = vpack.c.b16 %v957, %v956
  %v1174 = vpack.c.b16 %v959, %v958
  %v1175 = vpack.c.b16 %v961, %v960
  %v1176 = vpack.c.b16 %v963, %v962
  %v1177 = vpack.c.b16 %v965, %v964
  %v1178 = vpack.c.b16 %v967, %v966
  %v1179 = vpack.c.b16 %v969, %v968
  %v1180 = vpack.c.b16 %v971, %v970
  %v1181 = vpack.c.b16 %v973, %v972
  %v1182 = vpack.c.b16 %v975, %v974
  %v1183 = vpack.c.b16 %v977, %v976
  %v1184 = vpack.c.b16 %v979, %v978
  %v1185 = vpack.c.b16 %v981, %v980
  %v1186 = vpack.c.b16 %v983, %v982
  %v1187 = vpack.c.b16 %v985, %v984
  %v1188 = vpack.c.b16 %v987, %v986
  %v1189 = vpack.c.b16 %v989, %v988
  %v1190 = vpack.c.b16 %v991, %v990
  %v1191 = vpack.c.b16 %v993, %v992
  %v1192 = vpack.c.b16 %v995, %v994
  %v1193 = vpack.c.b16 %v997, %v996
  %v1194 = vpack.c.b16 %v999, %v998
  %v1195 = vpack.c.b16 %v1001, %v1000
  %v1196 = vpack.c.b16 %v1003, %v1002
  %v1197 = vpack.c.b16 %v1005, %v1004
  %v1198 = vpack.c.b16 %v1007, %v1006
  %v1199 = vpack.c.b16 %v1009, %v1008
  %v1200 = vpack.c.b16 %v1011, %v1010
  %v1201 = vpack.c.b16 %v1013, %v1012
  %v1202 = vpack.c.b16 %v1015, %v1014
  %v1203 = vpack.c.b16 %v1017, %v1016
  %v1204 = vpack.c.b16 %v1019, %v1018
  %v1205 = vpack.c.b16 %v1021, %v1020
  %v1206 = vpack.c.b16 %v1023, %v1022
  %v1207 = vpack.c.b16 %v1025, %v1024
  %v1208 = vpack.c.b16 %v1027, %v1026
  %v1209 = vpack.c.b16 %v1029, %v1028
  %v1210 = vpack.c.b16 %v1031, %v1030
  %v1211 = vpack.c.b16 %v1033, %v1032
  %v1212 = vpack.c.b16 %v1035, %v1034
  %v1213 = vpack.c.b16 %v1037, %v1036
  %v1214 = vpack.c.b16 %v1039, %v1038
  %v1215 = vpack.c.b16 %v1041, %v1040
  %v1216 = vpack.c.b16 %v1043, %v1042
  %v1217 = vpack.c.b16 %v1045, %v1044
  %v1218 = vpack.c.b16 %v1047, %v1046
  %v1219 = vpack.c.b16 %v1049, %v1048
  %v1220 = vpack.c.b16 %v1051, %v1050
  %v1221 = vpack.c.b16 %v1053, %v1052
  %v1222 = vpack.c.b16 %v1055, %v1054
  %v1223 = vpack.c.b16 %v1057, %v1056
  %v1224 = vpack.c.b16 %v1059, %v1058
  %v1225 = vpack.c.b16 %v1061, %v1060
  %v1226 = vpack.c.b16 %v1063, %v1062
  %v1227 = vpack.c.b16 %v1065, %v1064
  %v1228 = vpack.c.b16 %v1067, %v1066
  %v1229 = vpack.c.b16 %v1069, %v1068
  %v1230 = vpack.c.b16 %v1071, %v1070
  %v1231 = vpack.c.b16 %v1073, %v1072
  %v1232 = vpack.c.b16 %v1075, %v1074
  %v1233 = vpack.c.b16 %v1077, %v1076
  %v1234 = vpack.c.b16 %v1079, %v1078
  %v1235 = vpack.c.b16 %v1081, %v1080
  %v1236 = vpack.c.b16 %v1083, %v1082
  %v1237 = vpack.c.b16 %v1085, %v1084
  %v1238 = vpack.c.b16 %v1087, %v1086
  %v1239 = vpack.c.b16 %v1089, %v1088
  %v1240 = vpack.c.b16 %v1091, %v1090
  %v1241 = vpack.c.b16 %v1093, %v1092
  %v1242 = vpack.c.b16 %v1095, %v1094
  %v1243 = vpack.c.b16 %v1097, %v1096
  %v1244 = vpack.c.b16 %v1099, %v1098
  %v1245 = vpack.c.b16 %v1101, %v1100
  %1390 = vmatprep.subr.bf16.mxu0 0
  %1391 = vmatpush1.bf16.msra.mxu0 %v1102
  %1392 = vmatprep.subr.bf16.mxu0 0
  %1393 = vmatpush1.bf16.msra.mxu0 %v1103
  %1394 = vmatprep.subr.bf16.mxu0 0
  %1395 = vmatpush1.bf16.msra.mxu0 %v1104
  %1396 = vmatprep.subr.bf16.mxu0 0
  %1397 = vmatpush1.bf16.msra.mxu0 %v1105
  %1398 = vmatprep.subr.bf16.mxu0 0
  %1399 = vmatpush1.bf16.msra.mxu0 %v1106
  %1400 = vmatprep.subr.bf16.mxu0 0
  %1401 = vmatpush1.bf16.msra.mxu0 %v1107
  %1402 = vmatprep.subr.bf16.mxu0 0
  %1403 = vmatpush1.bf16.msra.mxu0 %v1108
  %1404 = vmatprep.subr.bf16.mxu0 0
  %1405 = vmatpush1.bf16.msra.mxu0 %v1109
  %1406 = vmatprep.subr.bf16.mxu0 0
  %1407 = vmatpush1.bf16.msra.mxu0 %v1110
  %1408 = vmatprep.subr.bf16.mxu0 0
  %1409 = vmatpush1.bf16.msra.mxu0 %v1111
  %1410 = vmatprep.subr.bf16.mxu0 0
  %1411 = vmatpush1.bf16.msra.mxu0 %v1112
  %1412 = vmatprep.subr.bf16.mxu0 0
  %1413 = vmatpush1.bf16.msra.mxu0 %v1113
  %1414 = vmatprep.subr.bf16.mxu0 0
  %1415 = vmatpush1.bf16.msra.mxu0 %v1114
  %1416 = vmatprep.subr.bf16.mxu0 0
  %1417 = vmatpush1.bf16.msra.mxu0 %v1115
  %1418 = vmatprep.subr.bf16.mxu0 0
  %1419 = vmatpush1.bf16.msra.mxu0 %v1116
  %1420 = vmatprep.subr.bf16.mxu0 0
  %1421 = vmatpush1.bf16.msra.mxu0 %v1117
  %1422 = vmatprep.mubr.bf16.mxu0 %v455
  %1423 = vmatmul.mubr.bf16.gmra.mrb[0].mxu0 %v454
  %v1424 = vpop.f32.mrb[0].mxu0
  %v1425 = vadd.f32 %v344, %v1424
  %v1426 = vpop.f32.mrb[0].mxu0
  %v1427 = vpop.f32.mrb[0].mxu0
  %v1428 = vadd.f32 %v344, %v1427
  %v1429 = vpop.f32.mrb[0].mxu0
  %1430 = vmatprep.mubr.bf16.mxu0 %v473
  %1431 = vmatmul.mubr.bf16.gmra.mrb[0].mxu0 %v472
  %v1432 = vpop.f32.mrb[0].mxu0
  %v1433 = vadd.f32 %v344, %v1432
  %v1434 = vpop.f32.mrb[0].mxu0
  %v1435 = vpop.f32.mrb[0].mxu0
  %v1436 = vadd.f32 %v344, %v1435
  %v1437 = vpop.f32.mrb[0].mxu0
  %1438 = vdwg.mxu0
  %1439 = vmatprep.subr.bf16.mxu0 0
  %1440 = vmatpush1.bf16.msra.mxu0 %v1118
  %1441 = vmatprep.subr.bf16.mxu0 0
  %1442 = vmatpush1.bf16.msra.mxu0 %v1119
  %1443 = vmatprep.subr.bf16.mxu0 0
  %1444 = vmatpush1.bf16.msra.mxu0 %v1120
  %1445 = vmatprep.subr.bf16.mxu0 0
  %1446 = vmatpush1.bf16.msra.mxu0 %v1121
  %1447 = vmatprep.subr.bf16.mxu0 0
  %1448 = vmatpush1.bf16.msra.mxu0 %v1122
  %1449 = vmatprep.subr.bf16.mxu0 0
  %1450 = vmatpush1.bf16.msra.mxu0 %v1123
  %1451 = vmatprep.subr.bf16.mxu0 0
  %1452 = vmatpush1.bf16.msra.mxu0 %v1124
  %1453 = vmatprep.subr.bf16.mxu0 0
  %1454 = vmatpush1.bf16.msra.mxu0 %v1125
  %1455 = vmatprep.subr.bf16.mxu0 0
  %1456 = vmatpush1.bf16.msra.mxu0 %v1126
  %1457 = vmatprep.subr.bf16.mxu0 0
  %1458 = vmatpush1.bf16.msra.mxu0 %v1127
  %1459 = vmatprep.subr.bf16.mxu0 0
  %1460 = vmatpush1.bf16.msra.mxu0 %v1128
  %1461 = vmatprep.subr.bf16.mxu0 0
  %1462 = vmatpush1.bf16.msra.mxu0 %v1129
  %1463 = vmatprep.subr.bf16.mxu0 0
  %1464 = vmatpush1.bf16.msra.mxu0 %v1130
  %1465 = vmatprep.subr.bf16.mxu0 0
  %1466 = vmatpush1.bf16.msra.mxu0 %v1131
  %1467 = vmatprep.subr.bf16.mxu0 0
  %1468 = vmatpush1.bf16.msra.mxu0 %v1132
  %1469 = vmatprep.subr.bf16.mxu0 0
  %1470 = vmatpush1.bf16.msra.mxu0 %v1133
  %1471 = vmatprep.mubr.bf16.mxu0 %v457
  %1472 = vmatmul.mubr.bf16.gmra.mrb[0].mxu0 %v456
  %v1473 = vpop.f32.mrb[0].mxu0
  %v1474 = vadd.f32 %v1425, %v1473
  %v1475 = vpop.f32.mrb[0].mxu0
  %v1476 = vpop.f32.mrb[0].mxu0
  %v1477 = vadd.f32 %v1428, %v1476
  %v1478 = vpop.f32.mrb[0].mxu0
  %1479 = vmatprep.mubr.bf16.mxu0 %v475
  %1480 = vmatmul.mubr.bf16.gmra.mrb[0].mxu0 %v474
  %v1481 = vpop.f32.mrb[0].mxu0
  %v1482 = vadd.f32 %v1433, %v1481
  %v1483 = vpop.f32.mrb[0].mxu0
  %v1484 = vpop.f32.mrb[0].mxu0
  %v1485 = vadd.f32 %v1436, %v1484
  %v1486 = vpop.f32.mrb[0].mxu0
  %1487 = vdwg.mxu0
  %1488 = vmatprep.subr.bf16.mxu0 0
  %1489 = vmatpush1.bf16.msra.mxu0 %v1134
  %1490 = vmatprep.subr.bf16.mxu0 0
  %1491 = vmatpush1.bf16.msra.mxu0 %v1135
  %1492 = vmatprep.subr.bf16.mxu0 0
  %1493 = vmatpush1.bf16.msra.mxu0 %v1136
  %1494 = vmatprep.subr.bf16.mxu0 0
  %1495 = vmatpush1.bf16.msra.mxu0 %v1137
  %1496 = vmatprep.subr.bf16.mxu0 0
  %1497 = vmatpush1.bf16.msra.mxu0 %v1138
  %1498 = vmatprep.subr.bf16.mxu0 0
  %1499 = vmatpush1.bf16.msra.mxu0 %v1139
  %1500 = vmatprep.subr.bf16.mxu0 0
  %1501 = vmatpush1.bf16.msra.mxu0 %v1140
  %1502 = vmatprep.subr.bf16.mxu0 0
  %1503 = vmatpush1.bf16.msra.mxu0 %v1141
  %1504 = vmatprep.subr.bf16.mxu0 0
  %1505 = vmatpush1.bf16.msra.mxu0 %v1142
  %1506 = vmatprep.subr.bf16.mxu0 0
  %1507 = vmatpush1.bf16.msra.mxu0 %v1143
  %1508 = vmatprep.subr.bf16.mxu0 0
  %1509 = vmatpush1.bf16.msra.mxu0 %v1144
  %1510 = vmatprep.subr.bf16.mxu0 0
  %1511 = vmatpush1.bf16.msra.mxu0 %v1145
  %1512 = vmatprep.subr.bf16.mxu0 0
  %1513 = vmatpush1.bf16.msra.mxu0 %v1146
  %1514 = vmatprep.subr.bf16.mxu0 0
  %1515 = vmatpush1.bf16.msra.mxu0 %v1147
  %1516 = vmatprep.subr.bf16.mxu0 0
  %1517 = vmatpush1.bf16.msra.mxu0 %v1148
  %1518 = vmatprep.subr.bf16.mxu0 0
  %1519 = vmatpush1.bf16.msra.mxu0 %v1149
  %1520 = vmatprep.mubr.bf16.mxu0 %v459
  %1521 = vmatmul.mubr.bf16.gmra.mrb[0].mxu0 %v458
  %v1522 = vpop.f32.mrb[0].mxu0
  %v1523 = vadd.f32 %v1474, %v1522
  %v1524 = vpop.f32.mrb[0].mxu0
  %v1525 = vpop.f32.mrb[0].mxu0
  %v1526 = vadd.f32 %v1477, %v1525
  %v1527 = vpop.f32.mrb[0].mxu0
  %1528 = vmatprep.mubr.bf16.mxu0 %v477
  %1529 = vmatmul.mubr.bf16.gmra.mrb[0].mxu0 %v476
  %v1530 = vpop.f32.mrb[0].mxu0
  %v1531 = vadd.f32 %v1482, %v1530
  %v1532 = vpop.f32.mrb[0].mxu0
  %v1533 = vpop.f32.mrb[0].mxu0
  %v1534 = vadd.f32 %v1485, %v1533
  %v1535 = vpop.f32.mrb[0].mxu0
  %1536 = vdwg.mxu0
  %1537 = vmatprep.subr.bf16.mxu0 0
  %1538 = vmatpush1.bf16.msra.mxu0 %v1150
  %1539 = vmatprep.subr.bf16.mxu0 0
  %1540 = vmatpush1.bf16.msra.mxu0 %v1151
  %1541 = vmatprep.subr.bf16.mxu0 0
  %1542 = vmatpush1.bf16.msra.mxu0 %v1152
  %1543 = vmatprep.subr.bf16.mxu0 0
  %1544 = vmatpush1.bf16.msra.mxu0 %v1153
  %1545 = vmatprep.subr.bf16.mxu0 0
  %1546 = vmatpush1.bf16.msra.mxu0 %v1154
  %1547 = vmatprep.subr.bf16.mxu0 0
  %1548 = vmatpush1.bf16.msra.mxu0 %v1155
  %1549 = vmatprep.subr.bf16.mxu0 0
  %1550 = vmatpush1.bf16.msra.mxu0 %v1156
  %1551 = vmatprep.subr.bf16.mxu0 0
  %1552 = vmatpush1.bf16.msra.mxu0 %v1157
  %1553 = vmatprep.subr.bf16.mxu0 0
  %1554 = vmatpush1.bf16.msra.mxu0 %v1158
  %1555 = vmatprep.subr.bf16.mxu0 0
  %1556 = vmatpush1.bf16.msra.mxu0 %v1159
  %1557 = vmatprep.subr.bf16.mxu0 0
  %1558 = vmatpush1.bf16.msra.mxu0 %v1160
  %1559 = vmatprep.subr.bf16.mxu0 0
  %1560 = vmatpush1.bf16.msra.mxu0 %v1161
  %1561 = vmatprep.subr.bf16.mxu0 0
  %1562 = vmatpush1.bf16.msra.mxu0 %v1162
  %1563 = vmatprep.subr.bf16.mxu0 0
  %1564 = vmatpush1.bf16.msra.mxu0 %v1163
  %1565 = vmatprep.subr.bf16.mxu0 0
  %1566 = vmatpush1.bf16.msra.mxu0 %v1164
  %1567 = vmatprep.subr.bf16.mxu0 0
  %1568 = vmatpush1.bf16.msra.mxu0 %v1165
  %1569 = vmatprep.mubr.bf16.mxu0 %v461
  %1570 = vmatmul.mubr.bf16.gmra.mrb[0].mxu0 %v460
  %v1571 = vpop.f32.mrb[0].mxu0
  %v1572 = vadd.f32 %v1523, %v1571
  %v1573 = vpop.f32.mrb[0].mxu0
  %v1574 = vpop.f32.mrb[0].mxu0
  %v1575 = vadd.f32 %v1526, %v1574
  %v1576 = vpop.f32.mrb[0].mxu0
  %1577 = vmatprep.mubr.bf16.mxu0 %v479
  %1578 = vmatmul.mubr.bf16.gmra.mrb[0].mxu0 %v478
  %v1579 = vpop.f32.mrb[0].mxu0
  %v1580 = vadd.f32 %v1531, %v1579
  %v1581 = vpop.f32.mrb[0].mxu0
  %v1582 = vpop.f32.mrb[0].mxu0
  %v1583 = vadd.f32 %v1534, %v1582
  %v1584 = vpop.f32.mrb[0].mxu0
  %1585 = vdwg.mxu0
  %1586 = vmatprep.subr.bf16.mxu0 0
  %1587 = vmatpush1.bf16.msra.mxu0 %v1166
  %1588 = vmatprep.subr.bf16.mxu0 0
  %1589 = vmatpush1.bf16.msra.mxu0 %v1167
  %1590 = vmatprep.subr.bf16.mxu0 0
  %1591 = vmatpush1.bf16.msra.mxu0 %v1168
  %1592 = vmatprep.subr.bf16.mxu0 0
  %1593 = vmatpush1.bf16.msra.mxu0 %v1169
  %1594 = vmatprep.subr.bf16.mxu0 0
  %1595 = vmatpush1.bf16.msra.mxu0 %v1170
  %1596 = vmatprep.subr.bf16.mxu0 0
  %1597 = vmatpush1.bf16.msra.mxu0 %v1171
  %1598 = vmatprep.subr.bf16.mxu0 0
  %1599 = vmatpush1.bf16.msra.mxu0 %v1172
  %1600 = vmatprep.subr.bf16.mxu0 0
  %1601 = vmatpush1.bf16.msra.mxu0 %v1173
  %1602 = vmatprep.subr.bf16.mxu0 0
  %1603 = vmatpush1.bf16.msra.mxu0 %v1174
  %1604 = vmatprep.subr.bf16.mxu0 0
  %1605 = vmatpush1.bf16.msra.mxu0 %v1175
  %1606 = vmatprep.subr.bf16.mxu0 0
  %1607 = vmatpush1.bf16.msra.mxu0 %v1176
  %1608 = vmatprep.subr.bf16.mxu0 0
  %1609 = vmatpush1.bf16.msra.mxu0 %v1177
  %1610 = vmatprep.subr.bf16.mxu0 0
  %1611 = vmatpush1.bf16.msra.mxu0 %v1178
  %1612 = vmatprep.subr.bf16.mxu0 0
  %1613 = vmatpush1.bf16.msra.mxu0 %v1179
  %1614 = vmatprep.subr.bf16.mxu0 0
  %1615 = vmatpush1.bf16.msra.mxu0 %v1180
  %1616 = vmatprep.subr.bf16.mxu0 0
  %1617 = vmatpush1.bf16.msra.mxu0 %v1181
  %1618 = vmatprep.mubr.bf16.mxu0 %v463
  %1619 = vmatmul.mubr.bf16.gmra.mrb[0].mxu0 %v462
  %v1620 = vpop.f32.mrb[0].mxu0
  %v1621 = vadd.f32 %v1572, %v1620
  %v1622 = vpop.f32.mrb[0].mxu0
  %v1623 = vpop.f32.mrb[0].mxu0
  %v1624 = vadd.f32 %v1575, %v1623
  %v1625 = vpop.f32.mrb[0].mxu0
  %1626 = vmatprep.mubr.bf16.mxu0 %v481
  %1627 = vmatmul.mubr.bf16.gmra.mrb[0].mxu0 %v480
  %v1628 = vpop.f32.mrb[0].mxu0
  %v1629 = vadd.f32 %v1580, %v1628
  %v1630 = vpop.f32.mrb[0].mxu0
  %v1631 = vpop.f32.mrb[0].mxu0
  %v1632 = vadd.f32 %v1583, %v1631
  %v1633 = vpop.f32.mrb[0].mxu0
  %1634 = vdwg.mxu0
  %1635 = vmatprep.subr.bf16.mxu0 0
  %1636 = vmatpush1.bf16.msra.mxu0 %v1182
  %1637 = vmatprep.subr.bf16.mxu0 0
  %1638 = vmatpush1.bf16.msra.mxu0 %v1183
  %1639 = vmatprep.subr.bf16.mxu0 0
  %1640 = vmatpush1.bf16.msra.mxu0 %v1184
  %1641 = vmatprep.subr.bf16.mxu0 0
  %1642 = vmatpush1.bf16.msra.mxu0 %v1185
  %1643 = vmatprep.subr.bf16.mxu0 0
  %1644 = vmatpush1.bf16.msra.mxu0 %v1186
  %1645 = vmatprep.subr.bf16.mxu0 0
  %1646 = vmatpush1.bf16.msra.mxu0 %v1187
  %1647 = vmatprep.subr.bf16.mxu0 0
  %1648 = vmatpush1.bf16.msra.mxu0 %v1188
  %1649 = vmatprep.subr.bf16.mxu0 0
  %1650 = vmatpush1.bf16.msra.mxu0 %v1189
  %1651 = vmatprep.subr.bf16.mxu0 0
  %1652 = vmatpush1.bf16.msra.mxu0 %v1190
  %1653 = vmatprep.subr.bf16.mxu0 0
  %1654 = vmatpush1.bf16.msra.mxu0 %v1191
  %1655 = vmatprep.subr.bf16.mxu0 0
  %1656 = vmatpush1.bf16.msra.mxu0 %v1192
  %1657 = vmatprep.subr.bf16.mxu0 0
  %1658 = vmatpush1.bf16.msra.mxu0 %v1193
  %1659 = vmatprep.subr.bf16.mxu0 0
  %1660 = vmatpush1.bf16.msra.mxu0 %v1194
  %1661 = vmatprep.subr.bf16.mxu0 0
  %1662 = vmatpush1.bf16.msra.mxu0 %v1195
  %1663 = vmatprep.subr.bf16.mxu0 0
  %1664 = vmatpush1.bf16.msra.mxu0 %v1196
  %1665 = vmatprep.subr.bf16.mxu0 0
  %1666 = vmatpush1.bf16.msra.mxu0 %v1197
  %1667 = vmatprep.mubr.bf16.mxu0 %v465
  %1668 = vmatmul.mubr.bf16.gmra.mrb[0].mxu0 %v464
  %v1669 = vpop.f32.mrb[0].mxu0
  %v1670 = vadd.f32 %v1621, %v1669
  %v1671 = vpop.f32.mrb[0].mxu0
  %v1672 = vpop.f32.mrb[0].mxu0
  %v1673 = vadd.f32 %v1624, %v1672
  %v1674 = vpop.f32.mrb[0].mxu0
  %1675 = vmatprep.mubr.bf16.mxu0 %v483
  %1676 = vmatmul.mubr.bf16.gmra.mrb[0].mxu0 %v482
  %v1677 = vpop.f32.mrb[0].mxu0
  %v1678 = vadd.f32 %v1629, %v1677
  %v1679 = vpop.f32.mrb[0].mxu0
  %v1680 = vpop.f32.mrb[0].mxu0
  %v1681 = vadd.f32 %v1632, %v1680
  %v1682 = vpop.f32.mrb[0].mxu0
  %1683 = vdwg.mxu0
  %1684 = vmatprep.subr.bf16.mxu0 0
  %1685 = vmatpush1.bf16.msra.mxu0 %v1198
  %1686 = vmatprep.subr.bf16.mxu0 0
  %1687 = vmatpush1.bf16.msra.mxu0 %v1199
  %1688 = vmatprep.subr.bf16.mxu0 0
  %1689 = vmatpush1.bf16.msra.mxu0 %v1200
  %1690 = vmatprep.subr.bf16.mxu0 0
  %1691 = vmatpush1.bf16.msra.mxu0 %v1201
  %1692 = vmatprep.subr.bf16.mxu0 0
  %1693 = vmatpush1.bf16.msra.mxu0 %v1202
  %1694 = vmatprep.subr.bf16.mxu0 0
  %1695 = vmatpush1.bf16.msra.mxu0 %v1203
  %1696 = vmatprep.subr.bf16.mxu0 0
  %1697 = vmatpush1.bf16.msra.mxu0 %v1204
  %1698 = vmatprep.subr.bf16.mxu0 0
  %1699 = vmatpush1.bf16.msra.mxu0 %v1205
  %1700 = vmatprep.subr.bf16.mxu0 0
  %1701 = vmatpush1.bf16.msra.mxu0 %v1206
  %1702 = vmatprep.subr.bf16.mxu0 0
  %1703 = vmatpush1.bf16.msra.mxu0 %v1207
  %1704 = vmatprep.subr.bf16.mxu0 0
  %1705 = vmatpush1.bf16.msra.mxu0 %v1208
  %1706 = vmatprep.subr.bf16.mxu0 0
  %1707 = vmatpush1.bf16.msra.mxu0 %v1209
  %1708 = vmatprep.subr.bf16.mxu0 0
  %1709 = vmatpush1.bf16.msra.mxu0 %v1210
  %1710 = vmatprep.subr.bf16.mxu0 0
  %1711 = vmatpush1.bf16.msra.mxu0 %v1211
  %1712 = vmatprep.subr.bf16.mxu0 0
  %1713 = vmatpush1.bf16.msra.mxu0 %v1212
  %1714 = vmatprep.subr.bf16.mxu0 0
  %1715 = vmatpush1.bf16.msra.mxu0 %v1213
  %1716 = vmatprep.mubr.bf16.mxu0 %v467
  %1717 = vmatmul.mubr.bf16.gmra.mrb[0].mxu0 %v466
  %v1718 = vpop.f32.mrb[0].mxu0
  %v1719 = vadd.f32 %v1670, %v1718
  %v1720 = vpop.f32.mrb[0].mxu0
  %v1721 = vpop.f32.mrb[0].mxu0
  %v1722 = vadd.f32 %v1673, %v1721
  %v1723 = vpop.f32.mrb[0].mxu0
  %1724 = vmatprep.mubr.bf16.mxu0 %v485
  %1725 = vmatmul.mubr.bf16.gmra.mrb[0].mxu0 %v484
  %v1726 = vpop.f32.mrb[0].mxu0
  %v1727 = vadd.f32 %v1678, %v1726
  %v1728 = vpop.f32.mrb[0].mxu0
  %v1729 = vpop.f32.mrb[0].mxu0
  %v1730 = vadd.f32 %v1681, %v1729
  %v1731 = vpop.f32.mrb[0].mxu0
  %1732 = vdwg.mxu0
  %1733 = vmatprep.subr.bf16.mxu0 0
  %1734 = vmatpush1.bf16.msra.mxu0 %v1214
  %1735 = vmatprep.subr.bf16.mxu0 0
  %1736 = vmatpush1.bf16.msra.mxu0 %v1215
  %1737 = vmatprep.subr.bf16.mxu0 0
  %1738 = vmatpush1.bf16.msra.mxu0 %v1216
  %1739 = vmatprep.subr.bf16.mxu0 0
  %1740 = vmatpush1.bf16.msra.mxu0 %v1217
  %1741 = vmatprep.subr.bf16.mxu0 0
  %1742 = vmatpush1.bf16.msra.mxu0 %v1218
  %1743 = vmatprep.subr.bf16.mxu0 0
  %1744 = vmatpush1.bf16.msra.mxu0 %v1219
  %1745 = vmatprep.subr.bf16.mxu0 0
  %1746 = vmatpush1.bf16.msra.mxu0 %v1220
  %1747 = vmatprep.subr.bf16.mxu0 0
  %1748 = vmatpush1.bf16.msra.mxu0 %v1221
  %1749 = vmatprep.subr.bf16.mxu0 0
  %1750 = vmatpush1.bf16.msra.mxu0 %v1222
  %1751 = vmatprep.subr.bf16.mxu0 0
  %1752 = vmatpush1.bf16.msra.mxu0 %v1223
  %1753 = vmatprep.subr.bf16.mxu0 0
  %1754 = vmatpush1.bf16.msra.mxu0 %v1224
  %1755 = vmatprep.subr.bf16.mxu0 0
  %1756 = vmatpush1.bf16.msra.mxu0 %v1225
  %1757 = vmatprep.subr.bf16.mxu0 0
  %1758 = vmatpush1.bf16.msra.mxu0 %v1226
  %1759 = vmatprep.subr.bf16.mxu0 0
  %1760 = vmatpush1.bf16.msra.mxu0 %v1227
  %1761 = vmatprep.subr.bf16.mxu0 0
  %1762 = vmatpush1.bf16.msra.mxu0 %v1228
  %1763 = vmatprep.subr.bf16.mxu0 0
  %1764 = vmatpush1.bf16.msra.mxu0 %v1229
  %1765 = vmatprep.mubr.bf16.mxu0 %v469
  %1766 = vmatmul.mubr.bf16.gmra.mrb[0].mxu0 %v468
  %v1767 = vpop.f32.mrb[0].mxu0
  %v1768 = vadd.f32 %v1719, %v1767
  %v1769 = vpop.f32.mrb[0].mxu0
  %v1770 = vpop.f32.mrb[0].mxu0
  %v1771 = vadd.f32 %v1722, %v1770
  %v1772 = vpop.f32.mrb[0].mxu0
  %1773 = vmatprep.mubr.bf16.mxu0 %v487
  %1774 = vmatmul.mubr.bf16.gmra.mrb[0].mxu0 %v486
  %v1775 = vpop.f32.mrb[0].mxu0
  %v1776 = vadd.f32 %v1727, %v1775
  %v1777 = vpop.f32.mrb[0].mxu0
  %v1778 = vpop.f32.mrb[0].mxu0
  %v1779 = vadd.f32 %v1730, %v1778
  %v1780 = vpop.f32.mrb[0].mxu0
  %1781 = vdwg.mxu0
  %1782 = vmatprep.subr.bf16.mxu0 0
  %1783 = vmatpush1.bf16.msra.mxu0 %v1230
  %1784 = vmatprep.subr.bf16.mxu0 0
  %1785 = vmatpush1.bf16.msra.mxu0 %v1231
  %1786 = vmatprep.subr.bf16.mxu0 0
  %1787 = vmatpush1.bf16.msra.mxu0 %v1232
  %1788 = vmatprep.subr.bf16.mxu0 0
  %1789 = vmatpush1.bf16.msra.mxu0 %v1233
  %1790 = vmatprep.subr.bf16.mxu0 0
  %1791 = vmatpush1.bf16.msra.mxu0 %v1234
  %1792 = vmatprep.subr.bf16.mxu0 0
  %1793 = vmatpush1.bf16.msra.mxu0 %v1235
  %1794 = vmatprep.subr.bf16.mxu0 0
  %1795 = vmatpush1.bf16.msra.mxu0 %v1236
  %1796 = vmatprep.subr.bf16.mxu0 0
  %1797 = vmatpush1.bf16.msra.mxu0 %v1237
  %1798 = vmatprep.subr.bf16.mxu0 0
  %1799 = vmatpush1.bf16.msra.mxu0 %v1238
  %1800 = vmatprep.subr.bf16.mxu0 0
  %1801 = vmatpush1.bf16.msra.mxu0 %v1239
  %1802 = vmatprep.subr.bf16.mxu0 0
  %1803 = vmatpush1.bf16.msra.mxu0 %v1240
  %1804 = vmatprep.subr.bf16.mxu0 0
  %1805 = vmatpush1.bf16.msra.mxu0 %v1241
  %1806 = vmatprep.subr.bf16.mxu0 0
  %1807 = vmatpush1.bf16.msra.mxu0 %v1242
  %1808 = vmatprep.subr.bf16.mxu0 0
  %1809 = vmatpush1.bf16.msra.mxu0 %v1243
  %1810 = vmatprep.subr.bf16.mxu0 0
  %1811 = vmatpush1.bf16.msra.mxu0 %v1244
  %1812 = vmatprep.subr.bf16.mxu0 0
  %1813 = vmatpush1.bf16.msra.mxu0 %v1245
  %1814 = vmatprep.mubr.bf16.mxu0 %v471
  %1815 = vmatmul.mubr.bf16.gmra.mrb[0].mxu0 %v470
  %v1816 = vpop.f32.mrb[0].mxu0
  %v1817 = vadd.f32 %v1768, %v1816
  %v1818 = vpop.f32.mrb[0].mxu0
  %v1819 = vpop.f32.mrb[0].mxu0
  %v1820 = vadd.f32 %v1771, %v1819
  %v1821 = vpop.f32.mrb[0].mxu0
  %1822 = vmatprep.mubr.bf16.mxu0 %v489
  %1823 = vmatmul.mubr.bf16.gmra.mrb[0].mxu0 %v488
  %v1824 = vpop.f32.mrb[0].mxu0
  %v1825 = vadd.f32 %v1776, %v1824
  %v1826 = vpop.f32.mrb[0].mxu0
  %v1827 = vpop.f32.mrb[0].mxu0
  %v1828 = vadd.f32 %v1779, %v1827
  %v1829 = vpop.f32.mrb[0].mxu0
  %1830 = vdwg.mxu0
  %v1831 = vmax.f32 %v1817, 0.0
  %v1832 = vmax.f32 %v1820, 0.0
  %v1833 = vmax.f32 %v1825, 0.0
  %v1834 = vmax.f32 %v1828, 0.0
  %1835 = vst [vmem:[%s3] sm:$0xff] %v1831
  %1836 = vst [vmem:[%s3 + $0x8] sm:$0xff] %v1832
  %1837 = vst [vmem:[%s3 + $0x10] sm:$0xff] %v1833
  %1838 = vst [vmem:[%s3 + $0x18] sm:$0xff] %v1834
  // Predicated region
  $region14: #{conv_ae_lstm_forward.5} parent=0 // pred_check
    _
  $region15: #{conv_ae_lstm_forward.5} parent=0 // pred_check_branch
    %1840 = sbr.rel (0) target = $region17
  $region16: #{conv_ae_lstm_forward.5} parent=0 // pred_region
    _
  $region17: #{conv_ae_lstm_forward.5} parent=0 // pred_fallthru
    _
  // Predicated region
  $region18: #{conv_ae_lstm_forward.5} parent=0 // pred_check
    _
  $region19: #{conv_ae_lstm_forward.5} parent=0 // pred_check_branch
    %1842 = sbr.rel (0) target = $region21
  $region20: #{conv_ae_lstm_forward.5} parent=0 // pred_region
    _
  $region21: #{conv_ae_lstm_forward.5} parent=0 // pred_fallthru
    _

// kernel: tile.13
$region0: #{tile.13}
  #allocation0 [shape = 's32[1]{0}', space=sflag, size = 0x4, scoped, tag = 'scoped memory for tile.13']
  %s0 = inlined_call_operand.vmem [shape: f32[64], index: 0, kind: input, shape index: {}]
  %s1 = inlined_call_operand.vmem [shape: f32[4,64], index: 1, kind: output, shape index: {}]
  // Predicated region
  $region2: #{tile.13} parent=0 // pred_check
    _
  $region3: #{tile.13} parent=0 // pred_check_branch
    %3 = sbr.rel (0) target = $region5
  $region4: #{tile.13} parent=0 // pred_region
    _
  $region5: #{tile.13} parent=0 // pred_fallthru
    _
  %v4 = vld [vmem:[%s0] ss:$0 sm:$0xff]
  %5 = vst [vmem:[%s1] sm:$0xf] %v4

// kernel: tile.14
$region0: #{tile.14}
  %s0 = inlined_call_operand.vmem [shape: f32[4,64], index: 0, kind: input, shape index: {}]
  %s1 = inlined_call_operand.vmem [shape: f32[1,256], index: 1, kind: output, shape index: {}]
  $region1: #{tile.14} parent=0
    #allocation0 [shape = 'u8[8192]{0}', space=vmem, size = 0x2000, scoped, tag = 'scoped mem for output reshape']
    #allocation1 [shape = 'u8[4096]{0}', space=vmem, size = 0x1000, scoped, tag = 'scoped mem for input reshape']
    %s3 = sshllo.u32 0, 4
    %v4 = vld [vmem:[%s0] sm:%s3]
    %5 = vst [vmem:[#allocation1] sm:%s3] %v4
    %s6 = smov 3
    %v7 = vld [vmem:[#allocation1] ss:$2 sm:%s6]
    %vm8 = vcmask 523264
    %9 = vst.msk [vmem:[#allocation0] ss:$8 sm:$0x3] %vm8, %v7
    %s10 = scalar_lea.vmem [#allocation1], 1
    %s11 = smov 3
    %v12 = vld [vmem:[%s10] ss:$2 sm:%s11]
    %13 = vrot.lane.b32.xlu0 %v12, 64
    %v14 = vpop.permute.xlu0 %13
    %vm15 = vcmask 1048064
    %16 = vst.msk [vmem:[#allocation0] ss:$8 sm:$0x3] %vm15, %v14
    %s18 = sshllo.u32 0, 1
    %v20 = vld [vmem:[#allocation0] sm:%s18]
    %s21 = sshllo.u32 0, 1
    %22 = vst [vmem:[%s1] sm:%s21] %v20
    %s23 = scalar_lea.vmem [#allocation0], 8
    %v24 = vld [vmem:[%s23] sm:%s18]
    %s25 = sshllo.u32 0, 1
    %s26 = scalar_lea.vmem %s1, 1
    %27 = vst [vmem:[%s26] sm:%s25] %v24

// kernel: conv_ae_lstm_forward.6
$region0: #{conv_ae_lstm_forward.6}
  #allocation0 [shape = 'u32[]', space=smem, size = 0x4, offset = 0x4, fixed_abs, tag = 'smem constant byte address 0x4 - core index']
  #allocation1 [shape = 'u32[144,128]{1,0:T(1,128)}', space=vmem, size = 0x12000, scoped, tag = 'internal scratch']
  %s0 = inlined_call_operand.vmem [shape: bf16[72,1152], index: 0, kind: input, shape index: {}]
  %s1 = inlined_call_operand.vmem [shape: bf16[1152,256], index: 1, kind: input, shape index: {}]
  %s2 = inlined_call_operand.vmem [shape: f32[1,256], index: 2, kind: input, shape index: {}]
  %s3 = inlined_call_operand.vmem [shape: f32[72,256], index: 3, kind: output, shape index: {}]
  %s4 = sld [smem:[#allocation0]]
  $region22: #{conv_ae_lstm_forward.6} parent=0
    _
  %s6 = ssub.s32 1, %s4
  %s7 = scalar_select 0, %s6, %s4
  // Predicated region
  $region2: #{conv_ae_lstm_forward.6} parent=0 // pred_check
    _
  $region3: #{conv_ae_lstm_forward.6} parent=0 // pred_check_branch
    %9 = sbr.rel (0) target = $region5
  $region4: #{conv_ae_lstm_forward.6} parent=0 // pred_region
    _
  $region5: #{conv_ae_lstm_forward.6} parent=0 // pred_fallthru
    _
  // Predicated region
  $region6: #{conv_ae_lstm_forward.6} parent=0 // pred_check
    _
  $region7: #{conv_ae_lstm_forward.6} parent=0 // pred_check_branch
    %11 = sbr.rel (0) target = $region9
  $region8: #{conv_ae_lstm_forward.6} parent=0 // pred_region
    _
  $region9: #{conv_ae_lstm_forward.6} parent=0 // pred_fallthru
    _
  // Predicated region
  $region10: #{conv_ae_lstm_forward.6} parent=0 // pred_check
    _
  $region11: #{conv_ae_lstm_forward.6} parent=0 // pred_check_branch
    %13 = sbr.rel (0) target = $region13
  $region12: #{conv_ae_lstm_forward.6} parent=0 // pred_region
    _
  $region13: #{conv_ae_lstm_forward.6} parent=0 // pred_fallthru
    _
  %v15 = vld [vmem:[%s0] sm:$0xff]
  %v16 = vld [vmem:[%s0 + $0x8] sm:$0xff]
  %v17 = vld [vmem:[%s0 + $0x10] sm:$0xff]
  %v18 = vld [vmem:[%s0 + $0x18] sm:$0xff]
  %v19 = vld [vmem:[%s0 + $0x20] sm:$0xf]
  %v20 = vld [vmem:[%s0 + $0x24] sm:$0xff]
  %v21 = vld [vmem:[%s0 + $0x2c] sm:$0xff]
  %v22 = vld [vmem:[%s0 + $0x34] sm:$0xff]
  %v23 = vld [vmem:[%s0 + $0x3c] sm:$0xff]
  %v24 = vld [vmem:[%s0 + $0x44] sm:$0xf]
  %v25 = vld [vmem:[%s0 + $0x48] sm:$0xff]
  %v26 = vld [vmem:[%s0 + $0x50] sm:$0xff]
  %v27 = vld [vmem:[%s0 + $0x58] sm:$0xff]
  %v28 = vld [vmem:[%s0 + $0x60] sm:$0xff]
  %v29 = vld [vmem:[%s0 + $0x68] sm:$0xf]
  %v30 = vld [vmem:[%s0 + $0x6c] sm:$0xff]
  %v31 = vld [vmem:[%s0 + $0x74] sm:$0xff]
  %v32 = vld [vmem:[%s0 + $0x7c] sm:$0xff]
  %v33 = vld [vmem:[%s0 + $0x84] sm:$0xff]
  %v34 = vld [vmem:[%s0 + $0x8c] sm:$0xf]
  %v35 = vld [vmem:[%s0 + $0x90] sm:$0xff]
  %v36 = vld [vmem:[%s0 + $0x98] sm:$0xff]
  %v37 = vld [vmem:[%s0 + $0xa0] sm:$0xff]
  %v38 = vld [vmem:[%s0 + $0xa8] sm:$0xff]
  %v39 = vld [vmem:[%s0 + $0xb0] sm:$0xf]
  %v40 = vld [vmem:[%s0 + $0xb4] sm:$0xff]
  %v41 = vld [vmem:[%s0 + $0xbc] sm:$0xff]
  %v42 = vld [vmem:[%s0 + $0xc4] sm:$0xff]
  %v43 = vld [vmem:[%s0 + $0xcc] sm:$0xff]
  %v44 = vld [vmem:[%s0 + $0xd4] sm:$0xf]
  %v45 = vld [vmem:[%s0 + $0xd8] sm:$0xff]
  %v46 = vld [vmem:[%s0 + $0xe0] sm:$0xff]
  %v47 = vld [vmem:[%s0 + $0xe8] sm:$0xff]
  %v48 = vld [vmem:[%s0 + $0xf0] sm:$0xff]
  %v49 = vld [vmem:[%s0 + $0xf8] sm:$0xf]
  %v50 = vld [vmem:[%s0 + $0xfc] sm:$0xff]
  %v51 = vld [vmem:[%s0 + $0x104] sm:$0xff]
  %v52 = vld [vmem:[%s0 + $0x10c] sm:$0xff]
  %v53 = vld [vmem:[%s0 + $0x114] sm:$0xff]
  %v54 = vld [vmem:[%s0 + $0x11c] sm:$0xf]
  %v55 = vld [vmem:[%s0 + $0x120] sm:$0xff]
  %v56 = vld [vmem:[%s0 + $0x128] sm:$0xff]
  %v57 = vld [vmem:[%s0 + $0x130] sm:$0xff]
  %v58 = vld [vmem:[%s0 + $0x138] sm:$0xff]
  %v59 = vld [vmem:[%s0 + $0x140] sm:$0xf]
  %v60 = vld [vmem:[%s1] sm:$0xff]
  %v61 = vld [vmem:[%s1 + $0x8] sm:$0xff]
  %v62 = vld [vmem:[%s1 + $0x10] sm:$0xff]
  %v63 = vld [vmem:[%s1 + $0x18] sm:$0xff]
  %v64 = vld [vmem:[%s1 + $0x20] sm:$0xff]
  %v65 = vld [vmem:[%s1 + $0x28] sm:$0xff]
  %v66 = vld [vmem:[%s1 + $0x30] sm:$0xff]
  %v67 = vld [vmem:[%s1 + $0x38] sm:$0xff]
  %v68 = vld [vmem:[%s1 + $0x40] sm:$0xff]
  %v69 = vld [vmem:[%s1 + $0x48] sm:$0xff]
  %v70 = vld [vmem:[%s1 + $0x50] sm:$0xff]
  %v71 = vld [vmem:[%s1 + $0x58] sm:$0xff]
  %v72 = vld [vmem:[%s1 + $0x60] sm:$0xff]
  %v73 = vld [vmem:[%s1 + $0x68] sm:$0xff]
  %v74 = vld [vmem:[%s1 + $0x70] sm:$0xff]
  %v75 = vld [vmem:[%s1 + $0x78] sm:$0xff]
  %v76 = vld [vmem:[%s1 + $0x80] sm:$0xff]
  %v77 = vld [vmem:[%s1 + $0x88] sm:$0xff]
  %v78 = vld [vmem:[%s1 + $0x90] sm:$0xff]
  %v79 = vld [vmem:[%s1 + $0x98] sm:$0xff]
  %v80 = vld [vmem:[%s1 + $0xa0] sm:$0xff]
  %v81 = vld [vmem:[%s1 + $0xa8] sm:$0xff]
  %v82 = vld [vmem:[%s1 + $0xb0] sm:$0xff]
  %v83 = vld [vmem:[%s1 + $0xb8] sm:$0xff]
  %v84 = vld [vmem:[%s1 + $0xc0] sm:$0xff]
  %v85 = vld [vmem:[%s1 + $0xc8] sm:$0xff]
  %v86 = vld [vmem:[%s1 + $0xd0] sm:$0xff]
  %v87 = vld [vmem:[%s1 + $0xd8] sm:$0xff]
  %v88 = vld [vmem:[%s1 + $0xe0] sm:$0xff]
  %v89 = vld [vmem:[%s1 + $0xe8] sm:$0xff]
  %v90 = vld [vmem:[%s1 + $0xf0] sm:$0xff]
  %v91 = vld [vmem:[%s1 + $0xf8] sm:$0xff]
  %v92 = vld [vmem:[%s1 + $0x100] sm:$0xff]
  %v93 = vld [vmem:[%s1 + $0x108] sm:$0xff]
  %v94 = vld [vmem:[%s1 + $0x110] sm:$0xff]
  %v95 = vld [vmem:[%s1 + $0x118] sm:$0xff]
  %v96 = vld [vmem:[%s1 + $0x120] sm:$0xff]
  %v97 = vld [vmem:[%s1 + $0x128] sm:$0xff]
  %v98 = vld [vmem:[%s1 + $0x130] sm:$0xff]
  %v99 = vld [vmem:[%s1 + $0x138] sm:$0xff]
  %v100 = vld [vmem:[%s1 + $0x140] sm:$0xff]
  %v101 = vld [vmem:[%s1 + $0x148] sm:$0xff]
  %v102 = vld [vmem:[%s1 + $0x150] sm:$0xff]
  %v103 = vld [vmem:[%s1 + $0x158] sm:$0xff]
  %v104 = vld [vmem:[%s1 + $0x160] sm:$0xff]
  %v105 = vld [vmem:[%s1 + $0x168] sm:$0xff]
  %v106 = vld [vmem:[%s1 + $0x170] sm:$0xff]
  %v107 = vld [vmem:[%s1 + $0x178] sm:$0xff]
  %v108 = vld [vmem:[%s1 + $0x180] sm:$0xff]
  %v109 = vld [vmem:[%s1 + $0x188] sm:$0xff]
  %v110 = vld [vmem:[%s1 + $0x190] sm:$0xff]
  %v111 = vld [vmem:[%s1 + $0x198] sm:$0xff]
  %v112 = vld [vmem:[%s1 + $0x1a0] sm:$0xff]
  %v113 = vld [vmem:[%s1 + $0x1a8] sm:$0xff]
  %v114 = vld [vmem:[%s1 + $0x1b0] sm:$0xff]
  %v115 = vld [vmem:[%s1 + $0x1b8] sm:$0xff]
  %v116 = vld [vmem:[%s1 + $0x1c0] sm:$0xff]
  %v117 = vld [vmem:[%s1 + $0x1c8] sm:$0xff]
  %v118 = vld [vmem:[%s1 + $0x1d0] sm:$0xff]
  %v119 = vld [vmem:[%s1 + $0x1d8] sm:$0xff]
  %v120 = vld [vmem:[%s1 + $0x1e0] sm:$0xff]
  %v121 = vld [vmem:[%s1 + $0x1e8] sm:$0xff]
  %v122 = vld [vmem:[%s1 + $0x1f0] sm:$0xff]
  %v123 = vld [vmem:[%s1 + $0x1f8] sm:$0xff]
  %v124 = vld [vmem:[%s1 + $0x200] sm:$0xff]
  %v125 = vld [vmem:[%s1 + $0x208] sm:$0xff]
  %v126 = vld [vmem:[%s1 + $0x210] sm:$0xff]
  %v127 = vld [vmem:[%s1 + $0x218] sm:$0xff]
  %v128 = vld [vmem:[%s1 + $0x220] sm:$0xff]
  %v129 = vld [vmem:[%s1 + $0x228] sm:$0xff]
  %v130 = vld [vmem:[%s1 + $0x230] sm:$0xff]
  %v131 = vld [vmem:[%s1 + $0x238] sm:$0xff]
  %v132 = vld [vmem:[%s1 + $0x240] sm:$0xff]
  %v133 = vld [vmem:[%s1 + $0x248] sm:$0xff]
  %v134 = vld [vmem:[%s1 + $0x250] sm:$0xff]
  %v135 = vld [vmem:[%s1 + $0x258] sm:$0xff]
  %v136 = vld [vmem:[%s1 + $0x260] sm:$0xff]
  %v137 = vld [vmem:[%s1 + $0x268] sm:$0xff]
  %v138 = vld [vmem:[%s1 + $0x270] sm:$0xff]
  %v139 = vld [vmem:[%s1 + $0x278] sm:$0xff]
  %v140 = vld [vmem:[%s1 + $0x280] sm:$0xff]
  %v141 = vld [vmem:[%s1 + $0x288] sm:$0xff]
  %v142 = vld [vmem:[%s1 + $0x290] sm:$0xff]
  %v143 = vld [vmem:[%s1 + $0x298] sm:$0xff]
  %v144 = vld [vmem:[%s1 + $0x2a0] sm:$0xff]
  %v145 = vld [vmem:[%s1 + $0x2a8] sm:$0xff]
  %v146 = vld [vmem:[%s1 + $0x2b0] sm:$0xff]
  %v147 = vld [vmem:[%s1 + $0x2b8] sm:$0xff]
  %v148 = vld [vmem:[%s1 + $0x2c0] sm:$0xff]
  %v149 = vld [vmem:[%s1 + $0x2c8] sm:$0xff]
  %v150 = vld [vmem:[%s1 + $0x2d0] sm:$0xff]
  %v151 = vld [vmem:[%s1 + $0x2d8] sm:$0xff]
  %v152 = vld [vmem:[%s1 + $0x2e0] sm:$0xff]
  %v153 = vld [vmem:[%s1 + $0x2e8] sm:$0xff]
  %v154 = vld [vmem:[%s1 + $0x2f0] sm:$0xff]
  %v155 = vld [vmem:[%s1 + $0x2f8] sm:$0xff]
  %v156 = vld [vmem:[%s1 + $0x300] sm:$0xff]
  %v157 = vld [vmem:[%s1 + $0x308] sm:$0xff]
  %v158 = vld [vmem:[%s1 + $0x310] sm:$0xff]
  %v159 = vld [vmem:[%s1 + $0x318] sm:$0xff]
  %v160 = vld [vmem:[%s1 + $0x320] sm:$0xff]
  %v161 = vld [vmem:[%s1 + $0x328] sm:$0xff]
  %v162 = vld [vmem:[%s1 + $0x330] sm:$0xff]
  %v163 = vld [vmem:[%s1 + $0x338] sm:$0xff]
  %v164 = vld [vmem:[%s1 + $0x340] sm:$0xff]
  %v165 = vld [vmem:[%s1 + $0x348] sm:$0xff]
  %v166 = vld [vmem:[%s1 + $0x350] sm:$0xff]
  %v167 = vld [vmem:[%s1 + $0x358] sm:$0xff]
  %v168 = vld [vmem:[%s1 + $0x360] sm:$0xff]
  %v169 = vld [vmem:[%s1 + $0x368] sm:$0xff]
  %v170 = vld [vmem:[%s1 + $0x370] sm:$0xff]
  %v171 = vld [vmem:[%s1 + $0x378] sm:$0xff]
  %v172 = vld [vmem:[%s1 + $0x380] sm:$0xff]
  %v173 = vld [vmem:[%s1 + $0x388] sm:$0xff]
  %v174 = vld [vmem:[%s1 + $0x390] sm:$0xff]
  %v175 = vld [vmem:[%s1 + $0x398] sm:$0xff]
  %v176 = vld [vmem:[%s1 + $0x3a0] sm:$0xff]
  %v177 = vld [vmem:[%s1 + $0x3a8] sm:$0xff]
  %v178 = vld [vmem:[%s1 + $0x3b0] sm:$0xff]
  %v179 = vld [vmem:[%s1 + $0x3b8] sm:$0xff]
  %v180 = vld [vmem:[%s1 + $0x3c0] sm:$0xff]
  %v181 = vld [vmem:[%s1 + $0x3c8] sm:$0xff]
  %v182 = vld [vmem:[%s1 + $0x3d0] sm:$0xff]
  %v183 = vld [vmem:[%s1 + $0x3d8] sm:$0xff]
  %v184 = vld [vmem:[%s1 + $0x3e0] sm:$0xff]
  %v185 = vld [vmem:[%s1 + $0x3e8] sm:$0xff]
  %v186 = vld [vmem:[%s1 + $0x3f0] sm:$0xff]
  %v187 = vld [vmem:[%s1 + $0x3f8] sm:$0xff]
  %v188 = vld [vmem:[%s1 + $0x400] sm:$0xff]
  %v189 = vld [vmem:[%s1 + $0x408] sm:$0xff]
  %v190 = vld [vmem:[%s1 + $0x410] sm:$0xff]
  %v191 = vld [vmem:[%s1 + $0x418] sm:$0xff]
  %v192 = vld [vmem:[%s1 + $0x420] sm:$0xff]
  %v193 = vld [vmem:[%s1 + $0x428] sm:$0xff]
  %v194 = vld [vmem:[%s1 + $0x430] sm:$0xff]
  %v195 = vld [vmem:[%s1 + $0x438] sm:$0xff]
  %v196 = vld [vmem:[%s1 + $0x440] sm:$0xff]
  %v197 = vld [vmem:[%s1 + $0x448] sm:$0xff]
  %v198 = vld [vmem:[%s1 + $0x450] sm:$0xff]
  %v199 = vld [vmem:[%s1 + $0x458] sm:$0xff]
  %v200 = vld [vmem:[%s1 + $0x460] sm:$0xff]
  %v201 = vld [vmem:[%s1 + $0x468] sm:$0xff]
  %v202 = vld [vmem:[%s1 + $0x470] sm:$0xff]
  %v203 = vld [vmem:[%s1 + $0x478] sm:$0xff]
  %v204 = vld [vmem:[%s2] sm:$0x3]
  %v206 = vlaneseq
  %v207 = vshrl.u32 %v206, 7
  %v208 = vsub.s32 0, %v207
  %v209 = vrot.slane %v204, %v208
  %v210 = vlaneseq
  %v211 = vshrl.u32 %v210, 7
  %v212 = vsub.s32 1, %v211
  %v213 = vrot.slane %v204, %v212
  %v261 = vunpack.c.l.b16 %v15
  %v262 = vunpack.c.h.b16 %v15
  %v263 = vunpack.c.l.b16 %v16
  %v264 = vunpack.c.h.b16 %v16
  %v265 = vunpack.c.l.b16 %v17
  %v266 = vunpack.c.h.b16 %v17
  %v267 = vunpack.c.l.b16 %v18
  %v268 = vunpack.c.h.b16 %v18
  %v269 = vunpack.c.l.b16 %v19
  %v270 = vunpack.c.l.b16 %v20
  %v271 = vunpack.c.h.b16 %v20
  %v272 = vunpack.c.l.b16 %v21
  %v273 = vunpack.c.h.b16 %v21
  %v274 = vunpack.c.l.b16 %v22
  %v275 = vunpack.c.h.b16 %v22
  %v276 = vunpack.c.l.b16 %v23
  %v277 = vunpack.c.h.b16 %v23
  %v278 = vunpack.c.l.b16 %v24
  %v279 = vunpack.c.l.b16 %v25
  %v280 = vunpack.c.h.b16 %v25
  %v281 = vunpack.c.l.b16 %v26
  %v282 = vunpack.c.h.b16 %v26
  %v283 = vunpack.c.l.b16 %v27
  %v284 = vunpack.c.h.b16 %v27
  %v285 = vunpack.c.l.b16 %v28
  %v286 = vunpack.c.h.b16 %v28
  %v287 = vunpack.c.l.b16 %v29
  %v288 = vunpack.c.l.b16 %v30
  %v289 = vunpack.c.h.b16 %v30
  %v290 = vunpack.c.l.b16 %v31
  %v291 = vunpack.c.h.b16 %v31
  %v292 = vunpack.c.l.b16 %v32
  %v293 = vunpack.c.h.b16 %v32
  %v294 = vunpack.c.l.b16 %v33
  %v295 = vunpack.c.h.b16 %v33
  %v296 = vunpack.c.l.b16 %v34
  %v297 = vunpack.c.l.b16 %v35
  %v298 = vunpack.c.h.b16 %v35
  %v299 = vunpack.c.l.b16 %v36
  %v300 = vunpack.c.h.b16 %v36
  %v301 = vunpack.c.l.b16 %v37
  %v302 = vunpack.c.h.b16 %v37
  %v303 = vunpack.c.l.b16 %v38
  %v304 = vunpack.c.h.b16 %v38
  %v305 = vunpack.c.l.b16 %v39
  %v306 = vunpack.c.l.b16 %v40
  %v307 = vunpack.c.h.b16 %v40
  %v308 = vunpack.c.l.b16 %v41
  %v309 = vunpack.c.h.b16 %v41
  %v310 = vunpack.c.l.b16 %v42
  %v311 = vunpack.c.h.b16 %v42
  %v312 = vunpack.c.l.b16 %v43
  %v313 = vunpack.c.h.b16 %v43
  %v314 = vunpack.c.l.b16 %v44
  %v315 = vunpack.c.l.b16 %v45
  %v316 = vunpack.c.h.b16 %v45
  %v317 = vunpack.c.l.b16 %v46
  %v318 = vunpack.c.h.b16 %v46
  %v319 = vunpack.c.l.b16 %v47
  %v320 = vunpack.c.h.b16 %v47
  %v321 = vunpack.c.l.b16 %v48
  %v322 = vunpack.c.h.b16 %v48
  %v323 = vunpack.c.l.b16 %v49
  %v324 = vunpack.c.l.b16 %v50
  %v325 = vunpack.c.h.b16 %v50
  %v326 = vunpack.c.l.b16 %v51
  %v327 = vunpack.c.h.b16 %v51
  %v328 = vunpack.c.l.b16 %v52
  %v329 = vunpack.c.h.b16 %v52
  %v330 = vunpack.c.l.b16 %v53
  %v331 = vunpack.c.h.b16 %v53
  %v332 = vunpack.c.l.b16 %v54
  %v333 = vunpack.c.l.b16 %v55
  %v334 = vunpack.c.h.b16 %v55
  %v335 = vunpack.c.l.b16 %v56
  %v336 = vunpack.c.h.b16 %v56
  %v337 = vunpack.c.l.b16 %v57
  %v338 = vunpack.c.h.b16 %v57
  %v339 = vunpack.c.l.b16 %v58
  %v340 = vunpack.c.h.b16 %v58
  %v341 = vunpack.c.l.b16 %v59
  %v342 = vpack.c.b16 %v270, %v261
  %v343 = vpack.c.b16 %v271, %v262
  %v344 = vpack.c.b16 %v272, %v263
  %v345 = vpack.c.b16 %v273, %v264
  %v346 = vpack.c.b16 %v274, %v265
  %v347 = vpack.c.b16 %v275, %v266
  %v348 = vpack.c.b16 %v276, %v267
  %v349 = vpack.c.b16 %v277, %v268
  %v350 = vpack.c.b16 %v278, %v269
  %v351 = vpack.c.b16 %v288, %v279
  %v352 = vpack.c.b16 %v289, %v280
  %v353 = vpack.c.b16 %v290, %v281
  %v354 = vpack.c.b16 %v291, %v282
  %v355 = vpack.c.b16 %v292, %v283
  %v356 = vpack.c.b16 %v293, %v284
  %v357 = vpack.c.b16 %v294, %v285
  %v358 = vpack.c.b16 %v295, %v286
  %v359 = vpack.c.b16 %v296, %v287
  %v360 = vpack.c.b16 %v306, %v297
  %v361 = vpack.c.b16 %v307, %v298
  %v362 = vpack.c.b16 %v308, %v299
  %v363 = vpack.c.b16 %v309, %v300
  %v364 = vpack.c.b16 %v310, %v301
  %v365 = vpack.c.b16 %v311, %v302
  %v366 = vpack.c.b16 %v312, %v303
  %v367 = vpack.c.b16 %v313, %v304
  %v368 = vpack.c.b16 %v314, %v305
  %v369 = vpack.c.b16 %v324, %v315
  %v370 = vpack.c.b16 %v325, %v316
  %v371 = vpack.c.b16 %v326, %v317
  %v372 = vpack.c.b16 %v327, %v318
  %v373 = vpack.c.b16 %v328, %v319
  %v374 = vpack.c.b16 %v329, %v320
  %v375 = vpack.c.b16 %v330, %v321
  %v376 = vpack.c.b16 %v331, %v322
  %v377 = vpack.c.b16 %v332, %v323
  %v378 = vpack.c.b16 %v333, %v333
  %v379 = vpack.c.b16 %v334, %v334
  %v380 = vpack.c.b16 %v335, %v335
  %v381 = vpack.c.b16 %v336, %v336
  %v382 = vpack.c.b16 %v337, %v337
  %v383 = vpack.c.b16 %v338, %v338
  %v384 = vpack.c.b16 %v339, %v339
  %v385 = vpack.c.b16 %v340, %v340
  %v386 = vpack.c.b16 %v341, %v341
  %v576 = vunpack.c.l.b16 %v60
  %v577 = vunpack.c.h.b16 %v60
  %v578 = vunpack.c.l.b16 %v61
  %v579 = vunpack.c.h.b16 %v61
  %v580 = vunpack.c.l.b16 %v62
  %v581 = vunpack.c.h.b16 %v62
  %v582 = vunpack.c.l.b16 %v63
  %v583 = vunpack.c.h.b16 %v63
  %v584 = vunpack.c.l.b16 %v64
  %v585 = vunpack.c.h.b16 %v64
  %v586 = vunpack.c.l.b16 %v65
  %v587 = vunpack.c.h.b16 %v65
  %v588 = vunpack.c.l.b16 %v66
  %v589 = vunpack.c.h.b16 %v66
  %v590 = vunpack.c.l.b16 %v67
  %v591 = vunpack.c.h.b16 %v67
  %v592 = vunpack.c.l.b16 %v68
  %v593 = vunpack.c.h.b16 %v68
  %v594 = vunpack.c.l.b16 %v69
  %v595 = vunpack.c.h.b16 %v69
  %v596 = vunpack.c.l.b16 %v70
  %v597 = vunpack.c.h.b16 %v70
  %v598 = vunpack.c.l.b16 %v71
  %v599 = vunpack.c.h.b16 %v71
  %v600 = vunpack.c.l.b16 %v72
  %v601 = vunpack.c.h.b16 %v72
  %v602 = vunpack.c.l.b16 %v73
  %v603 = vunpack.c.h.b16 %v73
  %v604 = vunpack.c.l.b16 %v74
  %v605 = vunpack.c.h.b16 %v74
  %v606 = vunpack.c.l.b16 %v75
  %v607 = vunpack.c.h.b16 %v75
  %v608 = vunpack.c.l.b16 %v76
  %v609 = vunpack.c.h.b16 %v76
  %v610 = vunpack.c.l.b16 %v77
  %v611 = vunpack.c.h.b16 %v77
  %v612 = vunpack.c.l.b16 %v78
  %v613 = vunpack.c.h.b16 %v78
  %v614 = vunpack.c.l.b16 %v79
  %v615 = vunpack.c.h.b16 %v79
  %v616 = vunpack.c.l.b16 %v80
  %v617 = vunpack.c.h.b16 %v80
  %v618 = vunpack.c.l.b16 %v81
  %v619 = vunpack.c.h.b16 %v81
  %v620 = vunpack.c.l.b16 %v82
  %v621 = vunpack.c.h.b16 %v82
  %v622 = vunpack.c.l.b16 %v83
  %v623 = vunpack.c.h.b16 %v83
  %v624 = vunpack.c.l.b16 %v84
  %v625 = vunpack.c.h.b16 %v84
  %v626 = vunpack.c.l.b16 %v85
  %v627 = vunpack.c.h.b16 %v85
  %v628 = vunpack.c.l.b16 %v86
  %v629 = vunpack.c.h.b16 %v86
  %v630 = vunpack.c.l.b16 %v87
  %v631 = vunpack.c.h.b16 %v87
  %v632 = vunpack.c.l.b16 %v88
  %v633 = vunpack.c.h.b16 %v88
  %v634 = vunpack.c.l.b16 %v89
  %v635 = vunpack.c.h.b16 %v89
  %v636 = vunpack.c.l.b16 %v90
  %v637 = vunpack.c.h.b16 %v90
  %v638 = vunpack.c.l.b16 %v91
  %v639 = vunpack.c.h.b16 %v91
  %v640 = vunpack.c.l.b16 %v92
  %v641 = vunpack.c.h.b16 %v92
  %v642 = vunpack.c.l.b16 %v93
  %v643 = vunpack.c.h.b16 %v93
  %v644 = vunpack.c.l.b16 %v94
  %v645 = vunpack.c.h.b16 %v94
  %v646 = vunpack.c.l.b16 %v95
  %v647 = vunpack.c.h.b16 %v95
  %v648 = vunpack.c.l.b16 %v96
  %v649 = vunpack.c.h.b16 %v96
  %v650 = vunpack.c.l.b16 %v97
  %v651 = vunpack.c.h.b16 %v97
  %v652 = vunpack.c.l.b16 %v98
  %v653 = vunpack.c.h.b16 %v98
  %v654 = vunpack.c.l.b16 %v99
  %v655 = vunpack.c.h.b16 %v99
  %v656 = vunpack.c.l.b16 %v100
  %v657 = vunpack.c.h.b16 %v100
  %v658 = vunpack.c.l.b16 %v101
  %v659 = vunpack.c.h.b16 %v101
  %v660 = vunpack.c.l.b16 %v102
  %v661 = vunpack.c.h.b16 %v102
  %v662 = vunpack.c.l.b16 %v103
  %v663 = vunpack.c.h.b16 %v103
  %v664 = vunpack.c.l.b16 %v104
  %v665 = vunpack.c.h.b16 %v104
  %v666 = vunpack.c.l.b16 %v105
  %v667 = vunpack.c.h.b16 %v105
  %v668 = vunpack.c.l.b16 %v106
  %v669 = vunpack.c.h.b16 %v106
  %v670 = vunpack.c.l.b16 %v107
  %v671 = vunpack.c.h.b16 %v107
  %v672 = vunpack.c.l.b16 %v108
  %v673 = vunpack.c.h.b16 %v108
  %v674 = vunpack.c.l.b16 %v109
  %v675 = vunpack.c.h.b16 %v109
  %v676 = vunpack.c.l.b16 %v110
  %v677 = vunpack.c.h.b16 %v110
  %v678 = vunpack.c.l.b16 %v111
  %v679 = vunpack.c.h.b16 %v111
  %v680 = vunpack.c.l.b16 %v112
  %v681 = vunpack.c.h.b16 %v112
  %v682 = vunpack.c.l.b16 %v113
  %v683 = vunpack.c.h.b16 %v113
  %v684 = vunpack.c.l.b16 %v114
  %v685 = vunpack.c.h.b16 %v114
  %v686 = vunpack.c.l.b16 %v115
  %v687 = vunpack.c.h.b16 %v115
  %v688 = vunpack.c.l.b16 %v116
  %v689 = vunpack.c.h.b16 %v116
  %v690 = vunpack.c.l.b16 %v117
  %v691 = vunpack.c.h.b16 %v117
  %v692 = vunpack.c.l.b16 %v118
  %v693 = vunpack.c.h.b16 %v118
  %v694 = vunpack.c.l.b16 %v119
  %v695 = vunpack.c.h.b16 %v119
  %v696 = vunpack.c.l.b16 %v120
  %v697 = vunpack.c.h.b16 %v120
  %v698 = vunpack.c.l.b16 %v121
  %v699 = vunpack.c.h.b16 %v121
  %v700 = vunpack.c.l.b16 %v122
  %v701 = vunpack.c.h.b16 %v122
  %v702 = vunpack.c.l.b16 %v123
  %v703 = vunpack.c.h.b16 %v123
  %v704 = vunpack.c.l.b16 %v124
  %v705 = vunpack.c.h.b16 %v124
  %v706 = vunpack.c.l.b16 %v125
  %v707 = vunpack.c.h.b16 %v125
  %v708 = vunpack.c.l.b16 %v126
  %v709 = vunpack.c.h.b16 %v126
  %v710 = vunpack.c.l.b16 %v127
  %v711 = vunpack.c.h.b16 %v127
  %v712 = vunpack.c.l.b16 %v128
  %v713 = vunpack.c.h.b16 %v128
  %v714 = vunpack.c.l.b16 %v129
  %v715 = vunpack.c.h.b16 %v129
  %v716 = vunpack.c.l.b16 %v130
  %v717 = vunpack.c.h.b16 %v130
  %v718 = vunpack.c.l.b16 %v131
  %v719 = vunpack.c.h.b16 %v131
  %v720 = vunpack.c.l.b16 %v132
  %v721 = vunpack.c.h.b16 %v132
  %v722 = vunpack.c.l.b16 %v133
  %v723 = vunpack.c.h.b16 %v133
  %v724 = vunpack.c.l.b16 %v134
  %v725 = vunpack.c.h.b16 %v134
  %v726 = vunpack.c.l.b16 %v135
  %v727 = vunpack.c.h.b16 %v135
  %v728 = vunpack.c.l.b16 %v136
  %v729 = vunpack.c.h.b16 %v136
  %v730 = vunpack.c.l.b16 %v137
  %v731 = vunpack.c.h.b16 %v137
  %v732 = vunpack.c.l.b16 %v138
  %v733 = vunpack.c.h.b16 %v138
  %v734 = vunpack.c.l.b16 %v139
  %v735 = vunpack.c.h.b16 %v139
  %v736 = vunpack.c.l.b16 %v140
  %v737 = vunpack.c.h.b16 %v140
  %v738 = vunpack.c.l.b16 %v141
  %v739 = vunpack.c.h.b16 %v141
  %v740 = vunpack.c.l.b16 %v142
  %v741 = vunpack.c.h.b16 %v142
  %v742 = vunpack.c.l.b16 %v143
  %v743 = vunpack.c.h.b16 %v143
  %v744 = vunpack.c.l.b16 %v144
  %v745 = vunpack.c.h.b16 %v144
  %v746 = vunpack.c.l.b16 %v145
  %v747 = vunpack.c.h.b16 %v145
  %v748 = vunpack.c.l.b16 %v146
  %v749 = vunpack.c.h.b16 %v146
  %v750 = vunpack.c.l.b16 %v147
  %v751 = vunpack.c.h.b16 %v147
  %v752 = vunpack.c.l.b16 %v148
  %v753 = vunpack.c.h.b16 %v148
  %v754 = vunpack.c.l.b16 %v149
  %v755 = vunpack.c.h.b16 %v149
  %v756 = vunpack.c.l.b16 %v150
  %v757 = vunpack.c.h.b16 %v150
  %v758 = vunpack.c.l.b16 %v151
  %v759 = vunpack.c.h.b16 %v151
  %v760 = vunpack.c.l.b16 %v152
  %v761 = vunpack.c.h.b16 %v152
  %v762 = vunpack.c.l.b16 %v153
  %v763 = vunpack.c.h.b16 %v153
  %v764 = vunpack.c.l.b16 %v154
  %v765 = vunpack.c.h.b16 %v154
  %v766 = vunpack.c.l.b16 %v155
  %v767 = vunpack.c.h.b16 %v155
  %v768 = vunpack.c.l.b16 %v156
  %v769 = vunpack.c.h.b16 %v156
  %v770 = vunpack.c.l.b16 %v157
  %v771 = vunpack.c.h.b16 %v157
  %v772 = vunpack.c.l.b16 %v158
  %v773 = vunpack.c.h.b16 %v158
  %v774 = vunpack.c.l.b16 %v159
  %v775 = vunpack.c.h.b16 %v159
  %v776 = vunpack.c.l.b16 %v160
  %v777 = vunpack.c.h.b16 %v160
  %v778 = vunpack.c.l.b16 %v161
  %v779 = vunpack.c.h.b16 %v161
  %v780 = vunpack.c.l.b16 %v162
  %v781 = vunpack.c.h.b16 %v162
  %v782 = vunpack.c.l.b16 %v163
  %v783 = vunpack.c.h.b16 %v163
  %v784 = vunpack.c.l.b16 %v164
  %v785 = vunpack.c.h.b16 %v164
  %v786 = vunpack.c.l.b16 %v165
  %v787 = vunpack.c.h.b16 %v165
  %v788 = vunpack.c.l.b16 %v166
  %v789 = vunpack.c.h.b16 %v166
  %v790 = vunpack.c.l.b16 %v167
  %v791 = vunpack.c.h.b16 %v167
  %v792 = vunpack.c.l.b16 %v168
  %v793 = vunpack.c.h.b16 %v168
  %v794 = vunpack.c.l.b16 %v169
  %v795 = vunpack.c.h.b16 %v169
  %v796 = vunpack.c.l.b16 %v170
  %v797 = vunpack.c.h.b16 %v170
  %v798 = vunpack.c.l.b16 %v171
  %v799 = vunpack.c.h.b16 %v171
  %v800 = vunpack.c.l.b16 %v172
  %v801 = vunpack.c.h.b16 %v172
  %v802 = vunpack.c.l.b16 %v173
  %v803 = vunpack.c.h.b16 %v173
  %v804 = vunpack.c.l.b16 %v174
  %v805 = vunpack.c.h.b16 %v174
  %v806 = vunpack.c.l.b16 %v175
  %v807 = vunpack.c.h.b16 %v175
  %v808 = vunpack.c.l.b16 %v176
  %v809 = vunpack.c.h.b16 %v176
  %v810 = vunpack.c.l.b16 %v177
  %v811 = vunpack.c.h.b16 %v177
  %v812 = vunpack.c.l.b16 %v178
  %v813 = vunpack.c.h.b16 %v178
  %v814 = vunpack.c.l.b16 %v179
  %v815 = vunpack.c.h.b16 %v179
  %v816 = vunpack.c.l.b16 %v180
  %v817 = vunpack.c.h.b16 %v180
  %v818 = vunpack.c.l.b16 %v181
  %v819 = vunpack.c.h.b16 %v181
  %v820 = vunpack.c.l.b16 %v182
  %v821 = vunpack.c.h.b16 %v182
  %v822 = vunpack.c.l.b16 %v183
  %v823 = vunpack.c.h.b16 %v183
  %v824 = vunpack.c.l.b16 %v184
  %v825 = vunpack.c.h.b16 %v184
  %v826 = vunpack.c.l.b16 %v185
  %v827 = vunpack.c.h.b16 %v185
  %v828 = vunpack.c.l.b16 %v186
  %v829 = vunpack.c.h.b16 %v186
  %v830 = vunpack.c.l.b16 %v187
  %v831 = vunpack.c.h.b16 %v187
  %v832 = vunpack.c.l.b16 %v188
  %v833 = vunpack.c.h.b16 %v188
  %v834 = vunpack.c.l.b16 %v189
  %v835 = vunpack.c.h.b16 %v189
  %v836 = vunpack.c.l.b16 %v190
  %v837 = vunpack.c.h.b16 %v190
  %v838 = vunpack.c.l.b16 %v191
  %v839 = vunpack.c.h.b16 %v191
  %v840 = vunpack.c.l.b16 %v192
  %v841 = vunpack.c.h.b16 %v192
  %v842 = vunpack.c.l.b16 %v193
  %v843 = vunpack.c.h.b16 %v193
  %v844 = vunpack.c.l.b16 %v194
  %v845 = vunpack.c.h.b16 %v194
  %v846 = vunpack.c.l.b16 %v195
  %v847 = vunpack.c.h.b16 %v195
  %v848 = vunpack.c.l.b16 %v196
  %v849 = vunpack.c.h.b16 %v196
  %v850 = vunpack.c.l.b16 %v197
  %v851 = vunpack.c.h.b16 %v197
  %v852 = vunpack.c.l.b16 %v198
  %v853 = vunpack.c.h.b16 %v198
  %v854 = vunpack.c.l.b16 %v199
  %v855 = vunpack.c.h.b16 %v199
  %v856 = vunpack.c.l.b16 %v200
  %v857 = vunpack.c.h.b16 %v200
  %v858 = vunpack.c.l.b16 %v201
  %v859 = vunpack.c.h.b16 %v201
  %v860 = vunpack.c.l.b16 %v202
  %v861 = vunpack.c.h.b16 %v202
  %v862 = vunpack.c.l.b16 %v203
  %v863 = vunpack.c.h.b16 %v203
  %v864 = vpack.c.b16 %v578, %v576
  %v865 = vpack.c.b16 %v579, %v577
  %v866 = vpack.c.b16 %v582, %v580
  %v867 = vpack.c.b16 %v583, %v581
  %v868 = vpack.c.b16 %v586, %v584
  %v869 = vpack.c.b16 %v587, %v585
  %v870 = vpack.c.b16 %v590, %v588
  %v871 = vpack.c.b16 %v591, %v589
  %v872 = vpack.c.b16 %v594, %v592
  %v873 = vpack.c.b16 %v595, %v593
  %v874 = vpack.c.b16 %v598, %v596
  %v875 = vpack.c.b16 %v599, %v597
  %v876 = vpack.c.b16 %v602, %v600
  %v877 = vpack.c.b16 %v603, %v601
  %v878 = vpack.c.b16 %v606, %v604
  %v879 = vpack.c.b16 %v607, %v605
  %v880 = vpack.c.b16 %v610, %v608
  %v881 = vpack.c.b16 %v611, %v609
  %v882 = vpack.c.b16 %v614, %v612
  %v883 = vpack.c.b16 %v615, %v613
  %v884 = vpack.c.b16 %v618, %v616
  %v885 = vpack.c.b16 %v619, %v617
  %v886 = vpack.c.b16 %v622, %v620
  %v887 = vpack.c.b16 %v623, %v621
  %v888 = vpack.c.b16 %v626, %v624
  %v889 = vpack.c.b16 %v627, %v625
  %v890 = vpack.c.b16 %v630, %v628
  %v891 = vpack.c.b16 %v631, %v629
  %v892 = vpack.c.b16 %v634, %v632
  %v893 = vpack.c.b16 %v635, %v633
  %v894 = vpack.c.b16 %v638, %v636
  %v895 = vpack.c.b16 %v639, %v637
  %v896 = vpack.c.b16 %v642, %v640
  %v897 = vpack.c.b16 %v643, %v641
  %v898 = vpack.c.b16 %v646, %v644
  %v899 = vpack.c.b16 %v647, %v645
  %v900 = vpack.c.b16 %v650, %v648
  %v901 = vpack.c.b16 %v651, %v649
  %v902 = vpack.c.b16 %v654, %v652
  %v903 = vpack.c.b16 %v655, %v653
  %v904 = vpack.c.b16 %v658, %v656
  %v905 = vpack.c.b16 %v659, %v657
  %v906 = vpack.c.b16 %v662, %v660
  %v907 = vpack.c.b16 %v663, %v661
  %v908 = vpack.c.b16 %v666, %v664
  %v909 = vpack.c.b16 %v667, %v665
  %v910 = vpack.c.b16 %v670, %v668
  %v911 = vpack.c.b16 %v671, %v669
  %v912 = vpack.c.b16 %v674, %v672
  %v913 = vpack.c.b16 %v675, %v673
  %v914 = vpack.c.b16 %v678, %v676
  %v915 = vpack.c.b16 %v679, %v677
  %v916 = vpack.c.b16 %v682, %v680
  %v917 = vpack.c.b16 %v683, %v681
  %v918 = vpack.c.b16 %v686, %v684
  %v919 = vpack.c.b16 %v687, %v685
  %v920 = vpack.c.b16 %v690, %v688
  %v921 = vpack.c.b16 %v691, %v689
  %v922 = vpack.c.b16 %v694, %v692
  %v923 = vpack.c.b16 %v695, %v693
  %v924 = vpack.c.b16 %v698, %v696
  %v925 = vpack.c.b16 %v699, %v697
  %v926 = vpack.c.b16 %v702, %v700
  %v927 = vpack.c.b16 %v703, %v701
  %v928 = vpack.c.b16 %v706, %v704
  %v929 = vpack.c.b16 %v707, %v705
  %v930 = vpack.c.b16 %v710, %v708
  %v931 = vpack.c.b16 %v711, %v709
  %v932 = vpack.c.b16 %v714, %v712
  %v933 = vpack.c.b16 %v715, %v713
  %v934 = vpack.c.b16 %v718, %v716
  %v935 = vpack.c.b16 %v719, %v717
  %v936 = vpack.c.b16 %v722, %v720
  %v937 = vpack.c.b16 %v723, %v721
  %v938 = vpack.c.b16 %v726, %v724
  %v939 = vpack.c.b16 %v727, %v725
  %v940 = vpack.c.b16 %v730, %v728
  %v941 = vpack.c.b16 %v731, %v729
  %v942 = vpack.c.b16 %v734, %v732
  %v943 = vpack.c.b16 %v735, %v733
  %v944 = vpack.c.b16 %v738, %v736
  %v945 = vpack.c.b16 %v739, %v737
  %v946 = vpack.c.b16 %v742, %v740
  %v947 = vpack.c.b16 %v743, %v741
  %v948 = vpack.c.b16 %v746, %v744
  %v949 = vpack.c.b16 %v747, %v745
  %v950 = vpack.c.b16 %v750, %v748
  %v951 = vpack.c.b16 %v751, %v749
  %v952 = vpack.c.b16 %v754, %v752
  %v953 = vpack.c.b16 %v755, %v753
  %v954 = vpack.c.b16 %v758, %v756
  %v955 = vpack.c.b16 %v759, %v757
  %v956 = vpack.c.b16 %v762, %v760
  %v957 = vpack.c.b16 %v763, %v761
  %v958 = vpack.c.b16 %v766, %v764
  %v959 = vpack.c.b16 %v767, %v765
  %v960 = vpack.c.b16 %v770, %v768
  %v961 = vpack.c.b16 %v771, %v769
  %v962 = vpack.c.b16 %v774, %v772
  %v963 = vpack.c.b16 %v775, %v773
  %v964 = vpack.c.b16 %v778, %v776
  %v965 = vpack.c.b16 %v779, %v777
  %v966 = vpack.c.b16 %v782, %v780
  %v967 = vpack.c.b16 %v783, %v781
  %v968 = vpack.c.b16 %v786, %v784
  %v969 = vpack.c.b16 %v787, %v785
  %v970 = vpack.c.b16 %v790, %v788
  %v971 = vpack.c.b16 %v791, %v789
  %v972 = vpack.c.b16 %v794, %v792
  %v973 = vpack.c.b16 %v795, %v793
  %v974 = vpack.c.b16 %v798, %v796
  %v975 = vpack.c.b16 %v799, %v797
  %v976 = vpack.c.b16 %v802, %v800
  %v977 = vpack.c.b16 %v803, %v801
  %v978 = vpack.c.b16 %v806, %v804
  %v979 = vpack.c.b16 %v807, %v805
  %v980 = vpack.c.b16 %v810, %v808
  %v981 = vpack.c.b16 %v811, %v809
  %v982 = vpack.c.b16 %v814, %v812
  %v983 = vpack.c.b16 %v815, %v813
  %v984 = vpack.c.b16 %v818, %v816
  %v985 = vpack.c.b16 %v819, %v817
  %v986 = vpack.c.b16 %v822, %v820
  %v987 = vpack.c.b16 %v823, %v821
  %v988 = vpack.c.b16 %v826, %v824
  %v989 = vpack.c.b16 %v827, %v825
  %v990 = vpack.c.b16 %v830, %v828
  %v991 = vpack.c.b16 %v831, %v829
  %v992 = vpack.c.b16 %v834, %v832
  %v993 = vpack.c.b16 %v835, %v833
  %v994 = vpack.c.b16 %v838, %v836
  %v995 = vpack.c.b16 %v839, %v837
  %v996 = vpack.c.b16 %v842, %v840
  %v997 = vpack.c.b16 %v843, %v841
  %v998 = vpack.c.b16 %v846, %v844
  %v999 = vpack.c.b16 %v847, %v845
  %v1000 = vpack.c.b16 %v850, %v848
  %v1001 = vpack.c.b16 %v851, %v849
  %v1002 = vpack.c.b16 %v854, %v852
  %v1003 = vpack.c.b16 %v855, %v853
  %v1004 = vpack.c.b16 %v858, %v856
  %v1005 = vpack.c.b16 %v859, %v857
  %v1006 = vpack.c.b16 %v862, %v860
  %v1007 = vpack.c.b16 %v863, %v861
  %1152 = vmatprep.subr.bf16.mxu0 %v865
  %1153 = vmatpush1.bf16.msra.mxu0 %v864
  %1154 = vmatprep.subr.bf16.mxu0 %v867
  %1155 = vmatpush1.bf16.msra.mxu0 %v866
  %1156 = vmatprep.subr.bf16.mxu0 %v869
  %1157 = vmatpush1.bf16.msra.mxu0 %v868
  %1158 = vmatprep.subr.bf16.mxu0 %v871
  %1159 = vmatpush1.bf16.msra.mxu0 %v870
  %1160 = vmatprep.subr.bf16.mxu0 %v873
  %1161 = vmatpush1.bf16.msra.mxu0 %v872
  %1162 = vmatprep.subr.bf16.mxu0 %v875
  %1163 = vmatpush1.bf16.msra.mxu0 %v874
  %1164 = vmatprep.subr.bf16.mxu0 %v877
  %1165 = vmatpush1.bf16.msra.mxu0 %v876
  %1166 = vmatprep.subr.bf16.mxu0 %v879
  %1167 = vmatpush1.bf16.msra.mxu0 %v878
  %1168 = vmatprep.subr.bf16.mxu0 %v881
  %1169 = vmatpush1.bf16.msra.mxu0 %v880
  %1170 = vmatprep.subr.bf16.mxu0 %v883
  %1171 = vmatpush1.bf16.msra.mxu0 %v882
  %1172 = vmatprep.subr.bf16.mxu0 %v885
  %1173 = vmatpush1.bf16.msra.mxu0 %v884
  %1174 = vmatprep.subr.bf16.mxu0 %v887
  %1175 = vmatpush1.bf16.msra.mxu0 %v886
  %1176 = vmatprep.subr.bf16.mxu0 %v889
  %1177 = vmatpush1.bf16.msra.mxu0 %v888
  %1178 = vmatprep.subr.bf16.mxu0 %v891
  %1179 = vmatpush1.bf16.msra.mxu0 %v890
  %1180 = vmatprep.subr.bf16.mxu0 %v893
  %1181 = vmatpush1.bf16.msra.mxu0 %v892
  %1182 = vmatprep.subr.bf16.mxu0 %v895
  %1183 = vmatpush1.bf16.msra.mxu0 %v894
  %1184 = vmatprep.mubr.bf16.mxu0 %v343
  %1185 = vmatmul.mubr.bf16.gmra.mrb[0].mxu0 %v342
  %v1186 = vpop.f32.mrb[0].mxu0
  %v1187 = vadd.f32 %v209, %v1186
  %v1188 = vpop.f32.mrb[0].mxu0
  %v1189 = vadd.f32 %v213, %v1188
  %v1190 = vpop.f32.mrb[0].mxu0
  %v1191 = vadd.f32 %v209, %v1190
  %v1192 = vpop.f32.mrb[0].mxu0
  %v1193 = vadd.f32 %v213, %v1192
  %1194 = vmatprep.mubr.bf16.mxu0 %v352
  %1195 = vmatmul.mubr.bf16.gmra.mrb[0].mxu0 %v351
  %v1196 = vpop.f32.mrb[0].mxu0
  %v1197 = vadd.f32 %v209, %v1196
  %v1198 = vpop.f32.mrb[0].mxu0
  %v1199 = vadd.f32 %v213, %v1198
  %v1200 = vpop.f32.mrb[0].mxu0
  %v1201 = vadd.f32 %v209, %v1200
  %v1202 = vpop.f32.mrb[0].mxu0
  %v1203 = vadd.f32 %v213, %v1202
  %1204 = vmatprep.mubr.bf16.mxu0 %v361
  %1205 = vmatmul.mubr.bf16.gmra.mrb[0].mxu0 %v360
  %v1206 = vpop.f32.mrb[0].mxu0
  %v1207 = vadd.f32 %v209, %v1206
  %v1208 = vpop.f32.mrb[0].mxu0
  %v1209 = vadd.f32 %v213, %v1208
  %v1210 = vpop.f32.mrb[0].mxu0
  %v1211 = vadd.f32 %v209, %v1210
  %v1212 = vpop.f32.mrb[0].mxu0
  %v1213 = vadd.f32 %v213, %v1212
  %1214 = vmatprep.mubr.bf16.mxu0 %v370
  %1215 = vmatmul.mubr.bf16.gmra.mrb[0].mxu0 %v369
  %v1216 = vpop.f32.mrb[0].mxu0
  %v1217 = vadd.f32 %v209, %v1216
  %v1218 = vpop.f32.mrb[0].mxu0
  %v1219 = vadd.f32 %v213, %v1218
  %v1220 = vpop.f32.mrb[0].mxu0
  %v1221 = vadd.f32 %v209, %v1220
  %v1222 = vpop.f32.mrb[0].mxu0
  %v1223 = vadd.f32 %v213, %v1222
  %1224 = vmatprep.mubr.bf16.mxu0 %v379
  %1225 = vmatmul.mubr.bf16.gmra.mrb[0].mxu0 %v378
  %v1226 = vpop.f32.mrb[0].mxu0
  %v1227 = vadd.f32 %v209, %v1226
  %v1228 = vpop.f32.mrb[0].mxu0
  %v1229 = vadd.f32 %v213, %v1228
  %v1230 = vpop.f32.mrb[0].mxu0
  %v1231 = vpop.f32.mrb[0].mxu0
  %1232 = vdwg.mxu0
  %1233 = vmatprep.subr.bf16.mxu0 %v897
  %1234 = vmatpush1.bf16.msra.mxu0 %v896
  %1235 = vmatprep.subr.bf16.mxu0 %v899
  %1236 = vmatpush1.bf16.msra.mxu0 %v898
  %1237 = vmatprep.subr.bf16.mxu0 %v901
  %1238 = vmatpush1.bf16.msra.mxu0 %v900
  %1239 = vmatprep.subr.bf16.mxu0 %v903
  %1240 = vmatpush1.bf16.msra.mxu0 %v902
  %1241 = vmatprep.subr.bf16.mxu0 %v905
  %1242 = vmatpush1.bf16.msra.mxu0 %v904
  %1243 = vmatprep.subr.bf16.mxu0 %v907
  %1244 = vmatpush1.bf16.msra.mxu0 %v906
  %1245 = vmatprep.subr.bf16.mxu0 %v909
  %1246 = vmatpush1.bf16.msra.mxu0 %v908
  %1247 = vmatprep.subr.bf16.mxu0 %v911
  %1248 = vmatpush1.bf16.msra.mxu0 %v910
  %1249 = vmatprep.subr.bf16.mxu0 %v913
  %1250 = vmatpush1.bf16.msra.mxu0 %v912
  %1251 = vmatprep.subr.bf16.mxu0 %v915
  %1252 = vmatpush1.bf16.msra.mxu0 %v914
  %1253 = vmatprep.subr.bf16.mxu0 %v917
  %1254 = vmatpush1.bf16.msra.mxu0 %v916
  %1255 = vmatprep.subr.bf16.mxu0 %v919
  %1256 = vmatpush1.bf16.msra.mxu0 %v918
  %1257 = vmatprep.subr.bf16.mxu0 %v921
  %1258 = vmatpush1.bf16.msra.mxu0 %v920
  %1259 = vmatprep.subr.bf16.mxu0 %v923
  %1260 = vmatpush1.bf16.msra.mxu0 %v922
  %1261 = vmatprep.subr.bf16.mxu0 %v925
  %1262 = vmatpush1.bf16.msra.mxu0 %v924
  %1263 = vmatprep.subr.bf16.mxu0 %v927
  %1264 = vmatpush1.bf16.msra.mxu0 %v926
  %1265 = vmatprep.mubr.bf16.mxu0 %v345
  %1266 = vmatmul.mubr.bf16.gmra.mrb[0].mxu0 %v344
  %v1267 = vpop.f32.mrb[0].mxu0
  %v1268 = vadd.f32 %v1187, %v1267
  %v1269 = vpop.f32.mrb[0].mxu0
  %v1270 = vadd.f32 %v1189, %v1269
  %v1271 = vpop.f32.mrb[0].mxu0
  %v1272 = vadd.f32 %v1191, %v1271
  %v1273 = vpop.f32.mrb[0].mxu0
  %v1274 = vadd.f32 %v1193, %v1273
  %1275 = vmatprep.mubr.bf16.mxu0 %v354
  %1276 = vmatmul.mubr.bf16.gmra.mrb[0].mxu0 %v353
  %v1277 = vpop.f32.mrb[0].mxu0
  %v1278 = vadd.f32 %v1197, %v1277
  %v1279 = vpop.f32.mrb[0].mxu0
  %v1280 = vadd.f32 %v1199, %v1279
  %v1281 = vpop.f32.mrb[0].mxu0
  %v1282 = vadd.f32 %v1201, %v1281
  %v1283 = vpop.f32.mrb[0].mxu0
  %v1284 = vadd.f32 %v1203, %v1283
  %1285 = vmatprep.mubr.bf16.mxu0 %v363
  %1286 = vmatmul.mubr.bf16.gmra.mrb[0].mxu0 %v362
  %v1287 = vpop.f32.mrb[0].mxu0
  %v1288 = vadd.f32 %v1207, %v1287
  %v1289 = vpop.f32.mrb[0].mxu0
  %v1290 = vadd.f32 %v1209, %v1289
  %v1291 = vpop.f32.mrb[0].mxu0
  %v1292 = vadd.f32 %v1211, %v1291
  %v1293 = vpop.f32.mrb[0].mxu0
  %v1294 = vadd.f32 %v1213, %v1293
  %1295 = vmatprep.mubr.bf16.mxu0 %v372
  %1296 = vmatmul.mubr.bf16.gmra.mrb[0].mxu0 %v371
  %v1297 = vpop.f32.mrb[0].mxu0
  %v1298 = vadd.f32 %v1217, %v1297
  %v1299 = vpop.f32.mrb[0].mxu0
  %v1300 = vadd.f32 %v1219, %v1299
  %v1301 = vpop.f32.mrb[0].mxu0
  %v1302 = vadd.f32 %v1221, %v1301
  %v1303 = vpop.f32.mrb[0].mxu0
  %v1304 = vadd.f32 %v1223, %v1303
  %1305 = vmatprep.mubr.bf16.mxu0 %v381
  %1306 = vmatmul.mubr.bf16.gmra.mrb[0].mxu0 %v380
  %v1307 = vpop.f32.mrb[0].mxu0
  %v1308 = vadd.f32 %v1227, %v1307
  %v1309 = vpop.f32.mrb[0].mxu0
  %v1310 = vadd.f32 %v1229, %v1309
  %v1311 = vpop.f32.mrb[0].mxu0
  %v1312 = vpop.f32.mrb[0].mxu0
  %1313 = vdwg.mxu0
  %1314 = vmatprep.subr.bf16.mxu0 %v929
  %1315 = vmatpush1.bf16.msra.mxu0 %v928
  %1316 = vmatprep.subr.bf16.mxu0 %v931
  %1317 = vmatpush1.bf16.msra.mxu0 %v930
  %1318 = vmatprep.subr.bf16.mxu0 %v933
  %1319 = vmatpush1.bf16.msra.mxu0 %v932
  %1320 = vmatprep.subr.bf16.mxu0 %v935
  %1321 = vmatpush1.bf16.msra.mxu0 %v934
  %1322 = vmatprep.subr.bf16.mxu0 %v937
  %1323 = vmatpush1.bf16.msra.mxu0 %v936
  %1324 = vmatprep.subr.bf16.mxu0 %v939
  %1325 = vmatpush1.bf16.msra.mxu0 %v938
  %1326 = vmatprep.subr.bf16.mxu0 %v941
  %1327 = vmatpush1.bf16.msra.mxu0 %v940
  %1328 = vmatprep.subr.bf16.mxu0 %v943
  %1329 = vmatpush1.bf16.msra.mxu0 %v942
  %1330 = vmatprep.subr.bf16.mxu0 %v945
  %1331 = vmatpush1.bf16.msra.mxu0 %v944
  %1332 = vmatprep.subr.bf16.mxu0 %v947
  %1333 = vmatpush1.bf16.msra.mxu0 %v946
  %1334 = vmatprep.subr.bf16.mxu0 %v949
  %1335 = vmatpush1.bf16.msra.mxu0 %v948
  %1336 = vmatprep.subr.bf16.mxu0 %v951
  %1337 = vmatpush1.bf16.msra.mxu0 %v950
  %1338 = vmatprep.subr.bf16.mxu0 %v953
  %1339 = vmatpush1.bf16.msra.mxu0 %v952
  %1340 = vmatprep.subr.bf16.mxu0 %v955
  %1341 = vmatpush1.bf16.msra.mxu0 %v954
  %1342 = vmatprep.subr.bf16.mxu0 %v957
  %1343 = vmatpush1.bf16.msra.mxu0 %v956
  %1344 = vmatprep.subr.bf16.mxu0 %v959
  %1345 = vmatpush1.bf16.msra.mxu0 %v958
  %1346 = vmatprep.mubr.bf16.mxu0 %v347
  %1347 = vmatmul.mubr.bf16.gmra.mrb[0].mxu0 %v346
  %v1348 = vpop.f32.mrb[0].mxu0
  %v1349 = vadd.f32 %v1268, %v1348
  %v1350 = vpop.f32.mrb[0].mxu0
  %v1351 = vadd.f32 %v1270, %v1350
  %v1352 = vpop.f32.mrb[0].mxu0
  %v1353 = vadd.f32 %v1272, %v1352
  %v1354 = vpop.f32.mrb[0].mxu0
  %v1355 = vadd.f32 %v1274, %v1354
  %1356 = vmatprep.mubr.bf16.mxu0 %v356
  %1357 = vmatmul.mubr.bf16.gmra.mrb[0].mxu0 %v355
  %v1358 = vpop.f32.mrb[0].mxu0
  %v1359 = vadd.f32 %v1278, %v1358
  %v1360 = vpop.f32.mrb[0].mxu0
  %v1361 = vadd.f32 %v1280, %v1360
  %v1362 = vpop.f32.mrb[0].mxu0
  %v1363 = vadd.f32 %v1282, %v1362
  %v1364 = vpop.f32.mrb[0].mxu0
  %v1365 = vadd.f32 %v1284, %v1364
  %1366 = vmatprep.mubr.bf16.mxu0 %v365
  %1367 = vmatmul.mubr.bf16.gmra.mrb[0].mxu0 %v364
  %v1368 = vpop.f32.mrb[0].mxu0
  %v1369 = vadd.f32 %v1288, %v1368
  %v1370 = vpop.f32.mrb[0].mxu0
  %v1371 = vadd.f32 %v1290, %v1370
  %v1372 = vpop.f32.mrb[0].mxu0
  %v1373 = vadd.f32 %v1292, %v1372
  %v1374 = vpop.f32.mrb[0].mxu0
  %v1375 = vadd.f32 %v1294, %v1374
  %1376 = vmatprep.mubr.bf16.mxu0 %v374
  %1377 = vmatmul.mubr.bf16.gmra.mrb[0].mxu0 %v373
  %v1378 = vpop.f32.mrb[0].mxu0
  %v1379 = vadd.f32 %v1298, %v1378
  %v1380 = vpop.f32.mrb[0].mxu0
  %v1381 = vadd.f32 %v1300, %v1380
  %v1382 = vpop.f32.mrb[0].mxu0
  %v1383 = vadd.f32 %v1302, %v1382
  %v1384 = vpop.f32.mrb[0].mxu0
  %v1385 = vadd.f32 %v1304, %v1384
  %1386 = vmatprep.mubr.bf16.mxu0 %v383
  %1387 = vmatmul.mubr.bf16.gmra.mrb[0].mxu0 %v382
  %v1388 = vpop.f32.mrb[0].mxu0
  %v1389 = vadd.f32 %v1308, %v1388
  %v1390 = vpop.f32.mrb[0].mxu0
  %v1391 = vadd.f32 %v1310, %v1390
  %v1392 = vpop.f32.mrb[0].mxu0
  %v1393 = vpop.f32.mrb[0].mxu0
  %1394 = vdwg.mxu0
  %1395 = vmatprep.subr.bf16.mxu0 %v961
  %1396 = vmatpush1.bf16.msra.mxu0 %v960
  %1397 = vmatprep.subr.bf16.mxu0 %v963
  %1398 = vmatpush1.bf16.msra.mxu0 %v962
  %1399 = vmatprep.subr.bf16.mxu0 %v965
  %1400 = vmatpush1.bf16.msra.mxu0 %v964
  %1401 = vmatprep.subr.bf16.mxu0 %v967
  %1402 = vmatpush1.bf16.msra.mxu0 %v966
  %1403 = vmatprep.subr.bf16.mxu0 %v969
  %1404 = vmatpush1.bf16.msra.mxu0 %v968
  %1405 = vmatprep.subr.bf16.mxu0 %v971
  %1406 = vmatpush1.bf16.msra.mxu0 %v970
  %1407 = vmatprep.subr.bf16.mxu0 %v973
  %1408 = vmatpush1.bf16.msra.mxu0 %v972
  %1409 = vmatprep.subr.bf16.mxu0 %v975
  %1410 = vmatpush1.bf16.msra.mxu0 %v974
  %1411 = vmatprep.subr.bf16.mxu0 %v977
  %1412 = vmatpush1.bf16.msra.mxu0 %v976
  %1413 = vmatprep.subr.bf16.mxu0 %v979
  %1414 = vmatpush1.bf16.msra.mxu0 %v978
  %1415 = vmatprep.subr.bf16.mxu0 %v981
  %1416 = vmatpush1.bf16.msra.mxu0 %v980
  %1417 = vmatprep.subr.bf16.mxu0 %v983
  %1418 = vmatpush1.bf16.msra.mxu0 %v982
  %1419 = vmatprep.subr.bf16.mxu0 %v985
  %1420 = vmatpush1.bf16.msra.mxu0 %v984
  %1421 = vmatprep.subr.bf16.mxu0 %v987
  %1422 = vmatpush1.bf16.msra.mxu0 %v986
  %1423 = vmatprep.subr.bf16.mxu0 %v989
  %1424 = vmatpush1.bf16.msra.mxu0 %v988
  %1425 = vmatprep.subr.bf16.mxu0 %v991
  %1426 = vmatpush1.bf16.msra.mxu0 %v990
  %1427 = vmatprep.mubr.bf16.mxu0 %v349
  %1428 = vmatmul.mubr.bf16.gmra.mrb[0].mxu0 %v348
  %v1429 = vpop.f32.mrb[0].mxu0
  %v1430 = vadd.f32 %v1349, %v1429
  %v1431 = vpop.f32.mrb[0].mxu0
  %v1432 = vadd.f32 %v1351, %v1431
  %v1433 = vpop.f32.mrb[0].mxu0
  %v1434 = vadd.f32 %v1353, %v1433
  %v1435 = vpop.f32.mrb[0].mxu0
  %v1436 = vadd.f32 %v1355, %v1435
  %1437 = vmatprep.mubr.bf16.mxu0 %v358
  %1438 = vmatmul.mubr.bf16.gmra.mrb[0].mxu0 %v357
  %v1439 = vpop.f32.mrb[0].mxu0
  %v1440 = vadd.f32 %v1359, %v1439
  %v1441 = vpop.f32.mrb[0].mxu0
  %v1442 = vadd.f32 %v1361, %v1441
  %v1443 = vpop.f32.mrb[0].mxu0
  %v1444 = vadd.f32 %v1363, %v1443
  %v1445 = vpop.f32.mrb[0].mxu0
  %v1446 = vadd.f32 %v1365, %v1445
  %1447 = vmatprep.mubr.bf16.mxu0 %v367
  %1448 = vmatmul.mubr.bf16.gmra.mrb[0].mxu0 %v366
  %v1449 = vpop.f32.mrb[0].mxu0
  %v1450 = vadd.f32 %v1369, %v1449
  %v1451 = vpop.f32.mrb[0].mxu0
  %v1452 = vadd.f32 %v1371, %v1451
  %v1453 = vpop.f32.mrb[0].mxu0
  %v1454 = vadd.f32 %v1373, %v1453
  %v1455 = vpop.f32.mrb[0].mxu0
  %v1456 = vadd.f32 %v1375, %v1455
  %1457 = vmatprep.mubr.bf16.mxu0 %v376
  %1458 = vmatmul.mubr.bf16.gmra.mrb[0].mxu0 %v375
  %v1459 = vpop.f32.mrb[0].mxu0
  %v1460 = vadd.f32 %v1379, %v1459
  %v1461 = vpop.f32.mrb[0].mxu0
  %v1462 = vadd.f32 %v1381, %v1461
  %v1463 = vpop.f32.mrb[0].mxu0
  %v1464 = vadd.f32 %v1383, %v1463
  %v1465 = vpop.f32.mrb[0].mxu0
  %v1466 = vadd.f32 %v1385, %v1465
  %1467 = vmatprep.mubr.bf16.mxu0 %v385
  %1468 = vmatmul.mubr.bf16.gmra.mrb[0].mxu0 %v384
  %v1469 = vpop.f32.mrb[0].mxu0
  %v1470 = vadd.f32 %v1389, %v1469
  %v1471 = vpop.f32.mrb[0].mxu0
  %v1472 = vadd.f32 %v1391, %v1471
  %v1473 = vpop.f32.mrb[0].mxu0
  %v1474 = vpop.f32.mrb[0].mxu0
  %1475 = vdwg.mxu0
  %1476 = vmatprep.subr.bf16.mxu0 %v993
  %1477 = vmatpush1.bf16.msra.mxu0 %v992
  %1478 = vmatprep.subr.bf16.mxu0 %v995
  %1479 = vmatpush1.bf16.msra.mxu0 %v994
  %1480 = vmatprep.subr.bf16.mxu0 %v997
  %1481 = vmatpush1.bf16.msra.mxu0 %v996
  %1482 = vmatprep.subr.bf16.mxu0 %v999
  %1483 = vmatpush1.bf16.msra.mxu0 %v998
  %1484 = vmatprep.subr.bf16.mxu0 %v1001
  %1485 = vmatpush1.bf16.msra.mxu0 %v1000
  %1486 = vmatprep.subr.bf16.mxu0 %v1003
  %1487 = vmatpush1.bf16.msra.mxu0 %v1002
  %1488 = vmatprep.subr.bf16.mxu0 %v1005
  %1489 = vmatpush1.bf16.msra.mxu0 %v1004
  %1490 = vmatprep.subr.bf16.mxu0 %v1007
  %1491 = vmatpush1.bf16.msra.mxu0 %v1006
  %1492 = vmatprep.subr.bf16.mxu0 0
  %1493 = vmatpush1.bf16.msra.mxu0 0
  %1494 = vmatprep.subr.bf16.mxu0 0
  %1495 = vmatpush1.bf16.msra.mxu0 0
  %1496 = vmatprep.subr.bf16.mxu0 0
  %1497 = vmatpush1.bf16.msra.mxu0 0
  %1498 = vmatprep.subr.bf16.mxu0 0
  %1499 = vmatpush1.bf16.msra.mxu0 0
  %1500 = vmatprep.subr.bf16.mxu0 0
  %1501 = vmatpush1.bf16.msra.mxu0 0
  %1502 = vmatprep.subr.bf16.mxu0 0
  %1503 = vmatpush1.bf16.msra.mxu0 0
  %1504 = vmatprep.subr.bf16.mxu0 0
  %1505 = vmatpush1.bf16.msra.mxu0 0
  %1506 = vmatprep.subr.bf16.mxu0 0
  %1507 = vmatpush1.bf16.msra.mxu0 0
  %1508 = vmatprep.mubr.bf16.mxu0 0
  %1509 = vmatmul.mubr.bf16.gmra.mrb[0].mxu0 %v350
  %v1510 = vpop.f32.mrb[0].mxu0
  %v1511 = vadd.f32 %v1430, %v1510
  %v1512 = vpop.f32.mrb[0].mxu0
  %v1513 = vadd.f32 %v1432, %v1512
  %v1514 = vpop.f32.mrb[0].mxu0
  %v1515 = vadd.f32 %v1434, %v1514
  %v1516 = vpop.f32.mrb[0].mxu0
  %v1517 = vadd.f32 %v1436, %v1516
  %1518 = vmatprep.mubr.bf16.mxu0 0
  %1519 = vmatmul.mubr.bf16.gmra.mrb[0].mxu0 %v359
  %v1520 = vpop.f32.mrb[0].mxu0
  %v1521 = vadd.f32 %v1440, %v1520
  %v1522 = vpop.f32.mrb[0].mxu0
  %v1523 = vadd.f32 %v1442, %v1522
  %v1524 = vpop.f32.mrb[0].mxu0
  %v1525 = vadd.f32 %v1444, %v1524
  %v1526 = vpop.f32.mrb[0].mxu0
  %v1527 = vadd.f32 %v1446, %v1526
  %1528 = vmatprep.mubr.bf16.mxu0 0
  %1529 = vmatmul.mubr.bf16.gmra.mrb[0].mxu0 %v368
  %v1530 = vpop.f32.mrb[0].mxu0
  %v1531 = vadd.f32 %v1450, %v1530
  %v1532 = vpop.f32.mrb[0].mxu0
  %v1533 = vadd.f32 %v1452, %v1532
  %v1534 = vpop.f32.mrb[0].mxu0
  %v1535 = vadd.f32 %v1454, %v1534
  %v1536 = vpop.f32.mrb[0].mxu0
  %v1537 = vadd.f32 %v1456, %v1536
  %1538 = vmatprep.mubr.bf16.mxu0 0
  %1539 = vmatmul.mubr.bf16.gmra.mrb[0].mxu0 %v377
  %v1540 = vpop.f32.mrb[0].mxu0
  %v1541 = vadd.f32 %v1460, %v1540
  %v1542 = vpop.f32.mrb[0].mxu0
  %v1543 = vadd.f32 %v1462, %v1542
  %v1544 = vpop.f32.mrb[0].mxu0
  %v1545 = vadd.f32 %v1464, %v1544
  %v1546 = vpop.f32.mrb[0].mxu0
  %v1547 = vadd.f32 %v1466, %v1546
  %1548 = vmatprep.mubr.bf16.mxu0 0
  %1549 = vmatmul.mubr.bf16.gmra.mrb[0].mxu0 %v386
  %v1550 = vpop.f32.mrb[0].mxu0
  %v1551 = vadd.f32 %v1470, %v1550
  %v1552 = vpop.f32.mrb[0].mxu0
  %v1553 = vadd.f32 %v1472, %v1552
  %v1554 = vpop.f32.mrb[0].mxu0
  %v1555 = vpop.f32.mrb[0].mxu0
  %1556 = vdwg.mxu0
  %v1557 = vmax.f32 %v1511, 0.0
  %v1558 = vmax.f32 %v1513, 0.0
  %v1559 = vmax.f32 %v1515, 0.0
  %v1560 = vmax.f32 %v1517, 0.0
  %v1561 = vmax.f32 %v1521, 0.0
  %v1562 = vmax.f32 %v1523, 0.0
  %v1563 = vmax.f32 %v1525, 0.0
  %v1564 = vmax.f32 %v1527, 0.0
  %v1565 = vmax.f32 %v1531, 0.0
  %v1566 = vmax.f32 %v1533, 0.0
  %v1567 = vmax.f32 %v1535, 0.0
  %v1568 = vmax.f32 %v1537, 0.0
  %v1569 = vmax.f32 %v1541, 0.0
  %v1570 = vmax.f32 %v1543, 0.0
  %v1571 = vmax.f32 %v1545, 0.0
  %v1572 = vmax.f32 %v1547, 0.0
  %v1573 = vmax.f32 %v1551, 0.0
  %v1574 = vmax.f32 %v1553, 0.0
  %1575 = vst [vmem:[%s3] sm:$0xff] %v1557
  %1576 = vst [vmem:[%s3 + $0x8] sm:$0xff] %v1558
  %1577 = vst [vmem:[%s3 + $0x10] sm:$0xff] %v1559
  %1578 = vst [vmem:[%s3 + $0x18] sm:$0xff] %v1560
  %1579 = vst [vmem:[%s3 + $0x20] sm:$0xff] %v1561
  %1580 = vst [vmem:[%s3 + $0x28] sm:$0xff] %v1562
  %1581 = vst [vmem:[%s3 + $0x30] sm:$0xff] %v1563
  %1582 = vst [vmem:[%s3 + $0x38] sm:$0xff] %v1564
  %1583 = vst [vmem:[%s3 + $0x40] sm:$0xff] %v1565
  %1584 = vst [vmem:[%s3 + $0x48] sm:$0xff] %v1566
  %1585 = vst [vmem:[%s3 + $0x50] sm:$0xff] %v1567
  %1586 = vst [vmem:[%s3 + $0x58] sm:$0xff] %v1568
  %1587 = vst [vmem:[%s3 + $0x60] sm:$0xff] %v1569
  %1588 = vst [vmem:[%s3 + $0x68] sm:$0xff] %v1570
  %1589 = vst [vmem:[%s3 + $0x70] sm:$0xff] %v1571
  %1590 = vst [vmem:[%s3 + $0x78] sm:$0xff] %v1572
  %1591 = vst [vmem:[%s3 + $0x80] sm:$0xff] %v1573
  %1592 = vst [vmem:[%s3 + $0x88] sm:$0xff] %v1574
  // Predicated region
  $region14: #{conv_ae_lstm_forward.6} parent=0 // pred_check
    _
  $region15: #{conv_ae_lstm_forward.6} parent=0 // pred_check_branch
    %1594 = sbr.rel (0) target = $region17
  $region16: #{conv_ae_lstm_forward.6} parent=0 // pred_region
    _
  $region17: #{conv_ae_lstm_forward.6} parent=0 // pred_fallthru
    _
  // Predicated region
  $region18: #{conv_ae_lstm_forward.6} parent=0 // pred_check
    _
  $region19: #{conv_ae_lstm_forward.6} parent=0 // pred_check_branch
    %1596 = sbr.rel (0) target = $region21
  $region20: #{conv_ae_lstm_forward.6} parent=0 // pred_region
    _
  $region21: #{conv_ae_lstm_forward.6} parent=0 // pred_fallthru
    _

// kernel: conv_ae_lstm_forward.7
$region0: #{conv_ae_lstm_forward.7}
  #allocation0 [shape = 'u32[]', space=smem, size = 0x4, offset = 0x4, fixed_abs, tag = 'smem constant byte address 0x4 - core index']
  #allocation1 [shape = 'u32[144,128]{1,0:T(1,128)}', space=vmem, size = 0x12000, scoped, tag = 'internal scratch']
  %s0 = inlined_call_operand.vmem [shape: bf16[512,1664], index: 0, kind: input, shape index: {}]
  %s1 = inlined_call_operand.vmem [shape: bf16[1664,128], index: 1, kind: input, shape index: {}]
  %s2 = inlined_call_operand.vmem [shape: f32[1,128], index: 2, kind: input, shape index: {}]
  %s3 = inlined_call_operand.vmem [shape: f32[512,128], index: 3, kind: output, shape index: {}]
  %s4 = sld [smem:[#allocation0]]
  $region45: #{conv_ae_lstm_forward.7} parent=0
    _
  %s6 = ssub.s32 1, %s4
  %s7 = scalar_select 0, %s6, %s4
  loop: start=0, step=1, limit=4
  $region2: #{conv_ae_lstm_forward.7} parent=0 // loop_pre_header
    _
  $region3: #{conv_ae_lstm_forward.7} parent=0 // loop_header
    %s9 = sphi 0, %s13
    %p10 = scmp.ge.s32.totalorder %s9, 4
    %s19 = sphi 0, %s21
    %s22 = sphi 0, %s19
    %s23 = sphi 0, %s22
    %s39 = sphi 0, %s23
    %s43 = sphi 0, %s43
    %s45 = sphi 0, %s43
    %s46 = sphi 0, %s45
    %s60 = sphi 0, %s46
    %s64 = sphi 0, %s64
    %s66 = sphi 0, %s64
    %s67 = sphi 0, %s66
    %s81 = sphi 0, %s67
    %s87 = sphi 0, %s89
    %s90 = sphi 0, %s87
    %s91 = sphi 0, %s90
    %s107 = sphi 0, %s91
  $region4: #{conv_ae_lstm_forward.7} parent=0 // loop_header_branch
    %12 = sbr.rel (%p10) target = $region8
  $region5: #{conv_ae_lstm_forward.7} parent=0 // loop_body
    %s14 = ssub.s32 %s9, 1
    %s15 = ssub.s32 %s9, 2
    %s16 = sadd.s32 %s9, 1
    %s17 = ssub.s32 %s9, %s16
    %p18 = scmp.eq.s32.totalorder %s17, 0
    %s20 = sadd.s32 %s19, 1
    %s21 = scalar_select %p18, %s19, %s20
    %p24 = pneg %p18
    %p25 = scmp.eq.s32.totalorder %s9, 1
    %p26 = por %p24, %p25
    %p27 = scmp.ne.s32.totalorder %s19, %s22
    %p28 = scmp.eq.s32.totalorder %s9, 0
    %p29 = por %p27, %p28
    %p30 = scmp.ne.s32.totalorder %s19, %s22
    %p31 = scmp.eq.s32.totalorder %s14, 1
    %p32 = por %p30, %p31
    %p33 = scmp.ne.s32.totalorder %s22, %s23
    %p34 = scmp.eq.s32.totalorder %s14, 0
    %p35 = por %p33, %p34
    %p36 = scmp.ne.s32.totalorder %s22, %s23
    %p37 = scmp.eq.s32.totalorder %s15, 1
    %p38 = por %p36, %p37
    %p40 = scmp.ne.s32.totalorder %s23, %s39
    %p41 = scmp.eq.s32.totalorder %s15, 0
    %p42 = por %p40, %p41
    %s44 = sadd.s32 %s43, 1
    %p47 = scmp.eq.s32.totalorder %s9, 1
    %p48 = scmp.ne.s32.totalorder %s43, %s45
    %p49 = scmp.eq.s32.totalorder %s9, 0
    %p50 = por %p48, %p49
    %p51 = scmp.ne.s32.totalorder %s43, %s45
    %p52 = scmp.eq.s32.totalorder %s14, 1
    %p53 = por %p51, %p52
    %p54 = scmp.ne.s32.totalorder %s45, %s46
    %p55 = scmp.eq.s32.totalorder %s14, 0
    %p56 = por %p54, %p55
    %p57 = scmp.ne.s32.totalorder %s45, %s46
    %p58 = scmp.eq.s32.totalorder %s15, 1
    %p59 = por %p57, %p58
    %p61 = scmp.ne.s32.totalorder %s46, %s60
    %p62 = scmp.eq.s32.totalorder %s15, 0
    %p63 = por %p61, %p62
    %s65 = sadd.s32 %s64, 1
    %p68 = scmp.eq.s32.totalorder %s9, 1
    %p69 = scmp.ne.s32.totalorder %s64, %s66
    %p70 = scmp.eq.s32.totalorder %s9, 0
    %p71 = por %p69, %p70
    %p72 = scmp.ne.s32.totalorder %s64, %s66
    %p73 = scmp.eq.s32.totalorder %s14, 1
    %p74 = por %p72, %p73
    %p75 = scmp.ne.s32.totalorder %s66, %s67
    %p76 = scmp.eq.s32.totalorder %s14, 0
    %p77 = por %p75, %p76
    %p78 = scmp.ne.s32.totalorder %s66, %s67
    %p79 = scmp.eq.s32.totalorder %s15, 1
    %p80 = por %p78, %p79
    %p82 = scmp.ne.s32.totalorder %s67, %s81
    %p83 = scmp.eq.s32.totalorder %s15, 0
    %p84 = por %p82, %p83
    %s85 = ssub.s32 %s9, %s16
    %p86 = scmp.eq.s32.totalorder %s85, 0
    %s88 = sadd.s32 %s87, 1
    %s89 = scalar_select %p86, %s87, %s88
    %p92 = pneg %p86
    %p93 = scmp.eq.s32.totalorder %s9, 1
    %p94 = por %p92, %p93
    %p95 = scmp.ne.s32.totalorder %s87, %s90
    %p96 = scmp.eq.s32.totalorder %s9, 0
    %p97 = por %p95, %p96
    %p98 = scmp.ne.s32.totalorder %s87, %s90
    %p99 = scmp.eq.s32.totalorder %s14, 1
    %p100 = por %p98, %p99
    %p101 = scmp.ne.s32.totalorder %s90, %s91
    %p102 = scmp.eq.s32.totalorder %s14, 0
    %p103 = por %p101, %p102
    %p104 = scmp.ne.s32.totalorder %s90, %s91
    %p105 = scmp.eq.s32.totalorder %s15, 1
    %p106 = por %p104, %p105
    %p108 = scmp.ne.s32.totalorder %s91, %s107
    %p109 = scmp.eq.s32.totalorder %s15, 0
    %p110 = por %p108, %p109
    %p111 = scmp.le.s32.totalorder 1, %s9
    %p112 = scmp.lt.s32.totalorder %s9, 3
    %p113 = pnand %p111, %p112
    %p114 = pneg %p113
    // Predicated region
    $region9: #{conv_ae_lstm_forward.7} parent=5 // pred_check
      _
    $region10: #{conv_ae_lstm_forward.7} parent=5 // pred_check_branch
      %116 = sbr.rel (%p113) target = $region12
    $region11: #{conv_ae_lstm_forward.7} parent=5 // pred_region
      %s117 = ssub.s32 %s9, 1
      // Predicated region
      $region13: #{conv_ae_lstm_forward.7} parent=11 // pred_check
        %p118 = pneg %p56
      $region14: #{conv_ae_lstm_forward.7} parent=11 // pred_check_branch
        %120 = sbr.rel (%p118) target = $region16
      $region15: #{conv_ae_lstm_forward.7} parent=11 // pred_region
        _
      $region16: #{conv_ae_lstm_forward.7} parent=11 // pred_fallthru
        _
      // Predicated region
      $region17: #{conv_ae_lstm_forward.7} parent=11 // pred_check
        %p121 = pneg %p77
      $region18: #{conv_ae_lstm_forward.7} parent=11 // pred_check_branch
        %123 = sbr.rel (%p121) target = $region20
      $region19: #{conv_ae_lstm_forward.7} parent=11 // pred_region
        _
      $region20: #{conv_ae_lstm_forward.7} parent=11 // pred_fallthru
        _
    $region12: #{conv_ae_lstm_forward.7} parent=5 // pred_fallthru
      _
    %p124 = scmp.lt.s32.totalorder %s9, 2
    // Predicated region
    $region21: #{conv_ae_lstm_forward.7} parent=5 // pred_check
      %p125 = pneg %p124
    $region22: #{conv_ae_lstm_forward.7} parent=5 // pred_check_branch
      %127 = sbr.rel (%p125) target = $region24
    $region23: #{conv_ae_lstm_forward.7} parent=5 // pred_region
      // Predicated region
      $region25: #{conv_ae_lstm_forward.7} parent=23 // pred_check
        %p128 = pneg %p29
      $region26: #{conv_ae_lstm_forward.7} parent=23 // pred_check_branch
        %130 = sbr.rel (%p128) target = $region28
      $region27: #{conv_ae_lstm_forward.7} parent=23 // pred_region
        %s131 = smul.u32 32, %s9
        %p132 = scmp.lt.s32.totalorder %s131, 63
        %s133 = scalar_select %p132, %s131, 63
        %s134 = smul.addr %s133, 13
        %s135 = smul.addr %s134, 4
        %s136 = scalar_lea.vmem %s0, %s135
        %s137 = smul.u32 32, %s9
      $region28: #{conv_ae_lstm_forward.7} parent=23 // pred_fallthru
        _
    $region24: #{conv_ae_lstm_forward.7} parent=5 // pred_fallthru
      _
    %p138 = scmp.le.s32.totalorder 1, %s9
    %p139 = scmp.lt.s32.totalorder %s9, 3
    %p140 = pnand %p138, %p139
    %p141 = pneg %p140
    // Predicated region
    $region29: #{conv_ae_lstm_forward.7} parent=5 // pred_check
      _
    $region30: #{conv_ae_lstm_forward.7} parent=5 // pred_check_branch
      %143 = sbr.rel (%p140) target = $region32
    $region31: #{conv_ae_lstm_forward.7} parent=5 // pred_region
      %s144 = ssub.s32 %s9, 1
      %s145 = smul.u32 32, %s14
      %p146 = scmp.lt.s32.totalorder %s145, 63
      %s147 = scalar_select %p146, %s145, 63
      %s148 = smul.addr %s147, 13
      %s149 = smul.addr %s148, 4
      %s150 = scalar_lea.vmem %s0, %s149
      %p151 = pneg %p35
      %p152 = pneg %p32
      %p153 = pneg %p56
      %p154 = pneg %p53
      %p155 = pneg %p77
      %p156 = pneg %p74
      %p157 = pneg %p103
      %p158 = pneg %p100
      %s159 = smul.u32 32, %s14
      %p160 = scmp.lt.s32.totalorder %s159, 63
      %s161 = scalar_select %p160, %s159, 63
      %s162 = smul.addr %s161, 8
      %s163 = scalar_lea.vmem %s3, %s162
      %s164 = smul.u32 32, %s14
      %p165 = scmp.lt.s32.totalorder %s164, 63
      %s166 = scalar_select %p165, %s164, 63
      %s167 = smul.addr %s166, 13
      %s168 = smul.addr %s167, 4
      %s169 = scalar_lea.vmem %s0, %s168
      %s170 = smul.u32 32, %s14
      %s171 = smul.u32 32, %s14
      %p172 = scmp.lt.s32.totalorder %s171, 63
      %s173 = scalar_select %p172, %s171, 63
      %s174 = smul.addr %s173, 8
      %s175 = scalar_lea.vmem %s3, %s174
      %s176 = smul.u32 32, %s14
      %v178 = vld [vmem:[%s169] sm:$0xff]
      %v179 = vld [vmem:[%s169 + $0x8] sm:$0xff]
      %v180 = vld [vmem:[%s169 + $0x10] sm:$0xff]
      %v181 = vld [vmem:[%s169 + $0x18] sm:$0xff]
      %v182 = vld [vmem:[%s169 + $0x20] sm:$0xff]
      %v183 = vld [vmem:[%s169 + $0x28] sm:$0xff]
      %v184 = vld [vmem:[%s169 + $0x30] sm:$0xf]
      %v185 = vld [vmem:[%s169 + $0x34] sm:$0xff]
      %v186 = vld [vmem:[%s169 + $0x3c] sm:$0xff]
      %v187 = vld [vmem:[%s169 + $0x44] sm:$0xff]
      %v188 = vld [vmem:[%s169 + $0x4c] sm:$0xff]
      %v189 = vld [vmem:[%s169 + $0x54] sm:$0xff]
      %v190 = vld [vmem:[%s169 + $0x5c] sm:$0xff]
      %v191 = vld [vmem:[%s169 + $0x64] sm:$0xf]
      %v192 = vld [vmem:[%s169 + $0x68] sm:$0xff]
      %v193 = vld [vmem:[%s169 + $0x70] sm:$0xff]
      %v194 = vld [vmem:[%s169 + $0x78] sm:$0xff]
      %v195 = vld [vmem:[%s169 + $0x80] sm:$0xff]
      %v196 = vld [vmem:[%s169 + $0x88] sm:$0xff]
      %v197 = vld [vmem:[%s169 + $0x90] sm:$0xff]
      %v198 = vld [vmem:[%s169 + $0x98] sm:$0xf]
      %v199 = vld [vmem:[%s169 + $0x9c] sm:$0xff]
      %v200 = vld [vmem:[%s169 + $0xa4] sm:$0xff]
      %v201 = vld [vmem:[%s169 + $0xac] sm:$0xff]
      %v202 = vld [vmem:[%s169 + $0xb4] sm:$0xff]
      %v203 = vld [vmem:[%s169 + $0xbc] sm:$0xff]
      %v204 = vld [vmem:[%s169 + $0xc4] sm:$0xff]
      %v205 = vld [vmem:[%s169 + $0xcc] sm:$0xf]
      %v206 = vld [vmem:[%s169 + $0xd0] sm:$0xff]
      %v207 = vld [vmem:[%s169 + $0xd8] sm:$0xff]
      %v208 = vld [vmem:[%s169 + $0xe0] sm:$0xff]
      %v209 = vld [vmem:[%s169 + $0xe8] sm:$0xff]
      %v210 = vld [vmem:[%s169 + $0xf0] sm:$0xff]
      %v211 = vld [vmem:[%s169 + $0xf8] sm:$0xff]
      %v212 = vld [vmem:[%s169 + $0x100] sm:$0xf]
      %v213 = vld [vmem:[%s169 + $0x104] sm:$0xff]
      %v214 = vld [vmem:[%s169 + $0x10c] sm:$0xff]
      %v215 = vld [vmem:[%s169 + $0x114] sm:$0xff]
      %v216 = vld [vmem:[%s169 + $0x11c] sm:$0xff]
      %v217 = vld [vmem:[%s169 + $0x124] sm:$0xff]
      %v218 = vld [vmem:[%s169 + $0x12c] sm:$0xff]
      %v219 = vld [vmem:[%s169 + $0x134] sm:$0xf]
      %v220 = vld [vmem:[%s169 + $0x138] sm:$0xff]
      %v221 = vld [vmem:[%s169 + $0x140] sm:$0xff]
      %v222 = vld [vmem:[%s169 + $0x148] sm:$0xff]
      %v223 = vld [vmem:[%s169 + $0x150] sm:$0xff]
      %v224 = vld [vmem:[%s169 + $0x158] sm:$0xff]
      %v225 = vld [vmem:[%s169 + $0x160] sm:$0xff]
      %v226 = vld [vmem:[%s169 + $0x168] sm:$0xf]
      %v227 = vld [vmem:[%s169 + $0x16c] sm:$0xff]
      %v228 = vld [vmem:[%s169 + $0x174] sm:$0xff]
      %v229 = vld [vmem:[%s169 + $0x17c] sm:$0xff]
      %v230 = vld [vmem:[%s169 + $0x184] sm:$0xff]
      %v231 = vld [vmem:[%s169 + $0x18c] sm:$0xff]
      %v232 = vld [vmem:[%s169 + $0x194] sm:$0xff]
      %v233 = vld [vmem:[%s169 + $0x19c] sm:$0xf]
      %v234 = vld [vmem:[%s169 + $0x1a0] sm:$0xff]
      %v235 = vld [vmem:[%s169 + $0x1a8] sm:$0xff]
      %v236 = vld [vmem:[%s169 + $0x1b0] sm:$0xff]
      %v237 = vld [vmem:[%s169 + $0x1b8] sm:$0xff]
      %v238 = vld [vmem:[%s169 + $0x1c0] sm:$0xff]
      %v239 = vld [vmem:[%s169 + $0x1c8] sm:$0xff]
      %v240 = vld [vmem:[%s169 + $0x1d0] sm:$0xf]
      %v241 = vld [vmem:[%s169 + $0x1d4] sm:$0xff]
      %v242 = vld [vmem:[%s169 + $0x1dc] sm:$0xff]
      %v243 = vld [vmem:[%s169 + $0x1e4] sm:$0xff]
      %v244 = vld [vmem:[%s169 + $0x1ec] sm:$0xff]
      %v245 = vld [vmem:[%s169 + $0x1f4] sm:$0xff]
      %v246 = vld [vmem:[%s169 + $0x1fc] sm:$0xff]
      %v247 = vld [vmem:[%s169 + $0x204] sm:$0xf]
      %v248 = vld [vmem:[%s169 + $0x208] sm:$0xff]
      %v249 = vld [vmem:[%s169 + $0x210] sm:$0xff]
      %v250 = vld [vmem:[%s169 + $0x218] sm:$0xff]
      %v251 = vld [vmem:[%s169 + $0x220] sm:$0xff]
      %v252 = vld [vmem:[%s169 + $0x228] sm:$0xff]
      %v253 = vld [vmem:[%s169 + $0x230] sm:$0xff]
      %v254 = vld [vmem:[%s169 + $0x238] sm:$0xf]
      %v255 = vld [vmem:[%s169 + $0x23c] sm:$0xff]
      %v256 = vld [vmem:[%s169 + $0x244] sm:$0xff]
      %v257 = vld [vmem:[%s169 + $0x24c] sm:$0xff]
      %v258 = vld [vmem:[%s169 + $0x254] sm:$0xff]
      %v259 = vld [vmem:[%s169 + $0x25c] sm:$0xff]
      %v260 = vld [vmem:[%s169 + $0x264] sm:$0xff]
      %v261 = vld [vmem:[%s169 + $0x26c] sm:$0xf]
      %v262 = vld [vmem:[%s169 + $0x270] sm:$0xff]
      %v263 = vld [vmem:[%s169 + $0x278] sm:$0xff]
      %v264 = vld [vmem:[%s169 + $0x280] sm:$0xff]
      %v265 = vld [vmem:[%s169 + $0x288] sm:$0xff]
      %v266 = vld [vmem:[%s169 + $0x290] sm:$0xff]
      %v267 = vld [vmem:[%s169 + $0x298] sm:$0xff]
      %v268 = vld [vmem:[%s169 + $0x2a0] sm:$0xf]
      %v269 = vld [vmem:[%s169 + $0x2a4] sm:$0xff]
      %v270 = vld [vmem:[%s169 + $0x2ac] sm:$0xff]
      %v271 = vld [vmem:[%s169 + $0x2b4] sm:$0xff]
      %v272 = vld [vmem:[%s169 + $0x2bc] sm:$0xff]
      %v273 = vld [vmem:[%s169 + $0x2c4] sm:$0xff]
      %v274 = vld [vmem:[%s169 + $0x2cc] sm:$0xff]
      %v275 = vld [vmem:[%s169 + $0x2d4] sm:$0xf]
      %v276 = vld [vmem:[%s169 + $0x2d8] sm:$0xff]
      %v277 = vld [vmem:[%s169 + $0x2e0] sm:$0xff]
      %v278 = vld [vmem:[%s169 + $0x2e8] sm:$0xff]
      %v279 = vld [vmem:[%s169 + $0x2f0] sm:$0xff]
      %v280 = vld [vmem:[%s169 + $0x2f8] sm:$0xff]
      %v281 = vld [vmem:[%s169 + $0x300] sm:$0xff]
      %v282 = vld [vmem:[%s169 + $0x308] sm:$0xf]
      %v283 = vld [vmem:[%s169 + $0x30c] sm:$0xff]
      %v284 = vld [vmem:[%s169 + $0x314] sm:$0xff]
      %v285 = vld [vmem:[%s169 + $0x31c] sm:$0xff]
      %v286 = vld [vmem:[%s169 + $0x324] sm:$0xff]
      %v287 = vld [vmem:[%s169 + $0x32c] sm:$0xff]
      %v288 = vld [vmem:[%s169 + $0x334] sm:$0xff]
      %v289 = vld [vmem:[%s169 + $0x33c] sm:$0xf]
      %v290 = vld [vmem:[%s169 + $0x340] sm:$0xff]
      %v291 = vld [vmem:[%s169 + $0x348] sm:$0xff]
      %v292 = vld [vmem:[%s169 + $0x350] sm:$0xff]
      %v293 = vld [vmem:[%s169 + $0x358] sm:$0xff]
      %v294 = vld [vmem:[%s169 + $0x360] sm:$0xff]
      %v295 = vld [vmem:[%s169 + $0x368] sm:$0xff]
      %v296 = vld [vmem:[%s169 + $0x370] sm:$0xf]
      %v297 = vld [vmem:[%s169 + $0x374] sm:$0xff]
      %v298 = vld [vmem:[%s169 + $0x37c] sm:$0xff]
      %v299 = vld [vmem:[%s169 + $0x384] sm:$0xff]
      %v300 = vld [vmem:[%s169 + $0x38c] sm:$0xff]
      %v301 = vld [vmem:[%s169 + $0x394] sm:$0xff]
      %v302 = vld [vmem:[%s169 + $0x39c] sm:$0xff]
      %v303 = vld [vmem:[%s169 + $0x3a4] sm:$0xf]
      %v304 = vld [vmem:[%s169 + $0x3a8] sm:$0xff]
      %v305 = vld [vmem:[%s169 + $0x3b0] sm:$0xff]
      %v306 = vld [vmem:[%s169 + $0x3b8] sm:$0xff]
      %v307 = vld [vmem:[%s169 + $0x3c0] sm:$0xff]
      %v308 = vld [vmem:[%s169 + $0x3c8] sm:$0xff]
      %v309 = vld [vmem:[%s169 + $0x3d0] sm:$0xff]
      %v310 = vld [vmem:[%s169 + $0x3d8] sm:$0xf]
      %v311 = vld [vmem:[%s169 + $0x3dc] sm:$0xff]
      %v312 = vld [vmem:[%s169 + $0x3e4] sm:$0xff]
      %v313 = vld [vmem:[%s169 + $0x3ec] sm:$0xff]
      %v314 = vld [vmem:[%s169 + $0x3f4] sm:$0xff]
      %v315 = vld [vmem:[%s169 + $0x3fc] sm:$0xff]
      %v316 = vld [vmem:[%s169 + $0x404] sm:$0xff]
      %v317 = vld [vmem:[%s169 + $0x40c] sm:$0xf]
      %v318 = vld [vmem:[%s169 + $0x410] sm:$0xff]
      %v319 = vld [vmem:[%s169 + $0x418] sm:$0xff]
      %v320 = vld [vmem:[%s169 + $0x420] sm:$0xff]
      %v321 = vld [vmem:[%s169 + $0x428] sm:$0xff]
      %v322 = vld [vmem:[%s169 + $0x430] sm:$0xff]
      %v323 = vld [vmem:[%s169 + $0x438] sm:$0xff]
      %v324 = vld [vmem:[%s169 + $0x440] sm:$0xf]
      %v325 = vld [vmem:[%s169 + $0x444] sm:$0xff]
      %v326 = vld [vmem:[%s169 + $0x44c] sm:$0xff]
      %v327 = vld [vmem:[%s169 + $0x454] sm:$0xff]
      %v328 = vld [vmem:[%s169 + $0x45c] sm:$0xff]
      %v329 = vld [vmem:[%s169 + $0x464] sm:$0xff]
      %v330 = vld [vmem:[%s169 + $0x46c] sm:$0xff]
      %v331 = vld [vmem:[%s169 + $0x474] sm:$0xf]
      %v332 = vld [vmem:[%s169 + $0x478] sm:$0xff]
      %v333 = vld [vmem:[%s169 + $0x480] sm:$0xff]
      %v334 = vld [vmem:[%s169 + $0x488] sm:$0xff]
      %v335 = vld [vmem:[%s169 + $0x490] sm:$0xff]
      %v336 = vld [vmem:[%s169 + $0x498] sm:$0xff]
      %v337 = vld [vmem:[%s169 + $0x4a0] sm:$0xff]
      %v338 = vld [vmem:[%s169 + $0x4a8] sm:$0xf]
      %v339 = vld [vmem:[%s169 + $0x4ac] sm:$0xff]
      %v340 = vld [vmem:[%s169 + $0x4b4] sm:$0xff]
      %v341 = vld [vmem:[%s169 + $0x4bc] sm:$0xff]
      %v342 = vld [vmem:[%s169 + $0x4c4] sm:$0xff]
      %v343 = vld [vmem:[%s169 + $0x4cc] sm:$0xff]
      %v344 = vld [vmem:[%s169 + $0x4d4] sm:$0xff]
      %v345 = vld [vmem:[%s169 + $0x4dc] sm:$0xf]
      %v346 = vld [vmem:[%s169 + $0x4e0] sm:$0xff]
      %v347 = vld [vmem:[%s169 + $0x4e8] sm:$0xff]
      %v348 = vld [vmem:[%s169 + $0x4f0] sm:$0xff]
      %v349 = vld [vmem:[%s169 + $0x4f8] sm:$0xff]
      %v350 = vld [vmem:[%s169 + $0x500] sm:$0xff]
      %v351 = vld [vmem:[%s169 + $0x508] sm:$0xff]
      %v352 = vld [vmem:[%s169 + $0x510] sm:$0xf]
      %v353 = vld [vmem:[%s169 + $0x514] sm:$0xff]
      %v354 = vld [vmem:[%s169 + $0x51c] sm:$0xff]
      %v355 = vld [vmem:[%s169 + $0x524] sm:$0xff]
      %v356 = vld [vmem:[%s169 + $0x52c] sm:$0xff]
      %v357 = vld [vmem:[%s169 + $0x534] sm:$0xff]
      %v358 = vld [vmem:[%s169 + $0x53c] sm:$0xff]
      %v359 = vld [vmem:[%s169 + $0x544] sm:$0xf]
      %v360 = vld [vmem:[%s169 + $0x548] sm:$0xff]
      %v361 = vld [vmem:[%s169 + $0x550] sm:$0xff]
      %v362 = vld [vmem:[%s169 + $0x558] sm:$0xff]
      %v363 = vld [vmem:[%s169 + $0x560] sm:$0xff]
      %v364 = vld [vmem:[%s169 + $0x568] sm:$0xff]
      %v365 = vld [vmem:[%s169 + $0x570] sm:$0xff]
      %v366 = vld [vmem:[%s169 + $0x578] sm:$0xf]
      %v367 = vld [vmem:[%s169 + $0x57c] sm:$0xff]
      %v368 = vld [vmem:[%s169 + $0x584] sm:$0xff]
      %v369 = vld [vmem:[%s169 + $0x58c] sm:$0xff]
      %v370 = vld [vmem:[%s169 + $0x594] sm:$0xff]
      %v371 = vld [vmem:[%s169 + $0x59c] sm:$0xff]
      %v372 = vld [vmem:[%s169 + $0x5a4] sm:$0xff]
      %v373 = vld [vmem:[%s169 + $0x5ac] sm:$0xf]
      %v374 = vld [vmem:[%s169 + $0x5b0] sm:$0xff]
      %v375 = vld [vmem:[%s169 + $0x5b8] sm:$0xff]
      %v376 = vld [vmem:[%s169 + $0x5c0] sm:$0xff]
      %v377 = vld [vmem:[%s169 + $0x5c8] sm:$0xff]
      %v378 = vld [vmem:[%s169 + $0x5d0] sm:$0xff]
      %v379 = vld [vmem:[%s169 + $0x5d8] sm:$0xff]
      %v380 = vld [vmem:[%s169 + $0x5e0] sm:$0xf]
      %v381 = vld [vmem:[%s169 + $0x5e4] sm:$0xff]
      %v382 = vld [vmem:[%s169 + $0x5ec] sm:$0xff]
      %v383 = vld [vmem:[%s169 + $0x5f4] sm:$0xff]
      %v384 = vld [vmem:[%s169 + $0x5fc] sm:$0xff]
      %v385 = vld [vmem:[%s169 + $0x604] sm:$0xff]
      %v386 = vld [vmem:[%s169 + $0x60c] sm:$0xff]
      %v387 = vld [vmem:[%s169 + $0x614] sm:$0xf]
      %v388 = vld [vmem:[%s169 + $0x618] sm:$0xff]
      %v389 = vld [vmem:[%s169 + $0x620] sm:$0xff]
      %v390 = vld [vmem:[%s169 + $0x628] sm:$0xff]
      %v391 = vld [vmem:[%s169 + $0x630] sm:$0xff]
      %v392 = vld [vmem:[%s169 + $0x638] sm:$0xff]
      %v393 = vld [vmem:[%s169 + $0x640] sm:$0xff]
      %v394 = vld [vmem:[%s169 + $0x648] sm:$0xf]
      %v395 = vld [vmem:[%s169 + $0x64c] sm:$0xff]
      %v396 = vld [vmem:[%s169 + $0x654] sm:$0xff]
      %v397 = vld [vmem:[%s169 + $0x65c] sm:$0xff]
      %v398 = vld [vmem:[%s169 + $0x664] sm:$0xff]
      %v399 = vld [vmem:[%s169 + $0x66c] sm:$0xff]
      %v400 = vld [vmem:[%s169 + $0x674] sm:$0xff]
      %v401 = vld [vmem:[%s169 + $0x67c] sm:$0xf]
      %v402 = vld [vmem:[%s1] sm:$0xf]
      %v403 = vld [vmem:[%s1 + $0x4] sm:$0xf]
      %v404 = vld [vmem:[%s1 + $0x8] sm:$0xf]
      %v405 = vld [vmem:[%s1 + $0xc] sm:$0xf]
      %v406 = vld [vmem:[%s1 + $0x10] sm:$0xf]
      %v407 = vld [vmem:[%s1 + $0x14] sm:$0xf]
      %v408 = vld [vmem:[%s1 + $0x18] sm:$0xf]
      %v409 = vld [vmem:[%s1 + $0x1c] sm:$0xf]
      %v410 = vld [vmem:[%s1 + $0x20] sm:$0xf]
      %v411 = vld [vmem:[%s1 + $0x24] sm:$0xf]
      %v412 = vld [vmem:[%s1 + $0x28] sm:$0xf]
      %v413 = vld [vmem:[%s1 + $0x2c] sm:$0xf]
      %v414 = vld [vmem:[%s1 + $0x30] sm:$0xf]
      %v415 = vld [vmem:[%s1 + $0x34] sm:$0xf]
      %v416 = vld [vmem:[%s1 + $0x38] sm:$0xf]
      %v417 = vld [vmem:[%s1 + $0x3c] sm:$0xf]
      %v418 = vld [vmem:[%s1 + $0x40] sm:$0xf]
      %v419 = vld [vmem:[%s1 + $0x44] sm:$0xf]
      %v420 = vld [vmem:[%s1 + $0x48] sm:$0xf]
      %v421 = vld [vmem:[%s1 + $0x4c] sm:$0xf]
      %v422 = vld [vmem:[%s1 + $0x50] sm:$0xf]
      %v423 = vld [vmem:[%s1 + $0x54] sm:$0xf]
      %v424 = vld [vmem:[%s1 + $0x58] sm:$0xf]
      %v425 = vld [vmem:[%s1 + $0x5c] sm:$0xf]
      %v426 = vld [vmem:[%s1 + $0x60] sm:$0xf]
      %v427 = vld [vmem:[%s1 + $0x64] sm:$0xf]
      %v428 = vld [vmem:[%s1 + $0x68] sm:$0xf]
      %v429 = vld [vmem:[%s1 + $0x6c] sm:$0xf]
      %v430 = vld [vmem:[%s1 + $0x70] sm:$0xf]
      %v431 = vld [vmem:[%s1 + $0x74] sm:$0xf]
      %v432 = vld [vmem:[%s1 + $0x78] sm:$0xf]
      %v433 = vld [vmem:[%s1 + $0x7c] sm:$0xf]
      %v434 = vld [vmem:[%s1 + $0x80] sm:$0xf]
      %v435 = vld [vmem:[%s1 + $0x84] sm:$0xf]
      %v436 = vld [vmem:[%s1 + $0x88] sm:$0xf]
      %v437 = vld [vmem:[%s1 + $0x8c] sm:$0xf]
      %v438 = vld [vmem:[%s1 + $0x90] sm:$0xf]
      %v439 = vld [vmem:[%s1 + $0x94] sm:$0xf]
      %v440 = vld [vmem:[%s1 + $0x98] sm:$0xf]
      %v441 = vld [vmem:[%s1 + $0x9c] sm:$0xf]
      %v442 = vld [vmem:[%s1 + $0xa0] sm:$0xf]
      %v443 = vld [vmem:[%s1 + $0xa4] sm:$0xf]
      %v444 = vld [vmem:[%s1 + $0xa8] sm:$0xf]
      %v445 = vld [vmem:[%s1 + $0xac] sm:$0xf]
      %v446 = vld [vmem:[%s1 + $0xb0] sm:$0xf]
      %v447 = vld [vmem:[%s1 + $0xb4] sm:$0xf]
      %v448 = vld [vmem:[%s1 + $0xb8] sm:$0xf]
      %v449 = vld [vmem:[%s1 + $0xbc] sm:$0xf]
      %v450 = vld [vmem:[%s1 + $0xc0] sm:$0xf]
      %v451 = vld [vmem:[%s1 + $0xc4] sm:$0xf]
      %v452 = vld [vmem:[%s1 + $0xc8] sm:$0xf]
      %v453 = vld [vmem:[%s1 + $0xcc] sm:$0xf]
      %v454 = vld [vmem:[%s1 + $0xd0] sm:$0xf]
      %v455 = vld [vmem:[%s1 + $0xd4] sm:$0xf]
      %v456 = vld [vmem:[%s1 + $0xd8] sm:$0xf]
      %v457 = vld [vmem:[%s1 + $0xdc] sm:$0xf]
      %v458 = vld [vmem:[%s1 + $0xe0] sm:$0xf]
      %v459 = vld [vmem:[%s1 + $0xe4] sm:$0xf]
      %v460 = vld [vmem:[%s1 + $0xe8] sm:$0xf]
      %v461 = vld [vmem:[%s1 + $0xec] sm:$0xf]
      %v462 = vld [vmem:[%s1 + $0xf0] sm:$0xf]
      %v463 = vld [vmem:[%s1 + $0xf4] sm:$0xf]
      %v464 = vld [vmem:[%s1 + $0xf8] sm:$0xf]
      %v465 = vld [vmem:[%s1 + $0xfc] sm:$0xf]
      %v466 = vld [vmem:[%s1 + $0x100] sm:$0xf]
      %v467 = vld [vmem:[%s1 + $0x104] sm:$0xf]
      %v468 = vld [vmem:[%s1 + $0x108] sm:$0xf]
      %v469 = vld [vmem:[%s1 + $0x10c] sm:$0xf]
      %v470 = vld [vmem:[%s1 + $0x110] sm:$0xf]
      %v471 = vld [vmem:[%s1 + $0x114] sm:$0xf]
      %v472 = vld [vmem:[%s1 + $0x118] sm:$0xf]
      %v473 = vld [vmem:[%s1 + $0x11c] sm:$0xf]
      %v474 = vld [vmem:[%s1 + $0x120] sm:$0xf]
      %v475 = vld [vmem:[%s1 + $0x124] sm:$0xf]
      %v476 = vld [vmem:[%s1 + $0x128] sm:$0xf]
      %v477 = vld [vmem:[%s1 + $0x12c] sm:$0xf]
      %v478 = vld [vmem:[%s1 + $0x130] sm:$0xf]
      %v479 = vld [vmem:[%s1 + $0x134] sm:$0xf]
      %v480 = vld [vmem:[%s1 + $0x138] sm:$0xf]
      %v481 = vld [vmem:[%s1 + $0x13c] sm:$0xf]
      %v482 = vld [vmem:[%s1 + $0x140] sm:$0xf]
      %v483 = vld [vmem:[%s1 + $0x144] sm:$0xf]
      %v484 = vld [vmem:[%s1 + $0x148] sm:$0xf]
      %v485 = vld [vmem:[%s1 + $0x14c] sm:$0xf]
      %v486 = vld [vmem:[%s1 + $0x150] sm:$0xf]
      %v487 = vld [vmem:[%s1 + $0x154] sm:$0xf]
      %v488 = vld [vmem:[%s1 + $0x158] sm:$0xf]
      %v489 = vld [vmem:[%s1 + $0x15c] sm:$0xf]
      %v490 = vld [vmem:[%s1 + $0x160] sm:$0xf]
      %v491 = vld [vmem:[%s1 + $0x164] sm:$0xf]
      %v492 = vld [vmem:[%s1 + $0x168] sm:$0xf]
      %v493 = vld [vmem:[%s1 + $0x16c] sm:$0xf]
      %v494 = vld [vmem:[%s1 + $0x170] sm:$0xf]
      %v495 = vld [vmem:[%s1 + $0x174] sm:$0xf]
      %v496 = vld [vmem:[%s1 + $0x178] sm:$0xf]
      %v497 = vld [vmem:[%s1 + $0x17c] sm:$0xf]
      %v498 = vld [vmem:[%s1 + $0x180] sm:$0xf]
      %v499 = vld [vmem:[%s1 + $0x184] sm:$0xf]
      %v500 = vld [vmem:[%s1 + $0x188] sm:$0xf]
      %v501 = vld [vmem:[%s1 + $0x18c] sm:$0xf]
      %v502 = vld [vmem:[%s1 + $0x190] sm:$0xf]
      %v503 = vld [vmem:[%s1 + $0x194] sm:$0xf]
      %v504 = vld [vmem:[%s1 + $0x198] sm:$0xf]
      %v505 = vld [vmem:[%s1 + $0x19c] sm:$0xf]
      %v506 = vld [vmem:[%s1 + $0x1a0] sm:$0xf]
      %v507 = vld [vmem:[%s1 + $0x1a4] sm:$0xf]
      %v508 = vld [vmem:[%s1 + $0x1a8] sm:$0xf]
      %v509 = vld [vmem:[%s1 + $0x1ac] sm:$0xf]
      %v510 = vld [vmem:[%s1 + $0x1b0] sm:$0xf]
      %v511 = vld [vmem:[%s1 + $0x1b4] sm:$0xf]
      %v512 = vld [vmem:[%s1 + $0x1b8] sm:$0xf]
      %v513 = vld [vmem:[%s1 + $0x1bc] sm:$0xf]
      %v514 = vld [vmem:[%s1 + $0x1c0] sm:$0xf]
      %v515 = vld [vmem:[%s1 + $0x1c4] sm:$0xf]
      %v516 = vld [vmem:[%s1 + $0x1c8] sm:$0xf]
      %v517 = vld [vmem:[%s1 + $0x1cc] sm:$0xf]
      %v518 = vld [vmem:[%s1 + $0x1d0] sm:$0xf]
      %v519 = vld [vmem:[%s1 + $0x1d4] sm:$0xf]
      %v520 = vld [vmem:[%s1 + $0x1d8] sm:$0xf]
      %v521 = vld [vmem:[%s1 + $0x1dc] sm:$0xf]
      %v522 = vld [vmem:[%s1 + $0x1e0] sm:$0xf]
      %v523 = vld [vmem:[%s1 + $0x1e4] sm:$0xf]
      %v524 = vld [vmem:[%s1 + $0x1e8] sm:$0xf]
      %v525 = vld [vmem:[%s1 + $0x1ec] sm:$0xf]
      %v526 = vld [vmem:[%s1 + $0x1f0] sm:$0xf]
      %v527 = vld [vmem:[%s1 + $0x1f4] sm:$0xf]
      %v528 = vld [vmem:[%s1 + $0x1f8] sm:$0xf]
      %v529 = vld [vmem:[%s1 + $0x1fc] sm:$0xf]
      %v530 = vld [vmem:[%s1 + $0x200] sm:$0xf]
      %v531 = vld [vmem:[%s1 + $0x204] sm:$0xf]
      %v532 = vld [vmem:[%s1 + $0x208] sm:$0xf]
      %v533 = vld [vmem:[%s1 + $0x20c] sm:$0xf]
      %v534 = vld [vmem:[%s1 + $0x210] sm:$0xf]
      %v535 = vld [vmem:[%s1 + $0x214] sm:$0xf]
      %v536 = vld [vmem:[%s1 + $0x218] sm:$0xf]
      %v537 = vld [vmem:[%s1 + $0x21c] sm:$0xf]
      %v538 = vld [vmem:[%s1 + $0x220] sm:$0xf]
      %v539 = vld [vmem:[%s1 + $0x224] sm:$0xf]
      %v540 = vld [vmem:[%s1 + $0x228] sm:$0xf]
      %v541 = vld [vmem:[%s1 + $0x22c] sm:$0xf]
      %v542 = vld [vmem:[%s1 + $0x230] sm:$0xf]
      %v543 = vld [vmem:[%s1 + $0x234] sm:$0xf]
      %v544 = vld [vmem:[%s1 + $0x238] sm:$0xf]
      %v545 = vld [vmem:[%s1 + $0x23c] sm:$0xf]
      %v546 = vld [vmem:[%s1 + $0x240] sm:$0xf]
      %v547 = vld [vmem:[%s1 + $0x244] sm:$0xf]
      %v548 = vld [vmem:[%s1 + $0x248] sm:$0xf]
      %v549 = vld [vmem:[%s1 + $0x24c] sm:$0xf]
      %v550 = vld [vmem:[%s1 + $0x250] sm:$0xf]
      %v551 = vld [vmem:[%s1 + $0x254] sm:$0xf]
      %v552 = vld [vmem:[%s1 + $0x258] sm:$0xf]
      %v553 = vld [vmem:[%s1 + $0x25c] sm:$0xf]
      %v554 = vld [vmem:[%s1 + $0x260] sm:$0xf]
      %v555 = vld [vmem:[%s1 + $0x264] sm:$0xf]
      %v556 = vld [vmem:[%s1 + $0x268] sm:$0xf]
      %v557 = vld [vmem:[%s1 + $0x26c] sm:$0xf]
      %v558 = vld [vmem:[%s1 + $0x270] sm:$0xf]
      %v559 = vld [vmem:[%s1 + $0x274] sm:$0xf]
      %v560 = vld [vmem:[%s1 + $0x278] sm:$0xf]
      %v561 = vld [vmem:[%s1 + $0x27c] sm:$0xf]
      %v562 = vld [vmem:[%s1 + $0x280] sm:$0xf]
      %v563 = vld [vmem:[%s1 + $0x284] sm:$0xf]
      %v564 = vld [vmem:[%s1 + $0x288] sm:$0xf]
      %v565 = vld [vmem:[%s1 + $0x28c] sm:$0xf]
      %v566 = vld [vmem:[%s1 + $0x290] sm:$0xf]
      %v567 = vld [vmem:[%s1 + $0x294] sm:$0xf]
      %v568 = vld [vmem:[%s1 + $0x298] sm:$0xf]
      %v569 = vld [vmem:[%s1 + $0x29c] sm:$0xf]
      %v570 = vld [vmem:[%s1 + $0x2a0] sm:$0xf]
      %v571 = vld [vmem:[%s1 + $0x2a4] sm:$0xf]
      %v572 = vld [vmem:[%s1 + $0x2a8] sm:$0xf]
      %v573 = vld [vmem:[%s1 + $0x2ac] sm:$0xf]
      %v574 = vld [vmem:[%s1 + $0x2b0] sm:$0xf]
      %v575 = vld [vmem:[%s1 + $0x2b4] sm:$0xf]
      %v576 = vld [vmem:[%s1 + $0x2b8] sm:$0xf]
      %v577 = vld [vmem:[%s1 + $0x2bc] sm:$0xf]
      %v578 = vld [vmem:[%s1 + $0x2c0] sm:$0xf]
      %v579 = vld [vmem:[%s1 + $0x2c4] sm:$0xf]
      %v580 = vld [vmem:[%s1 + $0x2c8] sm:$0xf]
      %v581 = vld [vmem:[%s1 + $0x2cc] sm:$0xf]
      %v582 = vld [vmem:[%s1 + $0x2d0] sm:$0xf]
      %v583 = vld [vmem:[%s1 + $0x2d4] sm:$0xf]
      %v584 = vld [vmem:[%s1 + $0x2d8] sm:$0xf]
      %v585 = vld [vmem:[%s1 + $0x2dc] sm:$0xf]
      %v586 = vld [vmem:[%s1 + $0x2e0] sm:$0xf]
      %v587 = vld [vmem:[%s1 + $0x2e4] sm:$0xf]
      %v588 = vld [vmem:[%s1 + $0x2e8] sm:$0xf]
      %v589 = vld [vmem:[%s1 + $0x2ec] sm:$0xf]
      %v590 = vld [vmem:[%s1 + $0x2f0] sm:$0xf]
      %v591 = vld [vmem:[%s1 + $0x2f4] sm:$0xf]
      %v592 = vld [vmem:[%s1 + $0x2f8] sm:$0xf]
      %v593 = vld [vmem:[%s1 + $0x2fc] sm:$0xf]
      %v594 = vld [vmem:[%s1 + $0x300] sm:$0xf]
      %v595 = vld [vmem:[%s1 + $0x304] sm:$0xf]
      %v596 = vld [vmem:[%s1 + $0x308] sm:$0xf]
      %v597 = vld [vmem:[%s1 + $0x30c] sm:$0xf]
      %v598 = vld [vmem:[%s1 + $0x310] sm:$0xf]
      %v599 = vld [vmem:[%s1 + $0x314] sm:$0xf]
      %v600 = vld [vmem:[%s1 + $0x318] sm:$0xf]
      %v601 = vld [vmem:[%s1 + $0x31c] sm:$0xf]
      %v602 = vld [vmem:[%s1 + $0x320] sm:$0xf]
      %v603 = vld [vmem:[%s1 + $0x324] sm:$0xf]
      %v604 = vld [vmem:[%s1 + $0x328] sm:$0xf]
      %v605 = vld [vmem:[%s1 + $0x32c] sm:$0xf]
      %v606 = vld [vmem:[%s1 + $0x330] sm:$0xf]
      %v607 = vld [vmem:[%s1 + $0x334] sm:$0xf]
      %v608 = vld [vmem:[%s1 + $0x338] sm:$0xf]
      %v609 = vld [vmem:[%s1 + $0x33c] sm:$0xf]
      %v610 = vld [vmem:[%s2] sm:$0x1]
      %v612 = vlaneseq
      %v613 = vshrl.u32 %v612, 7
      %v614 = vsub.s32 0, %v613
      %v615 = vrot.slane %v610, %v614
      %v841 = vunpack.c.l.b16 %v178
      %v842 = vunpack.c.h.b16 %v178
      %v843 = vunpack.c.l.b16 %v179
      %v844 = vunpack.c.h.b16 %v179
      %v845 = vunpack.c.l.b16 %v180
      %v846 = vunpack.c.h.b16 %v180
      %v847 = vunpack.c.l.b16 %v181
      %v848 = vunpack.c.h.b16 %v181
      %v849 = vunpack.c.l.b16 %v182
      %v850 = vunpack.c.h.b16 %v182
      %v851 = vunpack.c.l.b16 %v183
      %v852 = vunpack.c.h.b16 %v183
      %v853 = vunpack.c.l.b16 %v184
      %v854 = vunpack.c.l.b16 %v185
      %v855 = vunpack.c.h.b16 %v185
      %v856 = vunpack.c.l.b16 %v186
      %v857 = vunpack.c.h.b16 %v186
      %v858 = vunpack.c.l.b16 %v187
      %v859 = vunpack.c.h.b16 %v187
      %v860 = vunpack.c.l.b16 %v188
      %v861 = vunpack.c.h.b16 %v188
      %v862 = vunpack.c.l.b16 %v189
      %v863 = vunpack.c.h.b16 %v189
      %v864 = vunpack.c.l.b16 %v190
      %v865 = vunpack.c.h.b16 %v190
      %v866 = vunpack.c.l.b16 %v191
      %v867 = vunpack.c.l.b16 %v192
      %v868 = vunpack.c.h.b16 %v192
      %v869 = vunpack.c.l.b16 %v193
      %v870 = vunpack.c.h.b16 %v193
      %v871 = vunpack.c.l.b16 %v194
      %v872 = vunpack.c.h.b16 %v194
      %v873 = vunpack.c.l.b16 %v195
      %v874 = vunpack.c.h.b16 %v195
      %v875 = vunpack.c.l.b16 %v196
      %v876 = vunpack.c.h.b16 %v196
      %v877 = vunpack.c.l.b16 %v197
      %v878 = vunpack.c.h.b16 %v197
      %v879 = vunpack.c.l.b16 %v198
      %v880 = vunpack.c.l.b16 %v199
      %v881 = vunpack.c.h.b16 %v199
      %v882 = vunpack.c.l.b16 %v200
      %v883 = vunpack.c.h.b16 %v200
      %v884 = vunpack.c.l.b16 %v201
      %v885 = vunpack.c.h.b16 %v201
      %v886 = vunpack.c.l.b16 %v202
      %v887 = vunpack.c.h.b16 %v202
      %v888 = vunpack.c.l.b16 %v203
      %v889 = vunpack.c.h.b16 %v203
      %v890 = vunpack.c.l.b16 %v204
      %v891 = vunpack.c.h.b16 %v204
      %v892 = vunpack.c.l.b16 %v205
      %v893 = vunpack.c.l.b16 %v206
      %v894 = vunpack.c.h.b16 %v206
      %v895 = vunpack.c.l.b16 %v207
      %v896 = vunpack.c.h.b16 %v207
      %v897 = vunpack.c.l.b16 %v208
      %v898 = vunpack.c.h.b16 %v208
      %v899 = vunpack.c.l.b16 %v209
      %v900 = vunpack.c.h.b16 %v209
      %v901 = vunpack.c.l.b16 %v210
      %v902 = vunpack.c.h.b16 %v210
      %v903 = vunpack.c.l.b16 %v211
      %v904 = vunpack.c.h.b16 %v211
      %v905 = vunpack.c.l.b16 %v212
      %v906 = vunpack.c.l.b16 %v213
      %v907 = vunpack.c.h.b16 %v213
      %v908 = vunpack.c.l.b16 %v214
      %v909 = vunpack.c.h.b16 %v214
      %v910 = vunpack.c.l.b16 %v215
      %v911 = vunpack.c.h.b16 %v215
      %v912 = vunpack.c.l.b16 %v216
      %v913 = vunpack.c.h.b16 %v216
      %v914 = vunpack.c.l.b16 %v217
      %v915 = vunpack.c.h.b16 %v217
      %v916 = vunpack.c.l.b16 %v218
      %v917 = vunpack.c.h.b16 %v218
      %v918 = vunpack.c.l.b16 %v219
      %v919 = vunpack.c.l.b16 %v220
      %v920 = vunpack.c.h.b16 %v220
      %v921 = vunpack.c.l.b16 %v221
      %v922 = vunpack.c.h.b16 %v221
      %v923 = vunpack.c.l.b16 %v222
      %v924 = vunpack.c.h.b16 %v222
      %v925 = vunpack.c.l.b16 %v223
      %v926 = vunpack.c.h.b16 %v223
      %v927 = vunpack.c.l.b16 %v224
      %v928 = vunpack.c.h.b16 %v224
      %v929 = vunpack.c.l.b16 %v225
      %v930 = vunpack.c.h.b16 %v225
      %v931 = vunpack.c.l.b16 %v226
      %v932 = vunpack.c.l.b16 %v227
      %v933 = vunpack.c.h.b16 %v227
      %v934 = vunpack.c.l.b16 %v228
      %v935 = vunpack.c.h.b16 %v228
      %v936 = vunpack.c.l.b16 %v229
      %v937 = vunpack.c.h.b16 %v229
      %v938 = vunpack.c.l.b16 %v230
      %v939 = vunpack.c.h.b16 %v230
      %v940 = vunpack.c.l.b16 %v231
      %v941 = vunpack.c.h.b16 %v231
      %v942 = vunpack.c.l.b16 %v232
      %v943 = vunpack.c.h.b16 %v232
      %v944 = vunpack.c.l.b16 %v233
      %v945 = vunpack.c.l.b16 %v234
      %v946 = vunpack.c.h.b16 %v234
      %v947 = vunpack.c.l.b16 %v235
      %v948 = vunpack.c.h.b16 %v235
      %v949 = vunpack.c.l.b16 %v236
      %v950 = vunpack.c.h.b16 %v236
      %v951 = vunpack.c.l.b16 %v237
      %v952 = vunpack.c.h.b16 %v237
      %v953 = vunpack.c.l.b16 %v238
      %v954 = vunpack.c.h.b16 %v238
      %v955 = vunpack.c.l.b16 %v239
      %v956 = vunpack.c.h.b16 %v239
      %v957 = vunpack.c.l.b16 %v240
      %v958 = vunpack.c.l.b16 %v241
      %v959 = vunpack.c.h.b16 %v241
      %v960 = vunpack.c.l.b16 %v242
      %v961 = vunpack.c.h.b16 %v242
      %v962 = vunpack.c.l.b16 %v243
      %v963 = vunpack.c.h.b16 %v243
      %v964 = vunpack.c.l.b16 %v244
      %v965 = vunpack.c.h.b16 %v244
      %v966 = vunpack.c.l.b16 %v245
      %v967 = vunpack.c.h.b16 %v245
      %v968 = vunpack.c.l.b16 %v246
      %v969 = vunpack.c.h.b16 %v246
      %v970 = vunpack.c.l.b16 %v247
      %v971 = vunpack.c.l.b16 %v248
      %v972 = vunpack.c.h.b16 %v248
      %v973 = vunpack.c.l.b16 %v249
      %v974 = vunpack.c.h.b16 %v249
      %v975 = vunpack.c.l.b16 %v250
      %v976 = vunpack.c.h.b16 %v250
      %v977 = vunpack.c.l.b16 %v251
      %v978 = vunpack.c.h.b16 %v251
      %v979 = vunpack.c.l.b16 %v252
      %v980 = vunpack.c.h.b16 %v252
      %v981 = vunpack.c.l.b16 %v253
      %v982 = vunpack.c.h.b16 %v253
      %v983 = vunpack.c.l.b16 %v254
      %v984 = vunpack.c.l.b16 %v255
      %v985 = vunpack.c.h.b16 %v255
      %v986 = vunpack.c.l.b16 %v256
      %v987 = vunpack.c.h.b16 %v256
      %v988 = vunpack.c.l.b16 %v257
      %v989 = vunpack.c.h.b16 %v257
      %v990 = vunpack.c.l.b16 %v258
      %v991 = vunpack.c.h.b16 %v258
      %v992 = vunpack.c.l.b16 %v259
      %v993 = vunpack.c.h.b16 %v259
      %v994 = vunpack.c.l.b16 %v260
      %v995 = vunpack.c.h.b16 %v260
      %v996 = vunpack.c.l.b16 %v261
      %v997 = vunpack.c.l.b16 %v262
      %v998 = vunpack.c.h.b16 %v262
      %v999 = vunpack.c.l.b16 %v263
      %v1000 = vunpack.c.h.b16 %v263
      %v1001 = vunpack.c.l.b16 %v264
      %v1002 = vunpack.c.h.b16 %v264
      %v1003 = vunpack.c.l.b16 %v265
      %v1004 = vunpack.c.h.b16 %v265
      %v1005 = vunpack.c.l.b16 %v266
      %v1006 = vunpack.c.h.b16 %v266
      %v1007 = vunpack.c.l.b16 %v267
      %v1008 = vunpack.c.h.b16 %v267
      %v1009 = vunpack.c.l.b16 %v268
      %v1010 = vunpack.c.l.b16 %v269
      %v1011 = vunpack.c.h.b16 %v269
      %v1012 = vunpack.c.l.b16 %v270
      %v1013 = vunpack.c.h.b16 %v270
      %v1014 = vunpack.c.l.b16 %v271
      %v1015 = vunpack.c.h.b16 %v271
      %v1016 = vunpack.c.l.b16 %v272
      %v1017 = vunpack.c.h.b16 %v272
      %v1018 = vunpack.c.l.b16 %v273
      %v1019 = vunpack.c.h.b16 %v273
      %v1020 = vunpack.c.l.b16 %v274
      %v1021 = vunpack.c.h.b16 %v274
      %v1022 = vunpack.c.l.b16 %v275
      %v1023 = vunpack.c.l.b16 %v276
      %v1024 = vunpack.c.h.b16 %v276
      %v1025 = vunpack.c.l.b16 %v277
      %v1026 = vunpack.c.h.b16 %v277
      %v1027 = vunpack.c.l.b16 %v278
      %v1028 = vunpack.c.h.b16 %v278
      %v1029 = vunpack.c.l.b16 %v279
      %v1030 = vunpack.c.h.b16 %v279
      %v1031 = vunpack.c.l.b16 %v280
      %v1032 = vunpack.c.h.b16 %v280
      %v1033 = vunpack.c.l.b16 %v281
      %v1034 = vunpack.c.h.b16 %v281
      %v1035 = vunpack.c.l.b16 %v282
      %v1036 = vunpack.c.l.b16 %v283
      %v1037 = vunpack.c.h.b16 %v283
      %v1038 = vunpack.c.l.b16 %v284
      %v1039 = vunpack.c.h.b16 %v284
      %v1040 = vunpack.c.l.b16 %v285
      %v1041 = vunpack.c.h.b16 %v285
      %v1042 = vunpack.c.l.b16 %v286
      %v1043 = vunpack.c.h.b16 %v286
      %v1044 = vunpack.c.l.b16 %v287
      %v1045 = vunpack.c.h.b16 %v287
      %v1046 = vunpack.c.l.b16 %v288
      %v1047 = vunpack.c.h.b16 %v288
      %v1048 = vunpack.c.l.b16 %v289
      %v1049 = vunpack.c.l.b16 %v290
      %v1050 = vunpack.c.h.b16 %v290
      %v1051 = vunpack.c.l.b16 %v291
      %v1052 = vunpack.c.h.b16 %v291
      %v1053 = vunpack.c.l.b16 %v292
      %v1054 = vunpack.c.h.b16 %v292
      %v1055 = vunpack.c.l.b16 %v293
      %v1056 = vunpack.c.h.b16 %v293
      %v1057 = vunpack.c.l.b16 %v294
      %v1058 = vunpack.c.h.b16 %v294
      %v1059 = vunpack.c.l.b16 %v295
      %v1060 = vunpack.c.h.b16 %v295
      %v1061 = vunpack.c.l.b16 %v296
      %v1062 = vunpack.c.l.b16 %v297
      %v1063 = vunpack.c.h.b16 %v297
      %v1064 = vunpack.c.l.b16 %v298
      %v1065 = vunpack.c.h.b16 %v298
      %v1066 = vunpack.c.l.b16 %v299
      %v1067 = vunpack.c.h.b16 %v299
      %v1068 = vunpack.c.l.b16 %v300
      %v1069 = vunpack.c.h.b16 %v300
      %v1070 = vunpack.c.l.b16 %v301
      %v1071 = vunpack.c.h.b16 %v301
      %v1072 = vunpack.c.l.b16 %v302
      %v1073 = vunpack.c.h.b16 %v302
      %v1074 = vunpack.c.l.b16 %v303
      %v1075 = vunpack.c.l.b16 %v304
      %v1076 = vunpack.c.h.b16 %v304
      %v1077 = vunpack.c.l.b16 %v305
      %v1078 = vunpack.c.h.b16 %v305
      %v1079 = vunpack.c.l.b16 %v306
      %v1080 = vunpack.c.h.b16 %v306
      %v1081 = vunpack.c.l.b16 %v307
      %v1082 = vunpack.c.h.b16 %v307
      %v1083 = vunpack.c.l.b16 %v308
      %v1084 = vunpack.c.h.b16 %v308
      %v1085 = vunpack.c.l.b16 %v309
      %v1086 = vunpack.c.h.b16 %v309
      %v1087 = vunpack.c.l.b16 %v310
      %v1088 = vunpack.c.l.b16 %v311
      %v1089 = vunpack.c.h.b16 %v311
      %v1090 = vunpack.c.l.b16 %v312
      %v1091 = vunpack.c.h.b16 %v312
      %v1092 = vunpack.c.l.b16 %v313
      %v1093 = vunpack.c.h.b16 %v313
      %v1094 = vunpack.c.l.b16 %v314
      %v1095 = vunpack.c.h.b16 %v314
      %v1096 = vunpack.c.l.b16 %v315
      %v1097 = vunpack.c.h.b16 %v315
      %v1098 = vunpack.c.l.b16 %v316
      %v1099 = vunpack.c.h.b16 %v316
      %v1100 = vunpack.c.l.b16 %v317
      %v1101 = vunpack.c.l.b16 %v318
      %v1102 = vunpack.c.h.b16 %v318
      %v1103 = vunpack.c.l.b16 %v319
      %v1104 = vunpack.c.h.b16 %v319
      %v1105 = vunpack.c.l.b16 %v320
      %v1106 = vunpack.c.h.b16 %v320
      %v1107 = vunpack.c.l.b16 %v321
      %v1108 = vunpack.c.h.b16 %v321
      %v1109 = vunpack.c.l.b16 %v322
      %v1110 = vunpack.c.h.b16 %v322
      %v1111 = vunpack.c.l.b16 %v323
      %v1112 = vunpack.c.h.b16 %v323
      %v1113 = vunpack.c.l.b16 %v324
      %v1114 = vunpack.c.l.b16 %v325
      %v1115 = vunpack.c.h.b16 %v325
      %v1116 = vunpack.c.l.b16 %v326
      %v1117 = vunpack.c.h.b16 %v326
      %v1118 = vunpack.c.l.b16 %v327
      %v1119 = vunpack.c.h.b16 %v327
      %v1120 = vunpack.c.l.b16 %v328
      %v1121 = vunpack.c.h.b16 %v328
      %v1122 = vunpack.c.l.b16 %v329
      %v1123 = vunpack.c.h.b16 %v329
      %v1124 = vunpack.c.l.b16 %v330
      %v1125 = vunpack.c.h.b16 %v330
      %v1126 = vunpack.c.l.b16 %v331
      %v1127 = vunpack.c.l.b16 %v332
      %v1128 = vunpack.c.h.b16 %v332
      %v1129 = vunpack.c.l.b16 %v333
      %v1130 = vunpack.c.h.b16 %v333
      %v1131 = vunpack.c.l.b16 %v334
      %v1132 = vunpack.c.h.b16 %v334
      %v1133 = vunpack.c.l.b16 %v335
      %v1134 = vunpack.c.h.b16 %v335
      %v1135 = vunpack.c.l.b16 %v336
      %v1136 = vunpack.c.h.b16 %v336
      %v1137 = vunpack.c.l.b16 %v337
      %v1138 = vunpack.c.h.b16 %v337
      %v1139 = vunpack.c.l.b16 %v338
      %v1140 = vunpack.c.l.b16 %v339
      %v1141 = vunpack.c.h.b16 %v339
      %v1142 = vunpack.c.l.b16 %v340
      %v1143 = vunpack.c.h.b16 %v340
      %v1144 = vunpack.c.l.b16 %v341
      %v1145 = vunpack.c.h.b16 %v341
      %v1146 = vunpack.c.l.b16 %v342
      %v1147 = vunpack.c.h.b16 %v342
      %v1148 = vunpack.c.l.b16 %v343
      %v1149 = vunpack.c.h.b16 %v343
      %v1150 = vunpack.c.l.b16 %v344
      %v1151 = vunpack.c.h.b16 %v344
      %v1152 = vunpack.c.l.b16 %v345
      %v1153 = vunpack.c.l.b16 %v346
      %v1154 = vunpack.c.h.b16 %v346
      %v1155 = vunpack.c.l.b16 %v347
      %v1156 = vunpack.c.h.b16 %v347
      %v1157 = vunpack.c.l.b16 %v348
      %v1158 = vunpack.c.h.b16 %v348
      %v1159 = vunpack.c.l.b16 %v349
      %v1160 = vunpack.c.h.b16 %v349
      %v1161 = vunpack.c.l.b16 %v350
      %v1162 = vunpack.c.h.b16 %v350
      %v1163 = vunpack.c.l.b16 %v351
      %v1164 = vunpack.c.h.b16 %v351
      %v1165 = vunpack.c.l.b16 %v352
      %v1166 = vunpack.c.l.b16 %v353
      %v1167 = vunpack.c.h.b16 %v353
      %v1168 = vunpack.c.l.b16 %v354
      %v1169 = vunpack.c.h.b16 %v354
      %v1170 = vunpack.c.l.b16 %v355
      %v1171 = vunpack.c.h.b16 %v355
      %v1172 = vunpack.c.l.b16 %v356
      %v1173 = vunpack.c.h.b16 %v356
      %v1174 = vunpack.c.l.b16 %v357
      %v1175 = vunpack.c.h.b16 %v357
      %v1176 = vunpack.c.l.b16 %v358
      %v1177 = vunpack.c.h.b16 %v358
      %v1178 = vunpack.c.l.b16 %v359
      %v1179 = vunpack.c.l.b16 %v360
      %v1180 = vunpack.c.h.b16 %v360
      %v1181 = vunpack.c.l.b16 %v361
      %v1182 = vunpack.c.h.b16 %v361
      %v1183 = vunpack.c.l.b16 %v362
      %v1184 = vunpack.c.h.b16 %v362
      %v1185 = vunpack.c.l.b16 %v363
      %v1186 = vunpack.c.h.b16 %v363
      %v1187 = vunpack.c.l.b16 %v364
      %v1188 = vunpack.c.h.b16 %v364
      %v1189 = vunpack.c.l.b16 %v365
      %v1190 = vunpack.c.h.b16 %v365
      %v1191 = vunpack.c.l.b16 %v366
      %v1192 = vunpack.c.l.b16 %v367
      %v1193 = vunpack.c.h.b16 %v367
      %v1194 = vunpack.c.l.b16 %v368
      %v1195 = vunpack.c.h.b16 %v368
      %v1196 = vunpack.c.l.b16 %v369
      %v1197 = vunpack.c.h.b16 %v369
      %v1198 = vunpack.c.l.b16 %v370
      %v1199 = vunpack.c.h.b16 %v370
      %v1200 = vunpack.c.l.b16 %v371
      %v1201 = vunpack.c.h.b16 %v371
      %v1202 = vunpack.c.l.b16 %v372
      %v1203 = vunpack.c.h.b16 %v372
      %v1204 = vunpack.c.l.b16 %v373
      %v1205 = vunpack.c.l.b16 %v374
      %v1206 = vunpack.c.h.b16 %v374
      %v1207 = vunpack.c.l.b16 %v375
      %v1208 = vunpack.c.h.b16 %v375
      %v1209 = vunpack.c.l.b16 %v376
      %v1210 = vunpack.c.h.b16 %v376
      %v1211 = vunpack.c.l.b16 %v377
      %v1212 = vunpack.c.h.b16 %v377
      %v1213 = vunpack.c.l.b16 %v378
      %v1214 = vunpack.c.h.b16 %v378
      %v1215 = vunpack.c.l.b16 %v379
      %v1216 = vunpack.c.h.b16 %v379
      %v1217 = vunpack.c.l.b16 %v380
      %v1218 = vunpack.c.l.b16 %v381
      %v1219 = vunpack.c.h.b16 %v381
      %v1220 = vunpack.c.l.b16 %v382
      %v1221 = vunpack.c.h.b16 %v382
      %v1222 = vunpack.c.l.b16 %v383
      %v1223 = vunpack.c.h.b16 %v383
      %v1224 = vunpack.c.l.b16 %v384
      %v1225 = vunpack.c.h.b16 %v384
      %v1226 = vunpack.c.l.b16 %v385
      %v1227 = vunpack.c.h.b16 %v385
      %v1228 = vunpack.c.l.b16 %v386
      %v1229 = vunpack.c.h.b16 %v386
      %v1230 = vunpack.c.l.b16 %v387
      %v1231 = vunpack.c.l.b16 %v388
      %v1232 = vunpack.c.h.b16 %v388
      %v1233 = vunpack.c.l.b16 %v389
      %v1234 = vunpack.c.h.b16 %v389
      %v1235 = vunpack.c.l.b16 %v390
      %v1236 = vunpack.c.h.b16 %v390
      %v1237 = vunpack.c.l.b16 %v391
      %v1238 = vunpack.c.h.b16 %v391
      %v1239 = vunpack.c.l.b16 %v392
      %v1240 = vunpack.c.h.b16 %v392
      %v1241 = vunpack.c.l.b16 %v393
      %v1242 = vunpack.c.h.b16 %v393
      %v1243 = vunpack.c.l.b16 %v394
      %v1244 = vunpack.c.l.b16 %v395
      %v1245 = vunpack.c.h.b16 %v395
      %v1246 = vunpack.c.l.b16 %v396
      %v1247 = vunpack.c.h.b16 %v396
      %v1248 = vunpack.c.l.b16 %v397
      %v1249 = vunpack.c.h.b16 %v397
      %v1250 = vunpack.c.l.b16 %v398
      %v1251 = vunpack.c.h.b16 %v398
      %v1252 = vunpack.c.l.b16 %v399
      %v1253 = vunpack.c.h.b16 %v399
      %v1254 = vunpack.c.l.b16 %v400
      %v1255 = vunpack.c.h.b16 %v400
      %v1256 = vunpack.c.l.b16 %v401
      %v1257 = vpack.c.b16 %v854, %v841
      %v1258 = vpack.c.b16 %v855, %v842
      %v1259 = vpack.c.b16 %v856, %v843
      %v1260 = vpack.c.b16 %v857, %v844
      %v1261 = vpack.c.b16 %v858, %v845
      %v1262 = vpack.c.b16 %v859, %v846
      %v1263 = vpack.c.b16 %v860, %v847
      %v1264 = vpack.c.b16 %v861, %v848
      %v1265 = vpack.c.b16 %v862, %v849
      %v1266 = vpack.c.b16 %v863, %v850
      %v1267 = vpack.c.b16 %v864, %v851
      %v1268 = vpack.c.b16 %v865, %v852
      %v1269 = vpack.c.b16 %v866, %v853
      %v1270 = vpack.c.b16 %v880, %v867
      %v1271 = vpack.c.b16 %v881, %v868
      %v1272 = vpack.c.b16 %v882, %v869
      %v1273 = vpack.c.b16 %v883, %v870
      %v1274 = vpack.c.b16 %v884, %v871
      %v1275 = vpack.c.b16 %v885, %v872
      %v1276 = vpack.c.b16 %v886, %v873
      %v1277 = vpack.c.b16 %v887, %v874
      %v1278 = vpack.c.b16 %v888, %v875
      %v1279 = vpack.c.b16 %v889, %v876
      %v1280 = vpack.c.b16 %v890, %v877
      %v1281 = vpack.c.b16 %v891, %v878
      %v1282 = vpack.c.b16 %v892, %v879
      %v1283 = vpack.c.b16 %v906, %v893
      %v1284 = vpack.c.b16 %v907, %v894
      %v1285 = vpack.c.b16 %v908, %v895
      %v1286 = vpack.c.b16 %v909, %v896
      %v1287 = vpack.c.b16 %v910, %v897
      %v1288 = vpack.c.b16 %v911, %v898
      %v1289 = vpack.c.b16 %v912, %v899
      %v1290 = vpack.c.b16 %v913, %v900
      %v1291 = vpack.c.b16 %v914, %v901
      %v1292 = vpack.c.b16 %v915, %v902
      %v1293 = vpack.c.b16 %v916, %v903
      %v1294 = vpack.c.b16 %v917, %v904
      %v1295 = vpack.c.b16 %v918, %v905
      %v1296 = vpack.c.b16 %v932, %v919
      %v1297 = vpack.c.b16 %v933, %v920
      %v1298 = vpack.c.b16 %v934, %v921
      %v1299 = vpack.c.b16 %v935, %v922
      %v1300 = vpack.c.b16 %v936, %v923
      %v1301 = vpack.c.b16 %v937, %v924
      %v1302 = vpack.c.b16 %v938, %v925
      %v1303 = vpack.c.b16 %v939, %v926
      %v1304 = vpack.c.b16 %v940, %v927
      %v1305 = vpack.c.b16 %v941, %v928
      %v1306 = vpack.c.b16 %v942, %v929
      %v1307 = vpack.c.b16 %v943, %v930
      %v1308 = vpack.c.b16 %v944, %v931
      %v1309 = vpack.c.b16 %v958, %v945
      %v1310 = vpack.c.b16 %v959, %v946
      %v1311 = vpack.c.b16 %v960, %v947
      %v1312 = vpack.c.b16 %v961, %v948
      %v1313 = vpack.c.b16 %v962, %v949
      %v1314 = vpack.c.b16 %v963, %v950
      %v1315 = vpack.c.b16 %v964, %v951
      %v1316 = vpack.c.b16 %v965, %v952
      %v1317 = vpack.c.b16 %v966, %v953
      %v1318 = vpack.c.b16 %v967, %v954
      %v1319 = vpack.c.b16 %v968, %v955
      %v1320 = vpack.c.b16 %v969, %v956
      %v1321 = vpack.c.b16 %v970, %v957
      %v1322 = vpack.c.b16 %v984, %v971
      %v1323 = vpack.c.b16 %v985, %v972
      %v1324 = vpack.c.b16 %v986, %v973
      %v1325 = vpack.c.b16 %v987, %v974
      %v1326 = vpack.c.b16 %v988, %v975
      %v1327 = vpack.c.b16 %v989, %v976
      %v1328 = vpack.c.b16 %v990, %v977
      %v1329 = vpack.c.b16 %v991, %v978
      %v1330 = vpack.c.b16 %v992, %v979
      %v1331 = vpack.c.b16 %v993, %v980
      %v1332 = vpack.c.b16 %v994, %v981
      %v1333 = vpack.c.b16 %v995, %v982
      %v1334 = vpack.c.b16 %v996, %v983
      %v1335 = vpack.c.b16 %v1010, %v997
      %v1336 = vpack.c.b16 %v1011, %v998
      %v1337 = vpack.c.b16 %v1012, %v999
      %v1338 = vpack.c.b16 %v1013, %v1000
      %v1339 = vpack.c.b16 %v1014, %v1001
      %v1340 = vpack.c.b16 %v1015, %v1002
      %v1341 = vpack.c.b16 %v1016, %v1003
      %v1342 = vpack.c.b16 %v1017, %v1004
      %v1343 = vpack.c.b16 %v1018, %v1005
      %v1344 = vpack.c.b16 %v1019, %v1006
      %v1345 = vpack.c.b16 %v1020, %v1007
      %v1346 = vpack.c.b16 %v1021, %v1008
      %v1347 = vpack.c.b16 %v1022, %v1009
      %v1348 = vpack.c.b16 %v1036, %v1023
      %v1349 = vpack.c.b16 %v1037, %v1024
      %v1350 = vpack.c.b16 %v1038, %v1025
      %v1351 = vpack.c.b16 %v1039, %v1026
      %v1352 = vpack.c.b16 %v1040, %v1027
      %v1353 = vpack.c.b16 %v1041, %v1028
      %v1354 = vpack.c.b16 %v1042, %v1029
      %v1355 = vpack.c.b16 %v1043, %v1030
      %v1356 = vpack.c.b16 %v1044, %v1031
      %v1357 = vpack.c.b16 %v1045, %v1032
      %v1358 = vpack.c.b16 %v1046, %v1033
      %v1359 = vpack.c.b16 %v1047, %v1034
      %v1360 = vpack.c.b16 %v1048, %v1035
      %v1361 = vpack.c.b16 %v1062, %v1049
      %v1362 = vpack.c.b16 %v1063, %v1050
      %v1363 = vpack.c.b16 %v1064, %v1051
      %v1364 = vpack.c.b16 %v1065, %v1052
      %v1365 = vpack.c.b16 %v1066, %v1053
      %v1366 = vpack.c.b16 %v1067, %v1054
      %v1367 = vpack.c.b16 %v1068, %v1055
      %v1368 = vpack.c.b16 %v1069, %v1056
      %v1369 = vpack.c.b16 %v1070, %v1057
      %v1370 = vpack.c.b16 %v1071, %v1058
      %v1371 = vpack.c.b16 %v1072, %v1059
      %v1372 = vpack.c.b16 %v1073, %v1060
      %v1373 = vpack.c.b16 %v1074, %v1061
      %v1374 = vpack.c.b16 %v1088, %v1075
      %v1375 = vpack.c.b16 %v1089, %v1076
      %v1376 = vpack.c.b16 %v1090, %v1077
      %v1377 = vpack.c.b16 %v1091, %v1078
      %v1378 = vpack.c.b16 %v1092, %v1079
      %v1379 = vpack.c.b16 %v1093, %v1080
      %v1380 = vpack.c.b16 %v1094, %v1081
      %v1381 = vpack.c.b16 %v1095, %v1082
      %v1382 = vpack.c.b16 %v1096, %v1083
      %v1383 = vpack.c.b16 %v1097, %v1084
      %v1384 = vpack.c.b16 %v1098, %v1085
      %v1385 = vpack.c.b16 %v1099, %v1086
      %v1386 = vpack.c.b16 %v1100, %v1087
      %v1387 = vpack.c.b16 %v1114, %v1101
      %v1388 = vpack.c.b16 %v1115, %v1102
      %v1389 = vpack.c.b16 %v1116, %v1103
      %v1390 = vpack.c.b16 %v1117, %v1104
      %v1391 = vpack.c.b16 %v1118, %v1105
      %v1392 = vpack.c.b16 %v1119, %v1106
      %v1393 = vpack.c.b16 %v1120, %v1107
      %v1394 = vpack.c.b16 %v1121, %v1108
      %v1395 = vpack.c.b16 %v1122, %v1109
      %v1396 = vpack.c.b16 %v1123, %v1110
      %v1397 = vpack.c.b16 %v1124, %v1111
      %v1398 = vpack.c.b16 %v1125, %v1112
      %v1399 = vpack.c.b16 %v1126, %v1113
      %v1400 = vpack.c.b16 %v1140, %v1127
      %v1401 = vpack.c.b16 %v1141, %v1128
      %v1402 = vpack.c.b16 %v1142, %v1129
      %v1403 = vpack.c.b16 %v1143, %v1130
      %v1404 = vpack.c.b16 %v1144, %v1131
      %v1405 = vpack.c.b16 %v1145, %v1132
      %v1406 = vpack.c.b16 %v1146, %v1133
      %v1407 = vpack.c.b16 %v1147, %v1134
      %v1408 = vpack.c.b16 %v1148, %v1135
      %v1409 = vpack.c.b16 %v1149, %v1136
      %v1410 = vpack.c.b16 %v1150, %v1137
      %v1411 = vpack.c.b16 %v1151, %v1138
      %v1412 = vpack.c.b16 %v1152, %v1139
      %v1413 = vpack.c.b16 %v1166, %v1153
      %v1414 = vpack.c.b16 %v1167, %v1154
      %v1415 = vpack.c.b16 %v1168, %v1155
      %v1416 = vpack.c.b16 %v1169, %v1156
      %v1417 = vpack.c.b16 %v1170, %v1157
      %v1418 = vpack.c.b16 %v1171, %v1158
      %v1419 = vpack.c.b16 %v1172, %v1159
      %v1420 = vpack.c.b16 %v1173, %v1160
      %v1421 = vpack.c.b16 %v1174, %v1161
      %v1422 = vpack.c.b16 %v1175, %v1162
      %v1423 = vpack.c.b16 %v1176, %v1163
      %v1424 = vpack.c.b16 %v1177, %v1164
      %v1425 = vpack.c.b16 %v1178, %v1165
      %v1426 = vpack.c.b16 %v1192, %v1179
      %v1427 = vpack.c.b16 %v1193, %v1180
      %v1428 = vpack.c.b16 %v1194, %v1181
      %v1429 = vpack.c.b16 %v1195, %v1182
      %v1430 = vpack.c.b16 %v1196, %v1183
      %v1431 = vpack.c.b16 %v1197, %v1184
      %v1432 = vpack.c.b16 %v1198, %v1185
      %v1433 = vpack.c.b16 %v1199, %v1186
      %v1434 = vpack.c.b16 %v1200, %v1187
      %v1435 = vpack.c.b16 %v1201, %v1188
      %v1436 = vpack.c.b16 %v1202, %v1189
      %v1437 = vpack.c.b16 %v1203, %v1190
      %v1438 = vpack.c.b16 %v1204, %v1191
      %v1439 = vpack.c.b16 %v1218, %v1205
      %v1440 = vpack.c.b16 %v1219, %v1206
      %v1441 = vpack.c.b16 %v1220, %v1207
      %v1442 = vpack.c.b16 %v1221, %v1208
      %v1443 = vpack.c.b16 %v1222, %v1209
      %v1444 = vpack.c.b16 %v1223, %v1210
      %v1445 = vpack.c.b16 %v1224, %v1211
      %v1446 = vpack.c.b16 %v1225, %v1212
      %v1447 = vpack.c.b16 %v1226, %v1213
      %v1448 = vpack.c.b16 %v1227, %v1214
      %v1449 = vpack.c.b16 %v1228, %v1215
      %v1450 = vpack.c.b16 %v1229, %v1216
      %v1451 = vpack.c.b16 %v1230, %v1217
      %v1452 = vpack.c.b16 %v1244, %v1231
      %v1453 = vpack.c.b16 %v1245, %v1232
      %v1454 = vpack.c.b16 %v1246, %v1233
      %v1455 = vpack.c.b16 %v1247, %v1234
      %v1456 = vpack.c.b16 %v1248, %v1235
      %v1457 = vpack.c.b16 %v1249, %v1236
      %v1458 = vpack.c.b16 %v1250, %v1237
      %v1459 = vpack.c.b16 %v1251, %v1238
      %v1460 = vpack.c.b16 %v1252, %v1239
      %v1461 = vpack.c.b16 %v1253, %v1240
      %v1462 = vpack.c.b16 %v1254, %v1241
      %v1463 = vpack.c.b16 %v1255, %v1242
      %v1464 = vpack.c.b16 %v1256, %v1243
      %v1881 = vunpack.c.l.b16 %v402
      %v1882 = vunpack.c.l.b16 %v403
      %v1883 = vunpack.c.l.b16 %v404
      %v1884 = vunpack.c.l.b16 %v405
      %v1885 = vunpack.c.l.b16 %v406
      %v1886 = vunpack.c.l.b16 %v407
      %v1887 = vunpack.c.l.b16 %v408
      %v1888 = vunpack.c.l.b16 %v409
      %v1889 = vunpack.c.l.b16 %v410
      %v1890 = vunpack.c.l.b16 %v411
      %v1891 = vunpack.c.l.b16 %v412
      %v1892 = vunpack.c.l.b16 %v413
      %v1893 = vunpack.c.l.b16 %v414
      %v1894 = vunpack.c.l.b16 %v415
      %v1895 = vunpack.c.l.b16 %v416
      %v1896 = vunpack.c.l.b16 %v417
      %v1897 = vunpack.c.l.b16 %v418
      %v1898 = vunpack.c.l.b16 %v419
      %v1899 = vunpack.c.l.b16 %v420
      %v1900 = vunpack.c.l.b16 %v421
      %v1901 = vunpack.c.l.b16 %v422
      %v1902 = vunpack.c.l.b16 %v423
      %v1903 = vunpack.c.l.b16 %v424
      %v1904 = vunpack.c.l.b16 %v425
      %v1905 = vunpack.c.l.b16 %v426
      %v1906 = vunpack.c.l.b16 %v427
      %v1907 = vunpack.c.l.b16 %v428
      %v1908 = vunpack.c.l.b16 %v429
      %v1909 = vunpack.c.l.b16 %v430
      %v1910 = vunpack.c.l.b16 %v431
      %v1911 = vunpack.c.l.b16 %v432
      %v1912 = vunpack.c.l.b16 %v433
      %v1913 = vunpack.c.l.b16 %v434
      %v1914 = vunpack.c.l.b16 %v435
      %v1915 = vunpack.c.l.b16 %v436
      %v1916 = vunpack.c.l.b16 %v437
      %v1917 = vunpack.c.l.b16 %v438
      %v1918 = vunpack.c.l.b16 %v439
      %v1919 = vunpack.c.l.b16 %v440
      %v1920 = vunpack.c.l.b16 %v441
      %v1921 = vunpack.c.l.b16 %v442
      %v1922 = vunpack.c.l.b16 %v443
      %v1923 = vunpack.c.l.b16 %v444
      %v1924 = vunpack.c.l.b16 %v445
      %v1925 = vunpack.c.l.b16 %v446
      %v1926 = vunpack.c.l.b16 %v447
      %v1927 = vunpack.c.l.b16 %v448
      %v1928 = vunpack.c.l.b16 %v449
      %v1929 = vunpack.c.l.b16 %v450
      %v1930 = vunpack.c.l.b16 %v451
      %v1931 = vunpack.c.l.b16 %v452
      %v1932 = vunpack.c.l.b16 %v453
      %v1933 = vunpack.c.l.b16 %v454
      %v1934 = vunpack.c.l.b16 %v455
      %v1935 = vunpack.c.l.b16 %v456
      %v1936 = vunpack.c.l.b16 %v457
      %v1937 = vunpack.c.l.b16 %v458
      %v1938 = vunpack.c.l.b16 %v459
      %v1939 = vunpack.c.l.b16 %v460
      %v1940 = vunpack.c.l.b16 %v461
      %v1941 = vunpack.c.l.b16 %v462
      %v1942 = vunpack.c.l.b16 %v463
      %v1943 = vunpack.c.l.b16 %v464
      %v1944 = vunpack.c.l.b16 %v465
      %v1945 = vunpack.c.l.b16 %v466
      %v1946 = vunpack.c.l.b16 %v467
      %v1947 = vunpack.c.l.b16 %v468
      %v1948 = vunpack.c.l.b16 %v469
      %v1949 = vunpack.c.l.b16 %v470
      %v1950 = vunpack.c.l.b16 %v471
      %v1951 = vunpack.c.l.b16 %v472
      %v1952 = vunpack.c.l.b16 %v473
      %v1953 = vunpack.c.l.b16 %v474
      %v1954 = vunpack.c.l.b16 %v475
      %v1955 = vunpack.c.l.b16 %v476
      %v1956 = vunpack.c.l.b16 %v477
      %v1957 = vunpack.c.l.b16 %v478
      %v1958 = vunpack.c.l.b16 %v479
      %v1959 = vunpack.c.l.b16 %v480
      %v1960 = vunpack.c.l.b16 %v481
      %v1961 = vunpack.c.l.b16 %v482
      %v1962 = vunpack.c.l.b16 %v483
      %v1963 = vunpack.c.l.b16 %v484
      %v1964 = vunpack.c.l.b16 %v485
      %v1965 = vunpack.c.l.b16 %v486
      %v1966 = vunpack.c.l.b16 %v487
      %v1967 = vunpack.c.l.b16 %v488
      %v1968 = vunpack.c.l.b16 %v489
      %v1969 = vunpack.c.l.b16 %v490
      %v1970 = vunpack.c.l.b16 %v491
      %v1971 = vunpack.c.l.b16 %v492
      %v1972 = vunpack.c.l.b16 %v493
      %v1973 = vunpack.c.l.b16 %v494
      %v1974 = vunpack.c.l.b16 %v495
      %v1975 = vunpack.c.l.b16 %v496
      %v1976 = vunpack.c.l.b16 %v497
      %v1977 = vunpack.c.l.b16 %v498
      %v1978 = vunpack.c.l.b16 %v499
      %v1979 = vunpack.c.l.b16 %v500
      %v1980 = vunpack.c.l.b16 %v501
      %v1981 = vunpack.c.l.b16 %v502
      %v1982 = vunpack.c.l.b16 %v503
      %v1983 = vunpack.c.l.b16 %v504
      %v1984 = vunpack.c.l.b16 %v505
      %v1985 = vunpack.c.l.b16 %v506
      %v1986 = vunpack.c.l.b16 %v507
      %v1987 = vunpack.c.l.b16 %v508
      %v1988 = vunpack.c.l.b16 %v509
      %v1989 = vunpack.c.l.b16 %v510
      %v1990 = vunpack.c.l.b16 %v511
      %v1991 = vunpack.c.l.b16 %v512
      %v1992 = vunpack.c.l.b16 %v513
      %v1993 = vunpack.c.l.b16 %v514
      %v1994 = vunpack.c.l.b16 %v515
      %v1995 = vunpack.c.l.b16 %v516
      %v1996 = vunpack.c.l.b16 %v517
      %v1997 = vunpack.c.l.b16 %v518
      %v1998 = vunpack.c.l.b16 %v519
      %v1999 = vunpack.c.l.b16 %v520
      %v2000 = vunpack.c.l.b16 %v521
      %v2001 = vunpack.c.l.b16 %v522
      %v2002 = vunpack.c.l.b16 %v523
      %v2003 = vunpack.c.l.b16 %v524
      %v2004 = vunpack.c.l.b16 %v525
      %v2005 = vunpack.c.l.b16 %v526
      %v2006 = vunpack.c.l.b16 %v527
      %v2007 = vunpack.c.l.b16 %v528
      %v2008 = vunpack.c.l.b16 %v529
      %v2009 = vunpack.c.l.b16 %v530
      %v2010 = vunpack.c.l.b16 %v531
      %v2011 = vunpack.c.l.b16 %v532
      %v2012 = vunpack.c.l.b16 %v533
      %v2013 = vunpack.c.l.b16 %v534
      %v2014 = vunpack.c.l.b16 %v535
      %v2015 = vunpack.c.l.b16 %v536
      %v2016 = vunpack.c.l.b16 %v537
      %v2017 = vunpack.c.l.b16 %v538
      %v2018 = vunpack.c.l.b16 %v539
      %v2019 = vunpack.c.l.b16 %v540
      %v2020 = vunpack.c.l.b16 %v541
      %v2021 = vunpack.c.l.b16 %v542
      %v2022 = vunpack.c.l.b16 %v543
      %v2023 = vunpack.c.l.b16 %v544
      %v2024 = vunpack.c.l.b16 %v545
      %v2025 = vunpack.c.l.b16 %v546
      %v2026 = vunpack.c.l.b16 %v547
      %v2027 = vunpack.c.l.b16 %v548
      %v2028 = vunpack.c.l.b16 %v549
      %v2029 = vunpack.c.l.b16 %v550
      %v2030 = vunpack.c.l.b16 %v551
      %v2031 = vunpack.c.l.b16 %v552
      %v2032 = vunpack.c.l.b16 %v553
      %v2033 = vunpack.c.l.b16 %v554
      %v2034 = vunpack.c.l.b16 %v555
      %v2035 = vunpack.c.l.b16 %v556
      %v2036 = vunpack.c.l.b16 %v557
      %v2037 = vunpack.c.l.b16 %v558
      %v2038 = vunpack.c.l.b16 %v559
      %v2039 = vunpack.c.l.b16 %v560
      %v2040 = vunpack.c.l.b16 %v561
      %v2041 = vunpack.c.l.b16 %v562
      %v2042 = vunpack.c.l.b16 %v563
      %v2043 = vunpack.c.l.b16 %v564
      %v2044 = vunpack.c.l.b16 %v565
      %v2045 = vunpack.c.l.b16 %v566
      %v2046 = vunpack.c.l.b16 %v567
      %v2047 = vunpack.c.l.b16 %v568
      %v2048 = vunpack.c.l.b16 %v569
      %v2049 = vunpack.c.l.b16 %v570
      %v2050 = vunpack.c.l.b16 %v571
      %v2051 = vunpack.c.l.b16 %v572
      %v2052 = vunpack.c.l.b16 %v573
      %v2053 = vunpack.c.l.b16 %v574
      %v2054 = vunpack.c.l.b16 %v575
      %v2055 = vunpack.c.l.b16 %v576
      %v2056 = vunpack.c.l.b16 %v577
      %v2057 = vunpack.c.l.b16 %v578
      %v2058 = vunpack.c.l.b16 %v579
      %v2059 = vunpack.c.l.b16 %v580
      %v2060 = vunpack.c.l.b16 %v581
      %v2061 = vunpack.c.l.b16 %v582
      %v2062 = vunpack.c.l.b16 %v583
      %v2063 = vunpack.c.l.b16 %v584
      %v2064 = vunpack.c.l.b16 %v585
      %v2065 = vunpack.c.l.b16 %v586
      %v2066 = vunpack.c.l.b16 %v587
      %v2067 = vunpack.c.l.b16 %v588
      %v2068 = vunpack.c.l.b16 %v589
      %v2069 = vunpack.c.l.b16 %v590
      %v2070 = vunpack.c.l.b16 %v591
      %v2071 = vunpack.c.l.b16 %v592
      %v2072 = vunpack.c.l.b16 %v593
      %v2073 = vunpack.c.l.b16 %v594
      %v2074 = vunpack.c.l.b16 %v595
      %v2075 = vunpack.c.l.b16 %v596
      %v2076 = vunpack.c.l.b16 %v597
      %v2077 = vunpack.c.l.b16 %v598
      %v2078 = vunpack.c.l.b16 %v599
      %v2079 = vunpack.c.l.b16 %v600
      %v2080 = vunpack.c.l.b16 %v601
      %v2081 = vunpack.c.l.b16 %v602
      %v2082 = vunpack.c.l.b16 %v603
      %v2083 = vunpack.c.l.b16 %v604
      %v2084 = vunpack.c.l.b16 %v605
      %v2085 = vunpack.c.l.b16 %v606
      %v2086 = vunpack.c.l.b16 %v607
      %v2087 = vunpack.c.l.b16 %v608
      %v2088 = vunpack.c.l.b16 %v609
      %v2089 = vpack.c.b16 %v1882, %v1881
      %v2090 = vpack.c.b16 %v1884, %v1883
      %v2091 = vpack.c.b16 %v1886, %v1885
      %v2092 = vpack.c.b16 %v1888, %v1887
      %v2093 = vpack.c.b16 %v1890, %v1889
      %v2094 = vpack.c.b16 %v1892, %v1891
      %v2095 = vpack.c.b16 %v1894, %v1893
      %v2096 = vpack.c.b16 %v1896, %v1895
      %v2097 = vpack.c.b16 %v1898, %v1897
      %v2098 = vpack.c.b16 %v1900, %v1899
      %v2099 = vpack.c.b16 %v1902, %v1901
      %v2100 = vpack.c.b16 %v1904, %v1903
      %v2101 = vpack.c.b16 %v1906, %v1905
      %v2102 = vpack.c.b16 %v1908, %v1907
      %v2103 = vpack.c.b16 %v1910, %v1909
      %v2104 = vpack.c.b16 %v1912, %v1911
      %v2105 = vpack.c.b16 %v1914, %v1913
      %v2106 = vpack.c.b16 %v1916, %v1915
      %v2107 = vpack.c.b16 %v1918, %v1917
      %v2108 = vpack.c.b16 %v1920, %v1919
      %v2109 = vpack.c.b16 %v1922, %v1921
      %v2110 = vpack.c.b16 %v1924, %v1923
      %v2111 = vpack.c.b16 %v1926, %v1925
      %v2112 = vpack.c.b16 %v1928, %v1927
      %v2113 = vpack.c.b16 %v1930, %v1929
      %v2114 = vpack.c.b16 %v1932, %v1931
      %v2115 = vpack.c.b16 %v1934, %v1933
      %v2116 = vpack.c.b16 %v1936, %v1935
      %v2117 = vpack.c.b16 %v1938, %v1937
      %v2118 = vpack.c.b16 %v1940, %v1939
      %v2119 = vpack.c.b16 %v1942, %v1941
      %v2120 = vpack.c.b16 %v1944, %v1943
      %v2121 = vpack.c.b16 %v1946, %v1945
      %v2122 = vpack.c.b16 %v1948, %v1947
      %v2123 = vpack.c.b16 %v1950, %v1949
      %v2124 = vpack.c.b16 %v1952, %v1951
      %v2125 = vpack.c.b16 %v1954, %v1953
      %v2126 = vpack.c.b16 %v1956, %v1955
      %v2127 = vpack.c.b16 %v1958, %v1957
      %v2128 = vpack.c.b16 %v1960, %v1959
      %v2129 = vpack.c.b16 %v1962, %v1961
      %v2130 = vpack.c.b16 %v1964, %v1963
      %v2131 = vpack.c.b16 %v1966, %v1965
      %v2132 = vpack.c.b16 %v1968, %v1967
      %v2133 = vpack.c.b16 %v1970, %v1969
      %v2134 = vpack.c.b16 %v1972, %v1971
      %v2135 = vpack.c.b16 %v1974, %v1973
      %v2136 = vpack.c.b16 %v1976, %v1975
      %v2137 = vpack.c.b16 %v1978, %v1977
      %v2138 = vpack.c.b16 %v1980, %v1979
      %v2139 = vpack.c.b16 %v1982, %v1981
      %v2140 = vpack.c.b16 %v1984, %v1983
      %v2141 = vpack.c.b16 %v1986, %v1985
      %v2142 = vpack.c.b16 %v1988, %v1987
      %v2143 = vpack.c.b16 %v1990, %v1989
      %v2144 = vpack.c.b16 %v1992, %v1991
      %v2145 = vpack.c.b16 %v1994, %v1993
      %v2146 = vpack.c.b16 %v1996, %v1995
      %v2147 = vpack.c.b16 %v1998, %v1997
      %v2148 = vpack.c.b16 %v2000, %v1999
      %v2149 = vpack.c.b16 %v2002, %v2001
      %v2150 = vpack.c.b16 %v2004, %v2003
      %v2151 = vpack.c.b16 %v2006, %v2005
      %v2152 = vpack.c.b16 %v2008, %v2007
      %v2153 = vpack.c.b16 %v2010, %v2009
      %v2154 = vpack.c.b16 %v2012, %v2011
      %v2155 = vpack.c.b16 %v2014, %v2013
      %v2156 = vpack.c.b16 %v2016, %v2015
      %v2157 = vpack.c.b16 %v2018, %v2017
      %v2158 = vpack.c.b16 %v2020, %v2019
      %v2159 = vpack.c.b16 %v2022, %v2021
      %v2160 = vpack.c.b16 %v2024, %v2023
      %v2161 = vpack.c.b16 %v2026, %v2025
      %v2162 = vpack.c.b16 %v2028, %v2027
      %v2163 = vpack.c.b16 %v2030, %v2029
      %v2164 = vpack.c.b16 %v2032, %v2031
      %v2165 = vpack.c.b16 %v2034, %v2033
      %v2166 = vpack.c.b16 %v2036, %v2035
      %v2167 = vpack.c.b16 %v2038, %v2037
      %v2168 = vpack.c.b16 %v2040, %v2039
      %v2169 = vpack.c.b16 %v2042, %v2041
      %v2170 = vpack.c.b16 %v2044, %v2043
      %v2171 = vpack.c.b16 %v2046, %v2045
      %v2172 = vpack.c.b16 %v2048, %v2047
      %v2173 = vpack.c.b16 %v2050, %v2049
      %v2174 = vpack.c.b16 %v2052, %v2051
      %v2175 = vpack.c.b16 %v2054, %v2053
      %v2176 = vpack.c.b16 %v2056, %v2055
      %v2177 = vpack.c.b16 %v2058, %v2057
      %v2178 = vpack.c.b16 %v2060, %v2059
      %v2179 = vpack.c.b16 %v2062, %v2061
      %v2180 = vpack.c.b16 %v2064, %v2063
      %v2181 = vpack.c.b16 %v2066, %v2065
      %v2182 = vpack.c.b16 %v2068, %v2067
      %v2183 = vpack.c.b16 %v2070, %v2069
      %v2184 = vpack.c.b16 %v2072, %v2071
      %v2185 = vpack.c.b16 %v2074, %v2073
      %v2186 = vpack.c.b16 %v2076, %v2075
      %v2187 = vpack.c.b16 %v2078, %v2077
      %v2188 = vpack.c.b16 %v2080, %v2079
      %v2189 = vpack.c.b16 %v2082, %v2081
      %v2190 = vpack.c.b16 %v2084, %v2083
      %v2191 = vpack.c.b16 %v2086, %v2085
      %v2192 = vpack.c.b16 %v2088, %v2087
      %2297 = vmatprep.subr.bf16.mxu0 0
      %2298 = vmatpush1.bf16.msra.mxu0 %v2089
      %2299 = vmatprep.subr.bf16.mxu0 0
      %2300 = vmatpush1.bf16.msra.mxu0 %v2090
      %2301 = vmatprep.subr.bf16.mxu0 0
      %2302 = vmatpush1.bf16.msra.mxu0 %v2091
      %2303 = vmatprep.subr.bf16.mxu0 0
      %2304 = vmatpush1.bf16.msra.mxu0 %v2092
      %2305 = vmatprep.subr.bf16.mxu0 0
      %2306 = vmatpush1.bf16.msra.mxu0 %v2093
      %2307 = vmatprep.subr.bf16.mxu0 0
      %2308 = vmatpush1.bf16.msra.mxu0 %v2094
      %2309 = vmatprep.subr.bf16.mxu0 0
      %2310 = vmatpush1.bf16.msra.mxu0 %v2095
      %2311 = vmatprep.subr.bf16.mxu0 0
      %2312 = vmatpush1.bf16.msra.mxu0 %v2096
      %2313 = vmatprep.subr.bf16.mxu0 0
      %2314 = vmatpush1.bf16.msra.mxu0 %v2097
      %2315 = vmatprep.subr.bf16.mxu0 0
      %2316 = vmatpush1.bf16.msra.mxu0 %v2098
      %2317 = vmatprep.subr.bf16.mxu0 0
      %2318 = vmatpush1.bf16.msra.mxu0 %v2099
      %2319 = vmatprep.subr.bf16.mxu0 0
      %2320 = vmatpush1.bf16.msra.mxu0 %v2100
      %2321 = vmatprep.subr.bf16.mxu0 0
      %2322 = vmatpush1.bf16.msra.mxu0 %v2101
      %2323 = vmatprep.subr.bf16.mxu0 0
      %2324 = vmatpush1.bf16.msra.mxu0 %v2102
      %2325 = vmatprep.subr.bf16.mxu0 0
      %2326 = vmatpush1.bf16.msra.mxu0 %v2103
      %2327 = vmatprep.subr.bf16.mxu0 0
      %2328 = vmatpush1.bf16.msra.mxu0 %v2104
      %2329 = vmatprep.mubr.bf16.mxu0 %v1258
      %2330 = vmatmul.mubr.bf16.gmra.mrb[0].mxu0 %v1257
      %v2331 = vpop.f32.mrb[0].mxu0
      %v2332 = vadd.f32 %v615, %v2331
      %v2333 = vpop.f32.mrb[0].mxu0
      %v2334 = vpop.f32.mrb[0].mxu0
      %v2335 = vadd.f32 %v615, %v2334
      %v2336 = vpop.f32.mrb[0].mxu0
      %2337 = vmatprep.mubr.bf16.mxu0 %v1271
      %2338 = vmatmul.mubr.bf16.gmra.mrb[0].mxu0 %v1270
      %v2339 = vpop.f32.mrb[0].mxu0
      %v2340 = vadd.f32 %v615, %v2339
      %v2341 = vpop.f32.mrb[0].mxu0
      %v2342 = vpop.f32.mrb[0].mxu0
      %v2343 = vadd.f32 %v615, %v2342
      %v2344 = vpop.f32.mrb[0].mxu0
      %2345 = vmatprep.mubr.bf16.mxu0 %v1284
      %2346 = vmatmul.mubr.bf16.gmra.mrb[0].mxu0 %v1283
      %v2347 = vpop.f32.mrb[0].mxu0
      %v2348 = vadd.f32 %v615, %v2347
      %v2349 = vpop.f32.mrb[0].mxu0
      %v2350 = vpop.f32.mrb[0].mxu0
      %v2351 = vadd.f32 %v615, %v2350
      %v2352 = vpop.f32.mrb[0].mxu0
      %2353 = vmatprep.mubr.bf16.mxu0 %v1297
      %2354 = vmatmul.mubr.bf16.gmra.mrb[0].mxu0 %v1296
      %v2355 = vpop.f32.mrb[0].mxu0
      %v2356 = vadd.f32 %v615, %v2355
      %v2357 = vpop.f32.mrb[0].mxu0
      %v2358 = vpop.f32.mrb[0].mxu0
      %v2359 = vadd.f32 %v615, %v2358
      %v2360 = vpop.f32.mrb[0].mxu0
      %2361 = vmatprep.mubr.bf16.mxu0 %v1310
      %2362 = vmatmul.mubr.bf16.gmra.mrb[0].mxu0 %v1309
      %v2363 = vpop.f32.mrb[0].mxu0
      %v2364 = vadd.f32 %v615, %v2363
      %v2365 = vpop.f32.mrb[0].mxu0
      %v2366 = vpop.f32.mrb[0].mxu0
      %v2367 = vadd.f32 %v615, %v2366
      %v2368 = vpop.f32.mrb[0].mxu0
      %2369 = vmatprep.mubr.bf16.mxu0 %v1323
      %2370 = vmatmul.mubr.bf16.gmra.mrb[0].mxu0 %v1322
      %v2371 = vpop.f32.mrb[0].mxu0
      %v2372 = vadd.f32 %v615, %v2371
      %v2373 = vpop.f32.mrb[0].mxu0
      %v2374 = vpop.f32.mrb[0].mxu0
      %v2375 = vadd.f32 %v615, %v2374
      %v2376 = vpop.f32.mrb[0].mxu0
      %2377 = vmatprep.mubr.bf16.mxu0 %v1336
      %2378 = vmatmul.mubr.bf16.gmra.mrb[0].mxu0 %v1335
      %v2379 = vpop.f32.mrb[0].mxu0
      %v2380 = vadd.f32 %v615, %v2379
      %v2381 = vpop.f32.mrb[0].mxu0
      %v2382 = vpop.f32.mrb[0].mxu0
      %v2383 = vadd.f32 %v615, %v2382
      %v2384 = vpop.f32.mrb[0].mxu0
      %2385 = vmatprep.mubr.bf16.mxu0 %v1349
      %2386 = vmatmul.mubr.bf16.gmra.mrb[0].mxu0 %v1348
      %v2387 = vpop.f32.mrb[0].mxu0
      %v2388 = vadd.f32 %v615, %v2387
      %v2389 = vpop.f32.mrb[0].mxu0
      %v2390 = vpop.f32.mrb[0].mxu0
      %v2391 = vadd.f32 %v615, %v2390
      %v2392 = vpop.f32.mrb[0].mxu0
      %2393 = vmatprep.mubr.bf16.mxu0 %v1362
      %2394 = vmatmul.mubr.bf16.gmra.mrb[0].mxu0 %v1361
      %v2395 = vpop.f32.mrb[0].mxu0
      %v2396 = vadd.f32 %v615, %v2395
      %v2397 = vpop.f32.mrb[0].mxu0
      %v2398 = vpop.f32.mrb[0].mxu0
      %v2399 = vadd.f32 %v615, %v2398
      %v2400 = vpop.f32.mrb[0].mxu0
      %2401 = vmatprep.mubr.bf16.mxu0 %v1375
      %2402 = vmatmul.mubr.bf16.gmra.mrb[0].mxu0 %v1374
      %v2403 = vpop.f32.mrb[0].mxu0
      %v2404 = vadd.f32 %v615, %v2403
      %v2405 = vpop.f32.mrb[0].mxu0
      %v2406 = vpop.f32.mrb[0].mxu0
      %v2407 = vadd.f32 %v615, %v2406
      %v2408 = vpop.f32.mrb[0].mxu0
      %2409 = vmatprep.mubr.bf16.mxu0 %v1388
      %2410 = vmatmul.mubr.bf16.gmra.mrb[0].mxu0 %v1387
      %v2411 = vpop.f32.mrb[0].mxu0
      %v2412 = vadd.f32 %v615, %v2411
      %v2413 = vpop.f32.mrb[0].mxu0
      %v2414 = vpop.f32.mrb[0].mxu0
      %v2415 = vadd.f32 %v615, %v2414
      %v2416 = vpop.f32.mrb[0].mxu0
      %2417 = vmatprep.mubr.bf16.mxu0 %v1401
      %2418 = vmatmul.mubr.bf16.gmra.mrb[0].mxu0 %v1400
      %v2419 = vpop.f32.mrb[0].mxu0
      %v2420 = vadd.f32 %v615, %v2419
      %v2421 = vpop.f32.mrb[0].mxu0
      %v2422 = vpop.f32.mrb[0].mxu0
      %v2423 = vadd.f32 %v615, %v2422
      %v2424 = vpop.f32.mrb[0].mxu0
      %2425 = vmatprep.mubr.bf16.mxu0 %v1414
      %2426 = vmatmul.mubr.bf16.gmra.mrb[0].mxu0 %v1413
      %v2427 = vpop.f32.mrb[0].mxu0
      %v2428 = vadd.f32 %v615, %v2427
      %v2429 = vpop.f32.mrb[0].mxu0
      %v2430 = vpop.f32.mrb[0].mxu0
      %v2431 = vadd.f32 %v615, %v2430
      %v2432 = vpop.f32.mrb[0].mxu0
      %2433 = vmatprep.mubr.bf16.mxu0 %v1427
      %2434 = vmatmul.mubr.bf16.gmra.mrb[0].mxu0 %v1426
      %v2435 = vpop.f32.mrb[0].mxu0
      %v2436 = vadd.f32 %v615, %v2435
      %v2437 = vpop.f32.mrb[0].mxu0
      %v2438 = vpop.f32.mrb[0].mxu0
      %v2439 = vadd.f32 %v615, %v2438
      %v2440 = vpop.f32.mrb[0].mxu0
      %2441 = vmatprep.mubr.bf16.mxu0 %v1440
      %2442 = vmatmul.mubr.bf16.gmra.mrb[0].mxu0 %v1439
      %v2443 = vpop.f32.mrb[0].mxu0
      %v2444 = vadd.f32 %v615, %v2443
      %v2445 = vpop.f32.mrb[0].mxu0
      %v2446 = vpop.f32.mrb[0].mxu0
      %v2447 = vadd.f32 %v615, %v2446
      %v2448 = vpop.f32.mrb[0].mxu0
      %2449 = vmatprep.mubr.bf16.mxu0 %v1453
      %2450 = vmatmul.mubr.bf16.gmra.mrb[0].mxu0 %v1452
      %v2451 = vpop.f32.mrb[0].mxu0
      %v2452 = vadd.f32 %v615, %v2451
      %v2453 = vpop.f32.mrb[0].mxu0
      %v2454 = vpop.f32.mrb[0].mxu0
      %v2455 = vadd.f32 %v615, %v2454
      %v2456 = vpop.f32.mrb[0].mxu0
      %2457 = vdwg.mxu0
      %2458 = vmatprep.subr.bf16.mxu0 0
      %2459 = vmatpush1.bf16.msra.mxu0 %v2105
      %2460 = vmatprep.subr.bf16.mxu0 0
      %2461 = vmatpush1.bf16.msra.mxu0 %v2106
      %2462 = vmatprep.subr.bf16.mxu0 0
      %2463 = vmatpush1.bf16.msra.mxu0 %v2107
      %2464 = vmatprep.subr.bf16.mxu0 0
      %2465 = vmatpush1.bf16.msra.mxu0 %v2108
      %2466 = vmatprep.subr.bf16.mxu0 0
      %2467 = vmatpush1.bf16.msra.mxu0 %v2109
      %2468 = vmatprep.subr.bf16.mxu0 0
      %2469 = vmatpush1.bf16.msra.mxu0 %v2110
      %2470 = vmatprep.subr.bf16.mxu0 0
      %2471 = vmatpush1.bf16.msra.mxu0 %v2111
      %2472 = vmatprep.subr.bf16.mxu0 0
      %2473 = vmatpush1.bf16.msra.mxu0 %v2112
      %2474 = vmatprep.subr.bf16.mxu0 0
      %2475 = vmatpush1.bf16.msra.mxu0 %v2113
      %2476 = vmatprep.subr.bf16.mxu0 0
      %2477 = vmatpush1.bf16.msra.mxu0 %v2114
      %2478 = vmatprep.subr.bf16.mxu0 0
      %2479 = vmatpush1.bf16.msra.mxu0 %v2115
      %2480 = vmatprep.subr.bf16.mxu0 0
      %2481 = vmatpush1.bf16.msra.mxu0 %v2116
      %2482 = vmatprep.subr.bf16.mxu0 0
      %2483 = vmatpush1.bf16.msra.mxu0 %v2117
      %2484 = vmatprep.subr.bf16.mxu0 0
      %2485 = vmatpush1.bf16.msra.mxu0 %v2118
      %2486 = vmatprep.subr.bf16.mxu0 0
      %2487 = vmatpush1.bf16.msra.mxu0 %v2119
      %2488 = vmatprep.subr.bf16.mxu0 0
      %2489 = vmatpush1.bf16.msra.mxu0 %v2120
      %2490 = vmatprep.mubr.bf16.mxu0 %v1260
      %2491 = vmatmul.mubr.bf16.gmra.mrb[0].mxu0 %v1259
      %v2492 = vpop.f32.mrb[0].mxu0
      %v2493 = vadd.f32 %v2332, %v2492
      %v2494 = vpop.f32.mrb[0].mxu0
      %v2495 = vpop.f32.mrb[0].mxu0
      %v2496 = vadd.f32 %v2335, %v2495
      %v2497 = vpop.f32.mrb[0].mxu0
      %2498 = vmatprep.mubr.bf16.mxu0 %v1273
      %2499 = vmatmul.mubr.bf16.gmra.mrb[0].mxu0 %v1272
      %v2500 = vpop.f32.mrb[0].mxu0
      %v2501 = vadd.f32 %v2340, %v2500
      %v2502 = vpop.f32.mrb[0].mxu0
      %v2503 = vpop.f32.mrb[0].mxu0
      %v2504 = vadd.f32 %v2343, %v2503
      %v2505 = vpop.f32.mrb[0].mxu0
      %2506 = vmatprep.mubr.bf16.mxu0 %v1286
      %2507 = vmatmul.mubr.bf16.gmra.mrb[0].mxu0 %v1285
      %v2508 = vpop.f32.mrb[0].mxu0
      %v2509 = vadd.f32 %v2348, %v2508
      %v2510 = vpop.f32.mrb[0].mxu0
      %v2511 = vpop.f32.mrb[0].mxu0
      %v2512 = vadd.f32 %v2351, %v2511
      %v2513 = vpop.f32.mrb[0].mxu0
      %2514 = vmatprep.mubr.bf16.mxu0 %v1299
      %2515 = vmatmul.mubr.bf16.gmra.mrb[0].mxu0 %v1298
      %v2516 = vpop.f32.mrb[0].mxu0
      %v2517 = vadd.f32 %v2356, %v2516
      %v2518 = vpop.f32.mrb[0].mxu0
      %v2519 = vpop.f32.mrb[0].mxu0
      %v2520 = vadd.f32 %v2359, %v2519
      %v2521 = vpop.f32.mrb[0].mxu0
      %2522 = vmatprep.mubr.bf16.mxu0 %v1312
      %2523 = vmatmul.mubr.bf16.gmra.mrb[0].mxu0 %v1311
      %v2524 = vpop.f32.mrb[0].mxu0
      %v2525 = vadd.f32 %v2364, %v2524
      %v2526 = vpop.f32.mrb[0].mxu0
      %v2527 = vpop.f32.mrb[0].mxu0
      %v2528 = vadd.f32 %v2367, %v2527
      %v2529 = vpop.f32.mrb[0].mxu0
      %2530 = vmatprep.mubr.bf16.mxu0 %v1325
      %2531 = vmatmul.mubr.bf16.gmra.mrb[0].mxu0 %v1324
      %v2532 = vpop.f32.mrb[0].mxu0
      %v2533 = vadd.f32 %v2372, %v2532
      %v2534 = vpop.f32.mrb[0].mxu0
      %v2535 = vpop.f32.mrb[0].mxu0
      %v2536 = vadd.f32 %v2375, %v2535
      %v2537 = vpop.f32.mrb[0].mxu0
      %2538 = vmatprep.mubr.bf16.mxu0 %v1338
      %2539 = vmatmul.mubr.bf16.gmra.mrb[0].mxu0 %v1337
      %v2540 = vpop.f32.mrb[0].mxu0
      %v2541 = vadd.f32 %v2380, %v2540
      %v2542 = vpop.f32.mrb[0].mxu0
      %v2543 = vpop.f32.mrb[0].mxu0
      %v2544 = vadd.f32 %v2383, %v2543
      %v2545 = vpop.f32.mrb[0].mxu0
      %2546 = vmatprep.mubr.bf16.mxu0 %v1351
      %2547 = vmatmul.mubr.bf16.gmra.mrb[0].mxu0 %v1350
      %v2548 = vpop.f32.mrb[0].mxu0
      %v2549 = vadd.f32 %v2388, %v2548
      %v2550 = vpop.f32.mrb[0].mxu0
      %v2551 = vpop.f32.mrb[0].mxu0
      %v2552 = vadd.f32 %v2391, %v2551
      %v2553 = vpop.f32.mrb[0].mxu0
      %2554 = vmatprep.mubr.bf16.mxu0 %v1364
      %2555 = vmatmul.mubr.bf16.gmra.mrb[0].mxu0 %v1363
      %v2556 = vpop.f32.mrb[0].mxu0
      %v2557 = vadd.f32 %v2396, %v2556
      %v2558 = vpop.f32.mrb[0].mxu0
      %v2559 = vpop.f32.mrb[0].mxu0
      %v2560 = vadd.f32 %v2399, %v2559
      %v2561 = vpop.f32.mrb[0].mxu0
      %2562 = vmatprep.mubr.bf16.mxu0 %v1377
      %2563 = vmatmul.mubr.bf16.gmra.mrb[0].mxu0 %v1376
      %v2564 = vpop.f32.mrb[0].mxu0
      %v2565 = vadd.f32 %v2404, %v2564
      %v2566 = vpop.f32.mrb[0].mxu0
      %v2567 = vpop.f32.mrb[0].mxu0
      %v2568 = vadd.f32 %v2407, %v2567
      %v2569 = vpop.f32.mrb[0].mxu0
      %2570 = vmatprep.mubr.bf16.mxu0 %v1390
      %2571 = vmatmul.mubr.bf16.gmra.mrb[0].mxu0 %v1389
      %v2572 = vpop.f32.mrb[0].mxu0
      %v2573 = vadd.f32 %v2412, %v2572
      %v2574 = vpop.f32.mrb[0].mxu0
      %v2575 = vpop.f32.mrb[0].mxu0
      %v2576 = vadd.f32 %v2415, %v2575
      %v2577 = vpop.f32.mrb[0].mxu0
      %2578 = vmatprep.mubr.bf16.mxu0 %v1403
      %2579 = vmatmul.mubr.bf16.gmra.mrb[0].mxu0 %v1402
      %v2580 = vpop.f32.mrb[0].mxu0
      %v2581 = vadd.f32 %v2420, %v2580
      %v2582 = vpop.f32.mrb[0].mxu0
      %v2583 = vpop.f32.mrb[0].mxu0
      %v2584 = vadd.f32 %v2423, %v2583
      %v2585 = vpop.f32.mrb[0].mxu0
      %2586 = vmatprep.mubr.bf16.mxu0 %v1416
      %2587 = vmatmul.mubr.bf16.gmra.mrb[0].mxu0 %v1415
      %v2588 = vpop.f32.mrb[0].mxu0
      %v2589 = vadd.f32 %v2428, %v2588
      %v2590 = vpop.f32.mrb[0].mxu0
      %v2591 = vpop.f32.mrb[0].mxu0
      %v2592 = vadd.f32 %v2431, %v2591
      %v2593 = vpop.f32.mrb[0].mxu0
      %2594 = vmatprep.mubr.bf16.mxu0 %v1429
      %2595 = vmatmul.mubr.bf16.gmra.mrb[0].mxu0 %v1428
      %v2596 = vpop.f32.mrb[0].mxu0
      %v2597 = vadd.f32 %v2436, %v2596
      %v2598 = vpop.f32.mrb[0].mxu0
      %v2599 = vpop.f32.mrb[0].mxu0
      %v2600 = vadd.f32 %v2439, %v2599
      %v2601 = vpop.f32.mrb[0].mxu0
      %2602 = vmatprep.mubr.bf16.mxu0 %v1442
      %2603 = vmatmul.mubr.bf16.gmra.mrb[0].mxu0 %v1441
      %v2604 = vpop.f32.mrb[0].mxu0
      %v2605 = vadd.f32 %v2444, %v2604
      %v2606 = vpop.f32.mrb[0].mxu0
      %v2607 = vpop.f32.mrb[0].mxu0
      %v2608 = vadd.f32 %v2447, %v2607
      %v2609 = vpop.f32.mrb[0].mxu0
      %2610 = vmatprep.mubr.bf16.mxu0 %v1455
      %2611 = vmatmul.mubr.bf16.gmra.mrb[0].mxu0 %v1454
      %v2612 = vpop.f32.mrb[0].mxu0
      %v2613 = vadd.f32 %v2452, %v2612
      %v2614 = vpop.f32.mrb[0].mxu0
      %v2615 = vpop.f32.mrb[0].mxu0
      %v2616 = vadd.f32 %v2455, %v2615
      %v2617 = vpop.f32.mrb[0].mxu0
      %2618 = vdwg.mxu0
      %2619 = vmatprep.subr.bf16.mxu0 0
      %2620 = vmatpush1.bf16.msra.mxu0 %v2121
      %2621 = vmatprep.subr.bf16.mxu0 0
      %2622 = vmatpush1.bf16.msra.mxu0 %v2122
      %2623 = vmatprep.subr.bf16.mxu0 0
      %2624 = vmatpush1.bf16.msra.mxu0 %v2123
      %2625 = vmatprep.subr.bf16.mxu0 0
      %2626 = vmatpush1.bf16.msra.mxu0 %v2124
      %2627 = vmatprep.subr.bf16.mxu0 0
      %2628 = vmatpush1.bf16.msra.mxu0 %v2125
      %2629 = vmatprep.subr.bf16.mxu0 0
      %2630 = vmatpush1.bf16.msra.mxu0 %v2126
      %2631 = vmatprep.subr.bf16.mxu0 0
      %2632 = vmatpush1.bf16.msra.mxu0 %v2127
      %2633 = vmatprep.subr.bf16.mxu0 0
      %2634 = vmatpush1.bf16.msra.mxu0 %v2128
      %2635 = vmatprep.subr.bf16.mxu0 0
      %2636 = vmatpush1.bf16.msra.mxu0 %v2129
      %2637 = vmatprep.subr.bf16.mxu0 0
      %2638 = vmatpush1.bf16.msra.mxu0 %v2130
      %2639 = vmatprep.subr.bf16.mxu0 0
      %2640 = vmatpush1.bf16.msra.mxu0 %v2131
      %2641 = vmatprep.subr.bf16.mxu0 0
      %2642 = vmatpush1.bf16.msra.mxu0 %v2132
      %2643 = vmatprep.subr.bf16.mxu0 0
      %2644 = vmatpush1.bf16.msra.mxu0 %v2133
      %2645 = vmatprep.subr.bf16.mxu0 0
      %2646 = vmatpush1.bf16.msra.mxu0 %v2134
      %2647 = vmatprep.subr.bf16.mxu0 0
      %2648 = vmatpush1.bf16.msra.mxu0 %v2135
      %2649 = vmatprep.subr.bf16.mxu0 0
      %2650 = vmatpush1.bf16.msra.mxu0 %v2136
      %2651 = vmatprep.mubr.bf16.mxu0 %v1262
      %2652 = vmatmul.mubr.bf16.gmra.mrb[0].mxu0 %v1261
      %v2653 = vpop.f32.mrb[0].mxu0
      %v2654 = vadd.f32 %v2493, %v2653
      %v2655 = vpop.f32.mrb[0].mxu0
      %v2656 = vpop.f32.mrb[0].mxu0
      %v2657 = vadd.f32 %v2496, %v2656
      %v2658 = vpop.f32.mrb[0].mxu0
      %2659 = vmatprep.mubr.bf16.mxu0 %v1275
      %2660 = vmatmul.mubr.bf16.gmra.mrb[0].mxu0 %v1274
      %v2661 = vpop.f32.mrb[0].mxu0
      %v2662 = vadd.f32 %v2501, %v2661
      %v2663 = vpop.f32.mrb[0].mxu0
      %v2664 = vpop.f32.mrb[0].mxu0
      %v2665 = vadd.f32 %v2504, %v2664
      %v2666 = vpop.f32.mrb[0].mxu0
      %2667 = vmatprep.mubr.bf16.mxu0 %v1288
      %2668 = vmatmul.mubr.bf16.gmra.mrb[0].mxu0 %v1287
      %v2669 = vpop.f32.mrb[0].mxu0
      %v2670 = vadd.f32 %v2509, %v2669
      %v2671 = vpop.f32.mrb[0].mxu0
      %v2672 = vpop.f32.mrb[0].mxu0
      %v2673 = vadd.f32 %v2512, %v2672
      %v2674 = vpop.f32.mrb[0].mxu0
      %2675 = vmatprep.mubr.bf16.mxu0 %v1301
      %2676 = vmatmul.mubr.bf16.gmra.mrb[0].mxu0 %v1300
      %v2677 = vpop.f32.mrb[0].mxu0
      %v2678 = vadd.f32 %v2517, %v2677
      %v2679 = vpop.f32.mrb[0].mxu0
      %v2680 = vpop.f32.mrb[0].mxu0
      %v2681 = vadd.f32 %v2520, %v2680
      %v2682 = vpop.f32.mrb[0].mxu0
      %2683 = vmatprep.mubr.bf16.mxu0 %v1314
      %2684 = vmatmul.mubr.bf16.gmra.mrb[0].mxu0 %v1313
      %v2685 = vpop.f32.mrb[0].mxu0
      %v2686 = vadd.f32 %v2525, %v2685
      %v2687 = vpop.f32.mrb[0].mxu0
      %v2688 = vpop.f32.mrb[0].mxu0
      %v2689 = vadd.f32 %v2528, %v2688
      %v2690 = vpop.f32.mrb[0].mxu0
      %2691 = vmatprep.mubr.bf16.mxu0 %v1327
      %2692 = vmatmul.mubr.bf16.gmra.mrb[0].mxu0 %v1326
      %v2693 = vpop.f32.mrb[0].mxu0
      %v2694 = vadd.f32 %v2533, %v2693
      %v2695 = vpop.f32.mrb[0].mxu0
      %v2696 = vpop.f32.mrb[0].mxu0
      %v2697 = vadd.f32 %v2536, %v2696
      %v2698 = vpop.f32.mrb[0].mxu0
      %2699 = vmatprep.mubr.bf16.mxu0 %v1340
      %2700 = vmatmul.mubr.bf16.gmra.mrb[0].mxu0 %v1339
      %v2701 = vpop.f32.mrb[0].mxu0
      %v2702 = vadd.f32 %v2541, %v2701
      %v2703 = vpop.f32.mrb[0].mxu0
      %v2704 = vpop.f32.mrb[0].mxu0
      %v2705 = vadd.f32 %v2544, %v2704
      %v2706 = vpop.f32.mrb[0].mxu0
      %2707 = vmatprep.mubr.bf16.mxu0 %v1353
      %2708 = vmatmul.mubr.bf16.gmra.mrb[0].mxu0 %v1352
      %v2709 = vpop.f32.mrb[0].mxu0
      %v2710 = vadd.f32 %v2549, %v2709
      %v2711 = vpop.f32.mrb[0].mxu0
      %v2712 = vpop.f32.mrb[0].mxu0
      %v2713 = vadd.f32 %v2552, %v2712
      %v2714 = vpop.f32.mrb[0].mxu0
      %2715 = vmatprep.mubr.bf16.mxu0 %v1366
      %2716 = vmatmul.mubr.bf16.gmra.mrb[0].mxu0 %v1365
      %v2717 = vpop.f32.mrb[0].mxu0
      %v2718 = vadd.f32 %v2557, %v2717
      %v2719 = vpop.f32.mrb[0].mxu0
      %v2720 = vpop.f32.mrb[0].mxu0
      %v2721 = vadd.f32 %v2560, %v2720
      %v2722 = vpop.f32.mrb[0].mxu0
      %2723 = vmatprep.mubr.bf16.mxu0 %v1379
      %2724 = vmatmul.mubr.bf16.gmra.mrb[0].mxu0 %v1378
      %v2725 = vpop.f32.mrb[0].mxu0
      %v2726 = vadd.f32 %v2565, %v2725
      %v2727 = vpop.f32.mrb[0].mxu0
      %v2728 = vpop.f32.mrb[0].mxu0
      %v2729 = vadd.f32 %v2568, %v2728
      %v2730 = vpop.f32.mrb[0].mxu0
      %2731 = vmatprep.mubr.bf16.mxu0 %v1392
      %2732 = vmatmul.mubr.bf16.gmra.mrb[0].mxu0 %v1391
      %v2733 = vpop.f32.mrb[0].mxu0
      %v2734 = vadd.f32 %v2573, %v2733
      %v2735 = vpop.f32.mrb[0].mxu0
      %v2736 = vpop.f32.mrb[0].mxu0
      %v2737 = vadd.f32 %v2576, %v2736
      %v2738 = vpop.f32.mrb[0].mxu0
      %2739 = vmatprep.mubr.bf16.mxu0 %v1405
      %2740 = vmatmul.mubr.bf16.gmra.mrb[0].mxu0 %v1404
      %v2741 = vpop.f32.mrb[0].mxu0
      %v2742 = vadd.f32 %v2581, %v2741
      %v2743 = vpop.f32.mrb[0].mxu0
      %v2744 = vpop.f32.mrb[0].mxu0
      %v2745 = vadd.f32 %v2584, %v2744
      %v2746 = vpop.f32.mrb[0].mxu0
      %2747 = vmatprep.mubr.bf16.mxu0 %v1418
      %2748 = vmatmul.mubr.bf16.gmra.mrb[0].mxu0 %v1417
      %v2749 = vpop.f32.mrb[0].mxu0
      %v2750 = vadd.f32 %v2589, %v2749
      %v2751 = vpop.f32.mrb[0].mxu0
      %v2752 = vpop.f32.mrb[0].mxu0
      %v2753 = vadd.f32 %v2592, %v2752
      %v2754 = vpop.f32.mrb[0].mxu0
      %2755 = vmatprep.mubr.bf16.mxu0 %v1431
      %2756 = vmatmul.mubr.bf16.gmra.mrb[0].mxu0 %v1430
      %v2757 = vpop.f32.mrb[0].mxu0
      %v2758 = vadd.f32 %v2597, %v2757
      %v2759 = vpop.f32.mrb[0].mxu0
      %v2760 = vpop.f32.mrb[0].mxu0
      %v2761 = vadd.f32 %v2600, %v2760
      %v2762 = vpop.f32.mrb[0].mxu0
      %2763 = vmatprep.mubr.bf16.mxu0 %v1444
      %2764 = vmatmul.mubr.bf16.gmra.mrb[0].mxu0 %v1443
      %v2765 = vpop.f32.mrb[0].mxu0
      %v2766 = vadd.f32 %v2605, %v2765
      %v2767 = vpop.f32.mrb[0].mxu0
      %v2768 = vpop.f32.mrb[0].mxu0
      %v2769 = vadd.f32 %v2608, %v2768
      %v2770 = vpop.f32.mrb[0].mxu0
      %2771 = vmatprep.mubr.bf16.mxu0 %v1457
      %2772 = vmatmul.mubr.bf16.gmra.mrb[0].mxu0 %v1456
      %v2773 = vpop.f32.mrb[0].mxu0
      %v2774 = vadd.f32 %v2613, %v2773
      %v2775 = vpop.f32.mrb[0].mxu0
      %v2776 = vpop.f32.mrb[0].mxu0
      %v2777 = vadd.f32 %v2616, %v2776
      %v2778 = vpop.f32.mrb[0].mxu0
      %2779 = vdwg.mxu0
      %2780 = vmatprep.subr.bf16.mxu0 0
      %2781 = vmatpush1.bf16.msra.mxu0 %v2137
      %2782 = vmatprep.subr.bf16.mxu0 0
      %2783 = vmatpush1.bf16.msra.mxu0 %v2138
      %2784 = vmatprep.subr.bf16.mxu0 0
      %2785 = vmatpush1.bf16.msra.mxu0 %v2139
      %2786 = vmatprep.subr.bf16.mxu0 0
      %2787 = vmatpush1.bf16.msra.mxu0 %v2140
      %2788 = vmatprep.subr.bf16.mxu0 0
      %2789 = vmatpush1.bf16.msra.mxu0 %v2141
      %2790 = vmatprep.subr.bf16.mxu0 0
      %2791 = vmatpush1.bf16.msra.mxu0 %v2142
      %2792 = vmatprep.subr.bf16.mxu0 0
      %2793 = vmatpush1.bf16.msra.mxu0 %v2143
      %2794 = vmatprep.subr.bf16.mxu0 0
      %2795 = vmatpush1.bf16.msra.mxu0 %v2144
      %2796 = vmatprep.subr.bf16.mxu0 0
      %2797 = vmatpush1.bf16.msra.mxu0 %v2145
      %2798 = vmatprep.subr.bf16.mxu0 0
      %2799 = vmatpush1.bf16.msra.mxu0 %v2146
      %2800 = vmatprep.subr.bf16.mxu0 0
      %2801 = vmatpush1.bf16.msra.mxu0 %v2147
      %2802 = vmatprep.subr.bf16.mxu0 0
      %2803 = vmatpush1.bf16.msra.mxu0 %v2148
      %2804 = vmatprep.subr.bf16.mxu0 0
      %2805 = vmatpush1.bf16.msra.mxu0 %v2149
      %2806 = vmatprep.subr.bf16.mxu0 0
      %2807 = vmatpush1.bf16.msra.mxu0 %v2150
      %2808 = vmatprep.subr.bf16.mxu0 0
      %2809 = vmatpush1.bf16.msra.mxu0 %v2151
      %2810 = vmatprep.subr.bf16.mxu0 0
      %2811 = vmatpush1.bf16.msra.mxu0 %v2152
      %2812 = vmatprep.mubr.bf16.mxu0 %v1264
      %2813 = vmatmul.mubr.bf16.gmra.mrb[0].mxu0 %v1263
      %v2814 = vpop.f32.mrb[0].mxu0
      %v2815 = vadd.f32 %v2654, %v2814
      %v2816 = vpop.f32.mrb[0].mxu0
      %v2817 = vpop.f32.mrb[0].mxu0
      %v2818 = vadd.f32 %v2657, %v2817
      %v2819 = vpop.f32.mrb[0].mxu0
      %2820 = vmatprep.mubr.bf16.mxu0 %v1277
      %2821 = vmatmul.mubr.bf16.gmra.mrb[0].mxu0 %v1276
      %v2822 = vpop.f32.mrb[0].mxu0
      %v2823 = vadd.f32 %v2662, %v2822
      %v2824 = vpop.f32.mrb[0].mxu0
      %v2825 = vpop.f32.mrb[0].mxu0
      %v2826 = vadd.f32 %v2665, %v2825
      %v2827 = vpop.f32.mrb[0].mxu0
      %2828 = vmatprep.mubr.bf16.mxu0 %v1290
      %2829 = vmatmul.mubr.bf16.gmra.mrb[0].mxu0 %v1289
      %v2830 = vpop.f32.mrb[0].mxu0
      %v2831 = vadd.f32 %v2670, %v2830
      %v2832 = vpop.f32.mrb[0].mxu0
      %v2833 = vpop.f32.mrb[0].mxu0
      %v2834 = vadd.f32 %v2673, %v2833
      %v2835 = vpop.f32.mrb[0].mxu0
      %2836 = vmatprep.mubr.bf16.mxu0 %v1303
      %2837 = vmatmul.mubr.bf16.gmra.mrb[0].mxu0 %v1302
      %v2838 = vpop.f32.mrb[0].mxu0
      %v2839 = vadd.f32 %v2678, %v2838
      %v2840 = vpop.f32.mrb[0].mxu0
      %v2841 = vpop.f32.mrb[0].mxu0
      %v2842 = vadd.f32 %v2681, %v2841
      %v2843 = vpop.f32.mrb[0].mxu0
      %2844 = vmatprep.mubr.bf16.mxu0 %v1316
      %2845 = vmatmul.mubr.bf16.gmra.mrb[0].mxu0 %v1315
      %v2846 = vpop.f32.mrb[0].mxu0
      %v2847 = vadd.f32 %v2686, %v2846
      %v2848 = vpop.f32.mrb[0].mxu0
      %v2849 = vpop.f32.mrb[0].mxu0
      %v2850 = vadd.f32 %v2689, %v2849
      %v2851 = vpop.f32.mrb[0].mxu0
      %2852 = vmatprep.mubr.bf16.mxu0 %v1329
      %2853 = vmatmul.mubr.bf16.gmra.mrb[0].mxu0 %v1328
      %v2854 = vpop.f32.mrb[0].mxu0
      %v2855 = vadd.f32 %v2694, %v2854
      %v2856 = vpop.f32.mrb[0].mxu0
      %v2857 = vpop.f32.mrb[0].mxu0
      %v2858 = vadd.f32 %v2697, %v2857
      %v2859 = vpop.f32.mrb[0].mxu0
      %2860 = vmatprep.mubr.bf16.mxu0 %v1342
      %2861 = vmatmul.mubr.bf16.gmra.mrb[0].mxu0 %v1341
      %v2862 = vpop.f32.mrb[0].mxu0
      %v2863 = vadd.f32 %v2702, %v2862
      %v2864 = vpop.f32.mrb[0].mxu0
      %v2865 = vpop.f32.mrb[0].mxu0
      %v2866 = vadd.f32 %v2705, %v2865
      %v2867 = vpop.f32.mrb[0].mxu0
      %2868 = vmatprep.mubr.bf16.mxu0 %v1355
      %2869 = vmatmul.mubr.bf16.gmra.mrb[0].mxu0 %v1354
      %v2870 = vpop.f32.mrb[0].mxu0
      %v2871 = vadd.f32 %v2710, %v2870
      %v2872 = vpop.f32.mrb[0].mxu0
      %v2873 = vpop.f32.mrb[0].mxu0
      %v2874 = vadd.f32 %v2713, %v2873
      %v2875 = vpop.f32.mrb[0].mxu0
      %2876 = vmatprep.mubr.bf16.mxu0 %v1368
      %2877 = vmatmul.mubr.bf16.gmra.mrb[0].mxu0 %v1367
      %v2878 = vpop.f32.mrb[0].mxu0
      %v2879 = vadd.f32 %v2718, %v2878
      %v2880 = vpop.f32.mrb[0].mxu0
      %v2881 = vpop.f32.mrb[0].mxu0
      %v2882 = vadd.f32 %v2721, %v2881
      %v2883 = vpop.f32.mrb[0].mxu0
      %2884 = vmatprep.mubr.bf16.mxu0 %v1381
      %2885 = vmatmul.mubr.bf16.gmra.mrb[0].mxu0 %v1380
      %v2886 = vpop.f32.mrb[0].mxu0
      %v2887 = vadd.f32 %v2726, %v2886
      %v2888 = vpop.f32.mrb[0].mxu0
      %v2889 = vpop.f32.mrb[0].mxu0
      %v2890 = vadd.f32 %v2729, %v2889
      %v2891 = vpop.f32.mrb[0].mxu0
      %2892 = vmatprep.mubr.bf16.mxu0 %v1394
      %2893 = vmatmul.mubr.bf16.gmra.mrb[0].mxu0 %v1393
      %v2894 = vpop.f32.mrb[0].mxu0
      %v2895 = vadd.f32 %v2734, %v2894
      %v2896 = vpop.f32.mrb[0].mxu0
      %v2897 = vpop.f32.mrb[0].mxu0
      %v2898 = vadd.f32 %v2737, %v2897
      %v2899 = vpop.f32.mrb[0].mxu0
      %2900 = vmatprep.mubr.bf16.mxu0 %v1407
      %2901 = vmatmul.mubr.bf16.gmra.mrb[0].mxu0 %v1406
      %v2902 = vpop.f32.mrb[0].mxu0
      %v2903 = vadd.f32 %v2742, %v2902
      %v2904 = vpop.f32.mrb[0].mxu0
      %v2905 = vpop.f32.mrb[0].mxu0
      %v2906 = vadd.f32 %v2745, %v2905
      %v2907 = vpop.f32.mrb[0].mxu0
      %2908 = vmatprep.mubr.bf16.mxu0 %v1420
      %2909 = vmatmul.mubr.bf16.gmra.mrb[0].mxu0 %v1419
      %v2910 = vpop.f32.mrb[0].mxu0
      %v2911 = vadd.f32 %v2750, %v2910
      %v2912 = vpop.f32.mrb[0].mxu0
      %v2913 = vpop.f32.mrb[0].mxu0
      %v2914 = vadd.f32 %v2753, %v2913
      %v2915 = vpop.f32.mrb[0].mxu0
      %2916 = vmatprep.mubr.bf16.mxu0 %v1433
      %2917 = vmatmul.mubr.bf16.gmra.mrb[0].mxu0 %v1432
      %v2918 = vpop.f32.mrb[0].mxu0
      %v2919 = vadd.f32 %v2758, %v2918
      %v2920 = vpop.f32.mrb[0].mxu0
      %v2921 = vpop.f32.mrb[0].mxu0
      %v2922 = vadd.f32 %v2761, %v2921
      %v2923 = vpop.f32.mrb[0].mxu0
      %2924 = vmatprep.mubr.bf16.mxu0 %v1446
      %2925 = vmatmul.mubr.bf16.gmra.mrb[0].mxu0 %v1445
      %v2926 = vpop.f32.mrb[0].mxu0
      %v2927 = vadd.f32 %v2766, %v2926
      %v2928 = vpop.f32.mrb[0].mxu0
      %v2929 = vpop.f32.mrb[0].mxu0
      %v2930 = vadd.f32 %v2769, %v2929
      %v2931 = vpop.f32.mrb[0].mxu0
      %2932 = vmatprep.mubr.bf16.mxu0 %v1459
      %2933 = vmatmul.mubr.bf16.gmra.mrb[0].mxu0 %v1458
      %v2934 = vpop.f32.mrb[0].mxu0
      %v2935 = vadd.f32 %v2774, %v2934
      %v2936 = vpop.f32.mrb[0].mxu0
      %v2937 = vpop.f32.mrb[0].mxu0
      %v2938 = vadd.f32 %v2777, %v2937
      %v2939 = vpop.f32.mrb[0].mxu0
      %2940 = vdwg.mxu0
      %2941 = vmatprep.subr.bf16.mxu0 0
      %2942 = vmatpush1.bf16.msra.mxu0 %v2153
      %2943 = vmatprep.subr.bf16.mxu0 0
      %2944 = vmatpush1.bf16.msra.mxu0 %v2154
      %2945 = vmatprep.subr.bf16.mxu0 0
      %2946 = vmatpush1.bf16.msra.mxu0 %v2155
      %2947 = vmatprep.subr.bf16.mxu0 0
      %2948 = vmatpush1.bf16.msra.mxu0 %v2156
      %2949 = vmatprep.subr.bf16.mxu0 0
      %2950 = vmatpush1.bf16.msra.mxu0 %v2157
      %2951 = vmatprep.subr.bf16.mxu0 0
      %2952 = vmatpush1.bf16.msra.mxu0 %v2158
      %2953 = vmatprep.subr.bf16.mxu0 0
      %2954 = vmatpush1.bf16.msra.mxu0 %v2159
      %2955 = vmatprep.subr.bf16.mxu0 0
      %2956 = vmatpush1.bf16.msra.mxu0 %v2160
      %2957 = vmatprep.subr.bf16.mxu0 0
      %2958 = vmatpush1.bf16.msra.mxu0 %v2161
      %2959 = vmatprep.subr.bf16.mxu0 0
      %2960 = vmatpush1.bf16.msra.mxu0 %v2162
      %2961 = vmatprep.subr.bf16.mxu0 0
      %2962 = vmatpush1.bf16.msra.mxu0 %v2163
      %2963 = vmatprep.subr.bf16.mxu0 0
      %2964 = vmatpush1.bf16.msra.mxu0 %v2164
      %2965 = vmatprep.subr.bf16.mxu0 0
      %2966 = vmatpush1.bf16.msra.mxu0 %v2165
      %2967 = vmatprep.subr.bf16.mxu0 0
      %2968 = vmatpush1.bf16.msra.mxu0 %v2166
      %2969 = vmatprep.subr.bf16.mxu0 0
      %2970 = vmatpush1.bf16.msra.mxu0 %v2167
      %2971 = vmatprep.subr.bf16.mxu0 0
      %2972 = vmatpush1.bf16.msra.mxu0 %v2168
      %2973 = vmatprep.mubr.bf16.mxu0 %v1266
      %2974 = vmatmul.mubr.bf16.gmra.mrb[0].mxu0 %v1265
      %v2975 = vpop.f32.mrb[0].mxu0
      %v2976 = vadd.f32 %v2815, %v2975
      %v2977 = vpop.f32.mrb[0].mxu0
      %v2978 = vpop.f32.mrb[0].mxu0
      %v2979 = vadd.f32 %v2818, %v2978
      %v2980 = vpop.f32.mrb[0].mxu0
      %2981 = vmatprep.mubr.bf16.mxu0 %v1279
      %2982 = vmatmul.mubr.bf16.gmra.mrb[0].mxu0 %v1278
      %v2983 = vpop.f32.mrb[0].mxu0
      %v2984 = vadd.f32 %v2823, %v2983
      %v2985 = vpop.f32.mrb[0].mxu0
      %v2986 = vpop.f32.mrb[0].mxu0
      %v2987 = vadd.f32 %v2826, %v2986
      %v2988 = vpop.f32.mrb[0].mxu0
      %2989 = vmatprep.mubr.bf16.mxu0 %v1292
      %2990 = vmatmul.mubr.bf16.gmra.mrb[0].mxu0 %v1291
      %v2991 = vpop.f32.mrb[0].mxu0
      %v2992 = vadd.f32 %v2831, %v2991
      %v2993 = vpop.f32.mrb[0].mxu0
      %v2994 = vpop.f32.mrb[0].mxu0
      %v2995 = vadd.f32 %v2834, %v2994
      %v2996 = vpop.f32.mrb[0].mxu0
      %2997 = vmatprep.mubr.bf16.mxu0 %v1305
      %2998 = vmatmul.mubr.bf16.gmra.mrb[0].mxu0 %v1304
      %v2999 = vpop.f32.mrb[0].mxu0
      %v3000 = vadd.f32 %v2839, %v2999
      %v3001 = vpop.f32.mrb[0].mxu0
      %v3002 = vpop.f32.mrb[0].mxu0
      %v3003 = vadd.f32 %v2842, %v3002
      %v3004 = vpop.f32.mrb[0].mxu0
      %3005 = vmatprep.mubr.bf16.mxu0 %v1318
      %3006 = vmatmul.mubr.bf16.gmra.mrb[0].mxu0 %v1317
      %v3007 = vpop.f32.mrb[0].mxu0
      %v3008 = vadd.f32 %v2847, %v3007
      %v3009 = vpop.f32.mrb[0].mxu0
      %v3010 = vpop.f32.mrb[0].mxu0
      %v3011 = vadd.f32 %v2850, %v3010
      %v3012 = vpop.f32.mrb[0].mxu0
      %3013 = vmatprep.mubr.bf16.mxu0 %v1331
      %3014 = vmatmul.mubr.bf16.gmra.mrb[0].mxu0 %v1330
      %v3015 = vpop.f32.mrb[0].mxu0
      %v3016 = vadd.f32 %v2855, %v3015
      %v3017 = vpop.f32.mrb[0].mxu0
      %v3018 = vpop.f32.mrb[0].mxu0
      %v3019 = vadd.f32 %v2858, %v3018
      %v3020 = vpop.f32.mrb[0].mxu0
      %3021 = vmatprep.mubr.bf16.mxu0 %v1344
      %3022 = vmatmul.mubr.bf16.gmra.mrb[0].mxu0 %v1343
      %v3023 = vpop.f32.mrb[0].mxu0
      %v3024 = vadd.f32 %v2863, %v3023
      %v3025 = vpop.f32.mrb[0].mxu0
      %v3026 = vpop.f32.mrb[0].mxu0
      %v3027 = vadd.f32 %v2866, %v3026
      %v3028 = vpop.f32.mrb[0].mxu0
      %3029 = vmatprep.mubr.bf16.mxu0 %v1357
      %3030 = vmatmul.mubr.bf16.gmra.mrb[0].mxu0 %v1356
      %v3031 = vpop.f32.mrb[0].mxu0
      %v3032 = vadd.f32 %v2871, %v3031
      %v3033 = vpop.f32.mrb[0].mxu0
      %v3034 = vpop.f32.mrb[0].mxu0
      %v3035 = vadd.f32 %v2874, %v3034
      %v3036 = vpop.f32.mrb[0].mxu0
      %3037 = vmatprep.mubr.bf16.mxu0 %v1370
      %3038 = vmatmul.mubr.bf16.gmra.mrb[0].mxu0 %v1369
      %v3039 = vpop.f32.mrb[0].mxu0
      %v3040 = vadd.f32 %v2879, %v3039
      %v3041 = vpop.f32.mrb[0].mxu0
      %v3042 = vpop.f32.mrb[0].mxu0
      %v3043 = vadd.f32 %v2882, %v3042
      %v3044 = vpop.f32.mrb[0].mxu0
      %3045 = vmatprep.mubr.bf16.mxu0 %v1383
      %3046 = vmatmul.mubr.bf16.gmra.mrb[0].mxu0 %v1382
      %v3047 = vpop.f32.mrb[0].mxu0
      %v3048 = vadd.f32 %v2887, %v3047
      %v3049 = vpop.f32.mrb[0].mxu0
      %v3050 = vpop.f32.mrb[0].mxu0
      %v3051 = vadd.f32 %v2890, %v3050
      %v3052 = vpop.f32.mrb[0].mxu0
      %3053 = vmatprep.mubr.bf16.mxu0 %v1396
      %3054 = vmatmul.mubr.bf16.gmra.mrb[0].mxu0 %v1395
      %v3055 = vpop.f32.mrb[0].mxu0
      %v3056 = vadd.f32 %v2895, %v3055
      %v3057 = vpop.f32.mrb[0].mxu0
      %v3058 = vpop.f32.mrb[0].mxu0
      %v3059 = vadd.f32 %v2898, %v3058
      %v3060 = vpop.f32.mrb[0].mxu0
      %3061 = vmatprep.mubr.bf16.mxu0 %v1409
      %3062 = vmatmul.mubr.bf16.gmra.mrb[0].mxu0 %v1408
      %v3063 = vpop.f32.mrb[0].mxu0
      %v3064 = vadd.f32 %v2903, %v3063
      %v3065 = vpop.f32.mrb[0].mxu0
      %v3066 = vpop.f32.mrb[0].mxu0
      %v3067 = vadd.f32 %v2906, %v3066
      %v3068 = vpop.f32.mrb[0].mxu0
      %3069 = vmatprep.mubr.bf16.mxu0 %v1422
      %3070 = vmatmul.mubr.bf16.gmra.mrb[0].mxu0 %v1421
      %v3071 = vpop.f32.mrb[0].mxu0
      %v3072 = vadd.f32 %v2911, %v3071
      %v3073 = vpop.f32.mrb[0].mxu0
      %v3074 = vpop.f32.mrb[0].mxu0
      %v3075 = vadd.f32 %v2914, %v3074
      %v3076 = vpop.f32.mrb[0].mxu0
      %3077 = vmatprep.mubr.bf16.mxu0 %v1435
      %3078 = vmatmul.mubr.bf16.gmra.mrb[0].mxu0 %v1434
      %v3079 = vpop.f32.mrb[0].mxu0
      %v3080 = vadd.f32 %v2919, %v3079
      %v3081 = vpop.f32.mrb[0].mxu0
      %v3082 = vpop.f32.mrb[0].mxu0
      %v3083 = vadd.f32 %v2922, %v3082
      %v3084 = vpop.f32.mrb[0].mxu0
      %3085 = vmatprep.mubr.bf16.mxu0 %v1448
      %3086 = vmatmul.mubr.bf16.gmra.mrb[0].mxu0 %v1447
      %v3087 = vpop.f32.mrb[0].mxu0
      %v3088 = vadd.f32 %v2927, %v3087
      %v3089 = vpop.f32.mrb[0].mxu0
      %v3090 = vpop.f32.mrb[0].mxu0
      %v3091 = vadd.f32 %v2930, %v3090
      %v3092 = vpop.f32.mrb[0].mxu0
      %3093 = vmatprep.mubr.bf16.mxu0 %v1461
      %3094 = vmatmul.mubr.bf16.gmra.mrb[0].mxu0 %v1460
      %v3095 = vpop.f32.mrb[0].mxu0
      %v3096 = vadd.f32 %v2935, %v3095
      %v3097 = vpop.f32.mrb[0].mxu0
      %v3098 = vpop.f32.mrb[0].mxu0
      %v3099 = vadd.f32 %v2938, %v3098
      %v3100 = vpop.f32.mrb[0].mxu0
      %3101 = vdwg.mxu0
      %3102 = vmatprep.subr.bf16.mxu0 0
      %3103 = vmatpush1.bf16.msra.mxu0 %v2169
      %3104 = vmatprep.subr.bf16.mxu0 0
      %3105 = vmatpush1.bf16.msra.mxu0 %v2170
      %3106 = vmatprep.subr.bf16.mxu0 0
      %3107 = vmatpush1.bf16.msra.mxu0 %v2171
      %3108 = vmatprep.subr.bf16.mxu0 0
      %3109 = vmatpush1.bf16.msra.mxu0 %v2172
      %3110 = vmatprep.subr.bf16.mxu0 0
      %3111 = vmatpush1.bf16.msra.mxu0 %v2173
      %3112 = vmatprep.subr.bf16.mxu0 0
      %3113 = vmatpush1.bf16.msra.mxu0 %v2174
      %3114 = vmatprep.subr.bf16.mxu0 0
      %3115 = vmatpush1.bf16.msra.mxu0 %v2175
      %3116 = vmatprep.subr.bf16.mxu0 0
      %3117 = vmatpush1.bf16.msra.mxu0 %v2176
      %3118 = vmatprep.subr.bf16.mxu0 0
      %3119 = vmatpush1.bf16.msra.mxu0 %v2177
      %3120 = vmatprep.subr.bf16.mxu0 0
      %3121 = vmatpush1.bf16.msra.mxu0 %v2178
      %3122 = vmatprep.subr.bf16.mxu0 0
      %3123 = vmatpush1.bf16.msra.mxu0 %v2179
      %3124 = vmatprep.subr.bf16.mxu0 0
      %3125 = vmatpush1.bf16.msra.mxu0 %v2180
      %3126 = vmatprep.subr.bf16.mxu0 0
      %3127 = vmatpush1.bf16.msra.mxu0 %v2181
      %3128 = vmatprep.subr.bf16.mxu0 0
      %3129 = vmatpush1.bf16.msra.mxu0 %v2182
      %3130 = vmatprep.subr.bf16.mxu0 0
      %3131 = vmatpush1.bf16.msra.mxu0 %v2183
      %3132 = vmatprep.subr.bf16.mxu0 0
      %3133 = vmatpush1.bf16.msra.mxu0 %v2184
      %3134 = vmatprep.mubr.bf16.mxu0 %v1268
      %3135 = vmatmul.mubr.bf16.gmra.mrb[0].mxu0 %v1267
      %v3136 = vpop.f32.mrb[0].mxu0
      %v3137 = vadd.f32 %v2976, %v3136
      %v3138 = vpop.f32.mrb[0].mxu0
      %v3139 = vpop.f32.mrb[0].mxu0
      %v3140 = vadd.f32 %v2979, %v3139
      %v3141 = vpop.f32.mrb[0].mxu0
      %3142 = vmatprep.mubr.bf16.mxu0 %v1281
      %3143 = vmatmul.mubr.bf16.gmra.mrb[0].mxu0 %v1280
      %v3144 = vpop.f32.mrb[0].mxu0
      %v3145 = vadd.f32 %v2984, %v3144
      %v3146 = vpop.f32.mrb[0].mxu0
      %v3147 = vpop.f32.mrb[0].mxu0
      %v3148 = vadd.f32 %v2987, %v3147
      %v3149 = vpop.f32.mrb[0].mxu0
      %3150 = vmatprep.mubr.bf16.mxu0 %v1294
      %3151 = vmatmul.mubr.bf16.gmra.mrb[0].mxu0 %v1293
      %v3152 = vpop.f32.mrb[0].mxu0
      %v3153 = vadd.f32 %v2992, %v3152
      %v3154 = vpop.f32.mrb[0].mxu0
      %v3155 = vpop.f32.mrb[0].mxu0
      %v3156 = vadd.f32 %v2995, %v3155
      %v3157 = vpop.f32.mrb[0].mxu0
      %3158 = vmatprep.mubr.bf16.mxu0 %v1307
      %3159 = vmatmul.mubr.bf16.gmra.mrb[0].mxu0 %v1306
      %v3160 = vpop.f32.mrb[0].mxu0
      %v3161 = vadd.f32 %v3000, %v3160
      %v3162 = vpop.f32.mrb[0].mxu0
      %v3163 = vpop.f32.mrb[0].mxu0
      %v3164 = vadd.f32 %v3003, %v3163
      %v3165 = vpop.f32.mrb[0].mxu0
      %3166 = vmatprep.mubr.bf16.mxu0 %v1320
      %3167 = vmatmul.mubr.bf16.gmra.mrb[0].mxu0 %v1319
      %v3168 = vpop.f32.mrb[0].mxu0
      %v3169 = vadd.f32 %v3008, %v3168
      %v3170 = vpop.f32.mrb[0].mxu0
      %v3171 = vpop.f32.mrb[0].mxu0
      %v3172 = vadd.f32 %v3011, %v3171
      %v3173 = vpop.f32.mrb[0].mxu0
      %3174 = vmatprep.mubr.bf16.mxu0 %v1333
      %3175 = vmatmul.mubr.bf16.gmra.mrb[0].mxu0 %v1332
      %v3176 = vpop.f32.mrb[0].mxu0
      %v3177 = vadd.f32 %v3016, %v3176
      %v3178 = vpop.f32.mrb[0].mxu0
      %v3179 = vpop.f32.mrb[0].mxu0
      %v3180 = vadd.f32 %v3019, %v3179
      %v3181 = vpop.f32.mrb[0].mxu0
      %3182 = vmatprep.mubr.bf16.mxu0 %v1346
      %3183 = vmatmul.mubr.bf16.gmra.mrb[0].mxu0 %v1345
      %v3184 = vpop.f32.mrb[0].mxu0
      %v3185 = vadd.f32 %v3024, %v3184
      %v3186 = vpop.f32.mrb[0].mxu0
      %v3187 = vpop.f32.mrb[0].mxu0
      %v3188 = vadd.f32 %v3027, %v3187
      %v3189 = vpop.f32.mrb[0].mxu0
      %3190 = vmatprep.mubr.bf16.mxu0 %v1359
      %3191 = vmatmul.mubr.bf16.gmra.mrb[0].mxu0 %v1358
      %v3192 = vpop.f32.mrb[0].mxu0
      %v3193 = vadd.f32 %v3032, %v3192
      %v3194 = vpop.f32.mrb[0].mxu0
      %v3195 = vpop.f32.mrb[0].mxu0
      %v3196 = vadd.f32 %v3035, %v3195
      %v3197 = vpop.f32.mrb[0].mxu0
      %3198 = vmatprep.mubr.bf16.mxu0 %v1372
      %3199 = vmatmul.mubr.bf16.gmra.mrb[0].mxu0 %v1371
      %v3200 = vpop.f32.mrb[0].mxu0
      %v3201 = vadd.f32 %v3040, %v3200
      %v3202 = vpop.f32.mrb[0].mxu0
      %v3203 = vpop.f32.mrb[0].mxu0
      %v3204 = vadd.f32 %v3043, %v3203
      %v3205 = vpop.f32.mrb[0].mxu0
      %3206 = vmatprep.mubr.bf16.mxu0 %v1385
      %3207 = vmatmul.mubr.bf16.gmra.mrb[0].mxu0 %v1384
      %v3208 = vpop.f32.mrb[0].mxu0
      %v3209 = vadd.f32 %v3048, %v3208
      %v3210 = vpop.f32.mrb[0].mxu0
      %v3211 = vpop.f32.mrb[0].mxu0
      %v3212 = vadd.f32 %v3051, %v3211
      %v3213 = vpop.f32.mrb[0].mxu0
      %3214 = vmatprep.mubr.bf16.mxu0 %v1398
      %3215 = vmatmul.mubr.bf16.gmra.mrb[0].mxu0 %v1397
      %v3216 = vpop.f32.mrb[0].mxu0
      %v3217 = vadd.f32 %v3056, %v3216
      %v3218 = vpop.f32.mrb[0].mxu0
      %v3219 = vpop.f32.mrb[0].mxu0
      %v3220 = vadd.f32 %v3059, %v3219
      %v3221 = vpop.f32.mrb[0].mxu0
      %3222 = vmatprep.mubr.bf16.mxu0 %v1411
      %3223 = vmatmul.mubr.bf16.gmra.mrb[0].mxu0 %v1410
      %v3224 = vpop.f32.mrb[0].mxu0
      %v3225 = vadd.f32 %v3064, %v3224
      %v3226 = vpop.f32.mrb[0].mxu0
      %v3227 = vpop.f32.mrb[0].mxu0
      %v3228 = vadd.f32 %v3067, %v3227
      %v3229 = vpop.f32.mrb[0].mxu0
      %3230 = vmatprep.mubr.bf16.mxu0 %v1424
      %3231 = vmatmul.mubr.bf16.gmra.mrb[0].mxu0 %v1423
      %v3232 = vpop.f32.mrb[0].mxu0
      %v3233 = vadd.f32 %v3072, %v3232
      %v3234 = vpop.f32.mrb[0].mxu0
      %v3235 = vpop.f32.mrb[0].mxu0
      %v3236 = vadd.f32 %v3075, %v3235
      %v3237 = vpop.f32.mrb[0].mxu0
      %3238 = vmatprep.mubr.bf16.mxu0 %v1437
      %3239 = vmatmul.mubr.bf16.gmra.mrb[0].mxu0 %v1436
      %v3240 = vpop.f32.mrb[0].mxu0
      %v3241 = vadd.f32 %v3080, %v3240
      %v3242 = vpop.f32.mrb[0].mxu0
      %v3243 = vpop.f32.mrb[0].mxu0
      %v3244 = vadd.f32 %v3083, %v3243
      %v3245 = vpop.f32.mrb[0].mxu0
      %3246 = vmatprep.mubr.bf16.mxu0 %v1450
      %3247 = vmatmul.mubr.bf16.gmra.mrb[0].mxu0 %v1449
      %v3248 = vpop.f32.mrb[0].mxu0
      %v3249 = vadd.f32 %v3088, %v3248
      %v3250 = vpop.f32.mrb[0].mxu0
      %v3251 = vpop.f32.mrb[0].mxu0
      %v3252 = vadd.f32 %v3091, %v3251
      %v3253 = vpop.f32.mrb[0].mxu0
      %3254 = vmatprep.mubr.bf16.mxu0 %v1463
      %3255 = vmatmul.mubr.bf16.gmra.mrb[0].mxu0 %v1462
      %v3256 = vpop.f32.mrb[0].mxu0
      %v3257 = vadd.f32 %v3096, %v3256
      %v3258 = vpop.f32.mrb[0].mxu0
      %v3259 = vpop.f32.mrb[0].mxu0
      %v3260 = vadd.f32 %v3099, %v3259
      %v3261 = vpop.f32.mrb[0].mxu0
      %3262 = vdwg.mxu0
      %3263 = vmatprep.subr.bf16.mxu0 0
      %3264 = vmatpush1.bf16.msra.mxu0 %v2185
      %3265 = vmatprep.subr.bf16.mxu0 0
      %3266 = vmatpush1.bf16.msra.mxu0 %v2186
      %3267 = vmatprep.subr.bf16.mxu0 0
      %3268 = vmatpush1.bf16.msra.mxu0 %v2187
      %3269 = vmatprep.subr.bf16.mxu0 0
      %3270 = vmatpush1.bf16.msra.mxu0 %v2188
      %3271 = vmatprep.subr.bf16.mxu0 0
      %3272 = vmatpush1.bf16.msra.mxu0 %v2189
      %3273 = vmatprep.subr.bf16.mxu0 0
      %3274 = vmatpush1.bf16.msra.mxu0 %v2190
      %3275 = vmatprep.subr.bf16.mxu0 0
      %3276 = vmatpush1.bf16.msra.mxu0 %v2191
      %3277 = vmatprep.subr.bf16.mxu0 0
      %3278 = vmatpush1.bf16.msra.mxu0 %v2192
      %3279 = vmatprep.subr.bf16.mxu0 0
      %3280 = vmatpush1.bf16.msra.mxu0 0
      %3281 = vmatprep.subr.bf16.mxu0 0
      %3282 = vmatpush1.bf16.msra.mxu0 0
      %3283 = vmatprep.subr.bf16.mxu0 0
      %3284 = vmatpush1.bf16.msra.mxu0 0
      %3285 = vmatprep.subr.bf16.mxu0 0
      %3286 = vmatpush1.bf16.msra.mxu0 0
      %3287 = vmatprep.subr.bf16.mxu0 0
      %3288 = vmatpush1.bf16.msra.mxu0 0
      %3289 = vmatprep.subr.bf16.mxu0 0
      %3290 = vmatpush1.bf16.msra.mxu0 0
      %3291 = vmatprep.subr.bf16.mxu0 0
      %3292 = vmatpush1.bf16.msra.mxu0 0
      %3293 = vmatprep.subr.bf16.mxu0 0
      %3294 = vmatpush1.bf16.msra.mxu0 0
      %3295 = vmatprep.mubr.bf16.mxu0 0
      %3296 = vmatmul.mubr.bf16.gmra.mrb[0].mxu0 %v1269
      %v3297 = vpop.f32.mrb[0].mxu0
      %v3298 = vadd.f32 %v3137, %v3297
      %v3299 = vpop.f32.mrb[0].mxu0
      %v3300 = vpop.f32.mrb[0].mxu0
      %v3301 = vadd.f32 %v3140, %v3300
      %v3302 = vpop.f32.mrb[0].mxu0
      %3303 = vmatprep.mubr.bf16.mxu0 0
      %3304 = vmatmul.mubr.bf16.gmra.mrb[0].mxu0 %v1282
      %v3305 = vpop.f32.mrb[0].mxu0
      %v3306 = vadd.f32 %v3145, %v3305
      %v3307 = vpop.f32.mrb[0].mxu0
      %v3308 = vpop.f32.mrb[0].mxu0
      %v3309 = vadd.f32 %v3148, %v3308
      %v3310 = vpop.f32.mrb[0].mxu0
      %3311 = vmatprep.mubr.bf16.mxu0 0
      %3312 = vmatmul.mubr.bf16.gmra.mrb[0].mxu0 %v1295
      %v3313 = vpop.f32.mrb[0].mxu0
      %v3314 = vadd.f32 %v3153, %v3313
      %v3315 = vpop.f32.mrb[0].mxu0
      %v3316 = vpop.f32.mrb[0].mxu0
      %v3317 = vadd.f32 %v3156, %v3316
      %v3318 = vpop.f32.mrb[0].mxu0
      %3319 = vmatprep.mubr.bf16.mxu0 0
      %3320 = vmatmul.mubr.bf16.gmra.mrb[0].mxu0 %v1308
      %v3321 = vpop.f32.mrb[0].mxu0
      %v3322 = vadd.f32 %v3161, %v3321
      %v3323 = vpop.f32.mrb[0].mxu0
      %v3324 = vpop.f32.mrb[0].mxu0
      %v3325 = vadd.f32 %v3164, %v3324
      %v3326 = vpop.f32.mrb[0].mxu0
      %3327 = vmatprep.mubr.bf16.mxu0 0
      %3328 = vmatmul.mubr.bf16.gmra.mrb[0].mxu0 %v1321
      %v3329 = vpop.f32.mrb[0].mxu0
      %v3330 = vadd.f32 %v3169, %v3329
      %v3331 = vpop.f32.mrb[0].mxu0
      %v3332 = vpop.f32.mrb[0].mxu0
      %v3333 = vadd.f32 %v3172, %v3332
      %v3334 = vpop.f32.mrb[0].mxu0
      %3335 = vmatprep.mubr.bf16.mxu0 0
      %3336 = vmatmul.mubr.bf16.gmra.mrb[0].mxu0 %v1334
      %v3337 = vpop.f32.mrb[0].mxu0
      %v3338 = vadd.f32 %v3177, %v3337
      %v3339 = vpop.f32.mrb[0].mxu0
      %v3340 = vpop.f32.mrb[0].mxu0
      %v3341 = vadd.f32 %v3180, %v3340
      %v3342 = vpop.f32.mrb[0].mxu0
      %3343 = vmatprep.mubr.bf16.mxu0 0
      %3344 = vmatmul.mubr.bf16.gmra.mrb[0].mxu0 %v1347
      %v3345 = vpop.f32.mrb[0].mxu0
      %v3346 = vadd.f32 %v3185, %v3345
      %v3347 = vpop.f32.mrb[0].mxu0
      %v3348 = vpop.f32.mrb[0].mxu0
      %v3349 = vadd.f32 %v3188, %v3348
      %v3350 = vpop.f32.mrb[0].mxu0
      %3351 = vmatprep.mubr.bf16.mxu0 0
      %3352 = vmatmul.mubr.bf16.gmra.mrb[0].mxu0 %v1360
      %v3353 = vpop.f32.mrb[0].mxu0
      %v3354 = vadd.f32 %v3193, %v3353
      %v3355 = vpop.f32.mrb[0].mxu0
      %v3356 = vpop.f32.mrb[0].mxu0
      %v3357 = vadd.f32 %v3196, %v3356
      %v3358 = vpop.f32.mrb[0].mxu0
      %3359 = vmatprep.mubr.bf16.mxu0 0
      %3360 = vmatmul.mubr.bf16.gmra.mrb[0].mxu0 %v1373
      %v3361 = vpop.f32.mrb[0].mxu0
      %v3362 = vadd.f32 %v3201, %v3361
      %v3363 = vpop.f32.mrb[0].mxu0
      %v3364 = vpop.f32.mrb[0].mxu0
      %v3365 = vadd.f32 %v3204, %v3364
      %v3366 = vpop.f32.mrb[0].mxu0
      %3367 = vmatprep.mubr.bf16.mxu0 0
      %3368 = vmatmul.mubr.bf16.gmra.mrb[0].mxu0 %v1386
      %v3369 = vpop.f32.mrb[0].mxu0
      %v3370 = vadd.f32 %v3209, %v3369
      %v3371 = vpop.f32.mrb[0].mxu0
      %v3372 = vpop.f32.mrb[0].mxu0
      %v3373 = vadd.f32 %v3212, %v3372
      %v3374 = vpop.f32.mrb[0].mxu0
      %3375 = vmatprep.mubr.bf16.mxu0 0
      %3376 = vmatmul.mubr.bf16.gmra.mrb[0].mxu0 %v1399
      %v3377 = vpop.f32.mrb[0].mxu0
      %v3378 = vadd.f32 %v3217, %v3377
      %v3379 = vpop.f32.mrb[0].mxu0
      %v3380 = vpop.f32.mrb[0].mxu0
      %v3381 = vadd.f32 %v3220, %v3380
      %v3382 = vpop.f32.mrb[0].mxu0
      %3383 = vmatprep.mubr.bf16.mxu0 0
      %3384 = vmatmul.mubr.bf16.gmra.mrb[0].mxu0 %v1412
      %v3385 = vpop.f32.mrb[0].mxu0
      %v3386 = vadd.f32 %v3225, %v3385
      %v3387 = vpop.f32.mrb[0].mxu0
      %v3388 = vpop.f32.mrb[0].mxu0
      %v3389 = vadd.f32 %v3228, %v3388
      %v3390 = vpop.f32.mrb[0].mxu0
      %3391 = vmatprep.mubr.bf16.mxu0 0
      %3392 = vmatmul.mubr.bf16.gmra.mrb[0].mxu0 %v1425
      %v3393 = vpop.f32.mrb[0].mxu0
      %v3394 = vadd.f32 %v3233, %v3393
      %v3395 = vpop.f32.mrb[0].mxu0
      %v3396 = vpop.f32.mrb[0].mxu0
      %v3397 = vadd.f32 %v3236, %v3396
      %v3398 = vpop.f32.mrb[0].mxu0
      %3399 = vmatprep.mubr.bf16.mxu0 0
      %3400 = vmatmul.mubr.bf16.gmra.mrb[0].mxu0 %v1438
      %v3401 = vpop.f32.mrb[0].mxu0
      %v3402 = vadd.f32 %v3241, %v3401
      %v3403 = vpop.f32.mrb[0].mxu0
      %v3404 = vpop.f32.mrb[0].mxu0
      %v3405 = vadd.f32 %v3244, %v3404
      %v3406 = vpop.f32.mrb[0].mxu0
      %3407 = vmatprep.mubr.bf16.mxu0 0
      %3408 = vmatmul.mubr.bf16.gmra.mrb[0].mxu0 %v1451
      %v3409 = vpop.f32.mrb[0].mxu0
      %v3410 = vadd.f32 %v3249, %v3409
      %v3411 = vpop.f32.mrb[0].mxu0
      %v3412 = vpop.f32.mrb[0].mxu0
      %v3413 = vadd.f32 %v3252, %v3412
      %v3414 = vpop.f32.mrb[0].mxu0
      %3415 = vmatprep.mubr.bf16.mxu0 0
      %3416 = vmatmul.mubr.bf16.gmra.mrb[0].mxu0 %v1464
      %v3417 = vpop.f32.mrb[0].mxu0
      %v3418 = vadd.f32 %v3257, %v3417
      %v3419 = vpop.f32.mrb[0].mxu0
      %v3420 = vpop.f32.mrb[0].mxu0
      %v3421 = vadd.f32 %v3260, %v3420
      %v3422 = vpop.f32.mrb[0].mxu0
      %3423 = vdwg.mxu0
      %v3424 = vmax.f32 %v3298, 0.0
      %v3425 = vmax.f32 %v3301, 0.0
      %v3426 = vmax.f32 %v3306, 0.0
      %v3427 = vmax.f32 %v3309, 0.0
      %v3428 = vmax.f32 %v3314, 0.0
      %v3429 = vmax.f32 %v3317, 0.0
      %v3430 = vmax.f32 %v3322, 0.0
      %v3431 = vmax.f32 %v3325, 0.0
      %v3432 = vmax.f32 %v3330, 0.0
      %v3433 = vmax.f32 %v3333, 0.0
      %v3434 = vmax.f32 %v3338, 0.0
      %v3435 = vmax.f32 %v3341, 0.0
      %v3436 = vmax.f32 %v3346, 0.0
      %v3437 = vmax.f32 %v3349, 0.0
      %v3438 = vmax.f32 %v3354, 0.0
      %v3439 = vmax.f32 %v3357, 0.0
      %v3440 = vmax.f32 %v3362, 0.0
      %v3441 = vmax.f32 %v3365, 0.0
      %v3442 = vmax.f32 %v3370, 0.0
      %v3443 = vmax.f32 %v3373, 0.0
      %v3444 = vmax.f32 %v3378, 0.0
      %v3445 = vmax.f32 %v3381, 0.0
      %v3446 = vmax.f32 %v3386, 0.0
      %v3447 = vmax.f32 %v3389, 0.0
      %v3448 = vmax.f32 %v3394, 0.0
      %v3449 = vmax.f32 %v3397, 0.0
      %v3450 = vmax.f32 %v3402, 0.0
      %v3451 = vmax.f32 %v3405, 0.0
      %v3452 = vmax.f32 %v3410, 0.0
      %v3453 = vmax.f32 %v3413, 0.0
      %v3454 = vmax.f32 %v3418, 0.0
      %v3455 = vmax.f32 %v3421, 0.0
      %3456 = vst [vmem:[%s175] sm:$0xff] %v3424
      %3457 = vst [vmem:[%s175 + $0x8] sm:$0xff] %v3425
      %3458 = vst [vmem:[%s175 + $0x10] sm:$0xff] %v3426
      %3459 = vst [vmem:[%s175 + $0x18] sm:$0xff] %v3427
      %3460 = vst [vmem:[%s175 + $0x20] sm:$0xff] %v3428
      %3461 = vst [vmem:[%s175 + $0x28] sm:$0xff] %v3429
      %3462 = vst [vmem:[%s175 + $0x30] sm:$0xff] %v3430
      %3463 = vst [vmem:[%s175 + $0x38] sm:$0xff] %v3431
      %3464 = vst [vmem:[%s175 + $0x40] sm:$0xff] %v3432
      %3465 = vst [vmem:[%s175 + $0x48] sm:$0xff] %v3433
      %3466 = vst [vmem:[%s175 + $0x50] sm:$0xff] %v3434
      %3467 = vst [vmem:[%s175 + $0x58] sm:$0xff] %v3435
      %3468 = vst [vmem:[%s175 + $0x60] sm:$0xff] %v3436
      %3469 = vst [vmem:[%s175 + $0x68] sm:$0xff] %v3437
      %3470 = vst [vmem:[%s175 + $0x70] sm:$0xff] %v3438
      %3471 = vst [vmem:[%s175 + $0x78] sm:$0xff] %v3439
      %3472 = vst [vmem:[%s175 + $0x80] sm:$0xff] %v3440
      %3473 = vst [vmem:[%s175 + $0x88] sm:$0xff] %v3441
      %3474 = vst [vmem:[%s175 + $0x90] sm:$0xff] %v3442
      %3475 = vst [vmem:[%s175 + $0x98] sm:$0xff] %v3443
      %3476 = vst [vmem:[%s175 + $0xa0] sm:$0xff] %v3444
      %3477 = vst [vmem:[%s175 + $0xa8] sm:$0xff] %v3445
      %3478 = vst [vmem:[%s175 + $0xb0] sm:$0xff] %v3446
      %3479 = vst [vmem:[%s175 + $0xb8] sm:$0xff] %v3447
      %3480 = vst [vmem:[%s175 + $0xc0] sm:$0xff] %v3448
      %3481 = vst [vmem:[%s175 + $0xc8] sm:$0xff] %v3449
      %3482 = vst [vmem:[%s175 + $0xd0] sm:$0xff] %v3450
      %3483 = vst [vmem:[%s175 + $0xd8] sm:$0xff] %v3451
      %3484 = vst [vmem:[%s175 + $0xe0] sm:$0xff] %v3452
      %3485 = vst [vmem:[%s175 + $0xe8] sm:$0xff] %v3453
      %3486 = vst [vmem:[%s175 + $0xf0] sm:$0xff] %v3454
      %3487 = vst [vmem:[%s175 + $0xf8] sm:$0xff] %v3455
      %s3488 = smul.u32 32, %s14
      %p3489 = scmp.lt.s32.totalorder %s3488, 63
      %s3490 = scalar_select %p3489, %s3488, 63
      %s3491 = smul.addr %s3490, 8
      %s3492 = scalar_lea.vmem %s3, %s3491
      // Predicated region
      $region33: #{conv_ae_lstm_forward.7} parent=31 // pred_check
        %p3493 = pneg %p100
      $region34: #{conv_ae_lstm_forward.7} parent=31 // pred_check_branch
        %3495 = sbr.rel (%p3493) target = $region36
      $region35: #{conv_ae_lstm_forward.7} parent=31 // pred_region
        %s3496 = smul.u32 32, %s14
      $region36: #{conv_ae_lstm_forward.7} parent=31 // pred_fallthru
        _
    $region32: #{conv_ae_lstm_forward.7} parent=5 // pred_fallthru
      _
    %p3497 = scmp.le.s32.totalorder 2, %s9
    // Predicated region
    $region37: #{conv_ae_lstm_forward.7} parent=5 // pred_check
      %p3498 = pneg %p3497
    $region38: #{conv_ae_lstm_forward.7} parent=5 // pred_check_branch
      %3500 = sbr.rel (%p3498) target = $region40
    $region39: #{conv_ae_lstm_forward.7} parent=5 // pred_region
      %s3501 = ssub.s32 %s9, 2
      // Predicated region
      $region41: #{conv_ae_lstm_forward.7} parent=39 // pred_check
        %p3502 = pneg %p106
      $region42: #{conv_ae_lstm_forward.7} parent=39 // pred_check_branch
        %3504 = sbr.rel (%p3502) target = $region44
      $region43: #{conv_ae_lstm_forward.7} parent=39 // pred_region
        %s3505 = smul.u32 32, %s15
        %p3506 = scmp.lt.s32.totalorder %s3505, 63
        %s3507 = scalar_select %p3506, %s3505, 63
        %s3508 = smul.addr %s3507, 8
        %s3509 = scalar_lea.vmem %s3, %s3508
      $region44: #{conv_ae_lstm_forward.7} parent=39 // pred_fallthru
        _
    $region40: #{conv_ae_lstm_forward.7} parent=5 // pred_fallthru
      _
  $region6: #{conv_ae_lstm_forward.7} parent=0 // loop_footer
    %s13 = sadd.s32 1, %s9
  $region7: #{conv_ae_lstm_forward.7} parent=0 // loop_footer_branch
    %8 = sbr.rel target = $region3
  $region8: #{conv_ae_lstm_forward.7} parent=0 // loop_exit
    _

</llo_original>
